<compile_context>
chip_gen: v6e
topology: v6e:2x2x1
jax: 0.10.0
libtpu: 0.0.40
codegen_flags: <defaults>
</compile_context>

<pallas_src>
import numpy as np
import jax
import jax.numpy as jnp
from jax import lax
from jax.experimental import pallas as pl
from jax.experimental.pallas import tpu as pltpu

CPAD = 128        # lane-dense channel padding
ROW_ALIGN = 16    # M-dim padding (bf16 sublane tile) -> tile-aligned slices


def _round_up(x, m):
    return ((x + m - 1) // m) * m


def _selection_matrix(hi, wi, stride, mi_pad, mo_pad):
    """Tap-stacked 0/1 selection matrix S of shape (9*Mo_pad, Mi_pad).
    Row (t*Mo_pad + m) selects, for output pixel m, the input pixel hit by tap
    t = kh*3+kw; all-zero rows implement zero padding at borders and M padding."""
    ho = (hi - 1) // stride + 1
    wo = (wi - 1) // stride + 1
    sel = np.zeros((9, mo_pad, mi_pad), np.float32)
    for kh in range(3):
        for kw in range(3):
            t = kh * 3 + kw
            for oh in range(ho):
                ih = stride * oh + kh - 1
                if ih < 0 or ih >= hi:
                    continue
                for ow in range(wo):
                    iw = stride * ow + kw - 1
                    if iw < 0 or iw >= wi:
                        continue
                    sel[t, oh * wo + ow, ih * wi + iw] = 1.0
    return sel.reshape(9 * mo_pad, mi_pad)


def build_postprocess_fn(params, h, w):
    """Pack all grid-invariant constants once; return a jitted forward
    x_nchw (N, 4, h, w) f32 -> y_nchw (N, max_classes, h_out, w_out) f32."""
    strides = (2, 2, 1, 2)

    consts = []          # flat per layer: sel, w, b
    in_specs = [None]    # slot 0 = x spec, filled below
    layer_dims = []      # (mi_pad, mo_pad, mo_real)

    hi, wi = h, w
    mi_real = h * w
    mi_pad = _round_up(mi_real, ROW_ALIGN)
    mi1_pad = mi_pad

    for (wgt, bias), s in zip(params, strides):
        cout, cin = int(wgt.shape[0]), int(wgt.shape[1])
        ho = (hi - 1) // s + 1
        wo = (wi - 1) // s + 1
        mo_real = ho * wo
        mo_pad = _round_up(mo_real, ROW_ALIGN)

        sel_np = _selection_matrix(hi, wi, s, mi_pad, mo_pad)
        sel = jnp.asarray(sel_np, jnp.bfloat16)                       # (9*Mo, Mi)

        # (Cout, Cin, 3, 3) -> (9, 128, 128) bf16, tap order t = kh*3 + kw.
        w_t = jnp.transpose(jnp.asarray(wgt, jnp.float32),
                            (2, 3, 1, 0)).reshape(9, cin, cout)
        wp = (jnp.zeros((9, CPAD, CPAD), jnp.float32)
              .at[:, :cin, :cout].set(w_t).astype(jnp.bfloat16))
        bp = (jnp.zeros((1, CPAD), jnp.float32)
              .at[0, :cout].set(jnp.asarray(bias, jnp.float32)))       # f32 bias

        consts += [sel, wp, bp]
        in_specs += [
            pl.BlockSpec((9 * mo_pad, mi_pad), lambda i: (0, 0)),
            pl.BlockSpec((9, CPAD, CPAD), lambda i: (0, 0, 0)),
            pl.BlockSpec((1, CPAD), lambda i: (0, 0)),
        ]
        layer_dims.append((mi_pad, mo_pad, mo_real))
        hi, wi, mi_pad, mi_real = ho, wo, mo_pad, mo_real

    ho_out, wo_out = hi, wi
    cout_last = int(params[-1][0].shape[0])
    mo_out_pad, mo_out_real = layer_dims[-1][1], layer_dims[-1][2]

    in_specs[0] = pl.BlockSpec((1, mi1_pad, CPAD), lambda i: (i, 0, 0))
    out_spec = pl.BlockSpec((1, mo_out_pad, CPAD), lambda i: (i, 0, 0))

    n_layers = len(layer_dims)

    # ----------------------------------------------------------------- kernel
    def kernel(x_ref, *refs):
        o_ref = refs[-1]
        act = x_ref[0]                                   # (Mi1_pad, 128) bf16
        for li, (mi_pad_l, mo_pad_l, mo_real_l) in enumerate(layer_dims):
            s_ref = refs[3 * li + 0]
            w_ref = refs[3 * li + 1]
            b_ref = refs[3 * li + 2]

            # One fat gather matmul: (9*Mo, Mi) @ (Mi, 128) -> (9*Mo, 128), f32 acc.
            gathered = jnp.dot(s_ref[...], act,
                               preferred_element_type=jnp.float32)
            gathered = gathered.astype(jnp.bfloat16)

            # Weight stage: 9 sublane-tile-aligned (Mo,128)@(128,128) matmuls.
            acc = jnp.zeros((mo_pad_l, CPAD), jnp.float32)
            for t in range(9):
                acc = acc + jnp.dot(
                    gathered[t * mo_pad_l:(t + 1) * mo_pad_l], w_ref[t],
                    preferred_element_type=jnp.float32)

            out = jnp.maximum(acc + b_ref[...], 0.0)
            if mo_pad_l != mo_real_l:
                # Zero the padded M rows so they never hold relu(bias) garbage.
                rows = lax.broadcasted_iota(jnp.int32, (mo_pad_l, CPAD), 0)
                out = jnp.where(rows < mo_real_l, out, 0.0)

            if li == n_layers - 1:
                o_ref[0] = out                            # f32 lane-dense store
            else:
                act = out.astype(jnp.bfloat16)

    # ------------------------------------------------------------- cost model
    flops_per_image = 0
    for mi_pad_l, mo_pad_l, _ in layer_dims:
        flops_per_image += 2 * (9 * mo_pad_l) * mi_pad_l * CPAD   # gather stage
        flops_per_image += 2 * 9 * mo_pad_l * CPAD * CPAD         # weight stage
    const_bytes = sum(int(c.size) * c.dtype.itemsize for c in consts)

    # ---------------------------------------------------------------- forward
    @jax.jit
    def forward(x_nchw):
        n, cin, hh, ww = x_nchw.shape
        # NCHW -> (N, H*W, C) -> lane-dense 128-ch, row-padded, bf16.
        x = jnp.transpose(x_nchw, (0, 2, 3, 1)).reshape(n, hh * ww, cin)
        x = jnp.pad(x, ((0, 0), (0, mi1_pad - hh * ww), (0, CPAD - cin)))
        x = x.astype(jnp.bfloat16)

        cost = pl.CostEstimate(
            flops=n * flops_per_image, transcendentals=0,
            bytes_accessed=int(x.size) * 2 + const_bytes
                           + n * mo_out_pad * CPAD * 4)

        out = pl.pallas_call(
            kernel,
            out_shape=jax.ShapeDtypeStruct((n, mo_out_pad, CPAD), jnp.float32),
            grid_spec=pltpu.PrefetchScalarGridSpec(
                num_scalar_prefetch=0,
                grid=(n,),
                in_specs=in_specs,
                out_specs=out_spec),
            compiler_params=pltpu.CompilerParams(
                dimension_semantics=("parallel",),
                vmem_limit_bytes=32 * 1024 * 1024),
            cost_estimate=cost,
        )(x, *consts)

        out = out[:, :mo_out_real, :cout_last]
        out = out.reshape(n, ho_out, wo_out, cout_last)
        return jnp.transpose(out, (0, 3, 1, 2))

    return forward


# --------------------------------------------------------------------------- #
# Parameters / pure-JAX reference / test.
# --------------------------------------------------------------------------- #
def init_params(key, max_classes):
    """Deterministic synthetic parameters matching PostprocessNet_V2.__init__."""
    shapes = [
        ((16, 4, 3, 3), (16,)),                      # conv1
        ((32, 16, 3, 3), (32,)),                     # conv2
        ((16, 32, 3, 3), (16,)),                     # conv3
        ((max_classes, 16, 3, 3), (max_classes,)),   # conv4
    ]
    params = []
    for ws, bs in shapes:
        key, kw_, kb_ = jax.random.split(key, 3)
        params.append((0.1 * jax.random.normal(kw_, ws, jnp.float32),
                       0.05 * jax.random.normal(kb_, bs, jnp.float32)))
    return params


def reference_forward(x_nchw, params):
    """Pure-JAX f32 reference (mirrors torch F.conv2d + relu)."""
    strides = (2, 2, 1, 2)
    y = x_nchw
    for (w_, b_), s in zip(params, strides):
        y = lax.conv_general_dilated(
            y, w_, (s, s), ((1, 1), (1, 1)),
            dimension_numbers=("NCHW", "OIHW", "NCHW"))
        y = jax.nn.relu(y + b_[None, :, None, None])
    return y


if __name__ == "__main__":
    MAX_CLASSES = 8    # module arg `max`
    SCALE = 2          # module arg `scale` (unused in the PyTorch forward)

    key = jax.random.PRNGKey(0)
    kx, kp = jax.random.split(key)
    x = jax.random.normal(kx, (2, 4, 16, 16), jnp.float32)   # NCHW input
    params = init_params(kp, MAX_CLASSES)

    forward = build_postprocess_fn(params, h=16, w=16)       # packs constants once
    out = jax.block_until_ready(forward(x))

    assert out.shape == (2, MAX_CLASSES, 2, 2), out.shape

    ref = jax.block_until_ready(reference_forward(x, params))
    # bf16 MXU operands with f32 accumulation -> tolerance sized accordingly.
    max_err = float(jnp.max(jnp.abs(out - ref)))
    assert jnp.allclose(out, ref, rtol=5e-2, atol=5e-2), max_err

    print("KERNEL_OK")
</pallas_src>

<mosaic_0001>
module attributes {stable_mosaic.version = 11 : i64} {
  func.func @kernel(%arg0: i32, %arg1: memref<1x256x128xbf16, #tpu.memory_space<vmem>>, %arg2: memref<576x256xbf16, #tpu.memory_space<vmem>>, %arg3: memref<9x128x128xbf16, #tpu.memory_space<vmem>>, %arg4: memref<1x128xf32, #tpu.memory_space<vmem>>, %arg5: memref<144x64xbf16, #tpu.memory_space<vmem>>, %arg6: memref<9x128x128xbf16, #tpu.memory_space<vmem>>, %arg7: memref<1x128xf32, #tpu.memory_space<vmem>>, %arg8: memref<144x16xbf16, #tpu.memory_space<vmem>>, %arg9: memref<9x128x128xbf16, #tpu.memory_space<vmem>>, %arg10: memref<1x128xf32, #tpu.memory_space<vmem>>, %arg11: memref<144x16xbf16, #tpu.memory_space<vmem>>, %arg12: memref<9x128x128xbf16, #tpu.memory_space<vmem>>, %arg13: memref<1x128xf32, #tpu.memory_space<vmem>>, %arg14: memref<1x16x128xf32, #tpu.memory_space<vmem>>) attributes {dimension_semantics = [#tpu.dimension_semantics<parallel>], iteration_bounds = array<i64: 2>, scalar_prefetch = 0 : i64, scratch_operands = 0 : i64, tpu.core_type = #tpu.core_type<tc>, window_params = [{transform_indices = @transform_0, window_bounds = array<i64: 1, 256, 128>}, {pipeline_mode = #tpu.pipeline_mode<synchronous>, transform_indices = @transform_1, window_bounds = array<i64: 576, 256>}, {pipeline_mode = #tpu.pipeline_mode<synchronous>, transform_indices = @transform_2, window_bounds = array<i64: 9, 128, 128>}, {pipeline_mode = #tpu.pipeline_mode<synchronous>, transform_indices = @transform_3, window_bounds = array<i64: 1, 128>}, {pipeline_mode = #tpu.pipeline_mode<synchronous>, transform_indices = @transform_4, window_bounds = array<i64: 144, 64>}, {pipeline_mode = #tpu.pipeline_mode<synchronous>, transform_indices = @transform_5, window_bounds = array<i64: 9, 128, 128>}, {pipeline_mode = #tpu.pipeline_mode<synchronous>, transform_indices = @transform_6, window_bounds = array<i64: 1, 128>}, {pipeline_mode = #tpu.pipeline_mode<synchronous>, transform_indices = @transform_7, window_bounds = array<i64: 144, 16>}, {pipeline_mode = #tpu.pipeline_mode<synchronous>, transform_indices = @transform_8, window_bounds = array<i64: 9, 128, 128>}, {pipeline_mode = #tpu.pipeline_mode<synchronous>, transform_indices = @transform_9, window_bounds = array<i64: 1, 128>}, {pipeline_mode = #tpu.pipeline_mode<synchronous>, transform_indices = @transform_10, window_bounds = array<i64: 144, 16>}, {pipeline_mode = #tpu.pipeline_mode<synchronous>, transform_indices = @transform_11, window_bounds = array<i64: 9, 128, 128>}, {pipeline_mode = #tpu.pipeline_mode<synchronous>, transform_indices = @transform_12, window_bounds = array<i64: 1, 128>}, {transform_indices = @transform_13, window_bounds = array<i64: 1, 16, 128>}]} {
    %c0 = arith.constant 0 : index
    %c0_0 = arith.constant 0 : index
    %c0_1 = arith.constant 0 : index
    %0 = vector.load %arg1[%c0, %c0_0, %c0_1] : memref<1x256x128xbf16, #tpu.memory_space<vmem>>, vector<1x256x128xbf16>
    %1 = vector.shape_cast %0 : vector<1x256x128xbf16> to vector<256x128xbf16>
    %c0_2 = arith.constant 0 : index
    %c0_3 = arith.constant 0 : index
    %2 = vector.load %arg2[%c0_2, %c0_3] : memref<576x256xbf16, #tpu.memory_space<vmem>>, vector<576x256xbf16>
    %cst = arith.constant dense<0.000000e+00> : vector<576x128xf32>
    %3 = tpu.matmul %2, %1, %cst {dimension_numbers = #tpu.dot_dimension_numbers<[1], [0], [0], [1], [0, 0, 1, 1], [], []>} : vector<576x256xbf16>, vector<256x128xbf16>, vector<576x128xf32> -> vector<576x128xf32>
    %4 = arith.truncf %3 : vector<576x128xf32> to vector<576x128xbf16>
    %cst_4 = arith.constant 0.000000e+00 : f32
    %5 = vector.broadcast %cst_4 : f32 to vector<64x128xf32>
    %6 = vector.extract_strided_slice %4 {offsets = [0, 0], sizes = [64, 128], strides = [1, 1]} : vector<576x128xbf16> to vector<64x128xbf16>
    %c0_5 = arith.constant 0 : index
    %c0_6 = arith.constant 0 : index
    %c0_7 = arith.constant 0 : index
    %7 = vector.load %arg3[%c0_5, %c0_6, %c0_7] : memref<9x128x128xbf16, #tpu.memory_space<vmem>>, vector<1x128x128xbf16>
    %8 = vector.shape_cast %7 : vector<1x128x128xbf16> to vector<128x128xbf16>
    %cst_8 = arith.constant dense<0.000000e+00> : vector<64x128xf32>
    %9 = tpu.matmul %6, %8, %cst_8 {dimension_numbers = #tpu.dot_dimension_numbers<[1], [0], [0], [1], [0, 0, 1, 1], [], []>} : vector<64x128xbf16>, vector<128x128xbf16>, vector<64x128xf32> -> vector<64x128xf32>
    %10 = arith.addf %5, %9 : vector<64x128xf32>
    %11 = vector.extract_strided_slice %4 {offsets = [64, 0], sizes = [64, 128], strides = [1, 1]} : vector<576x128xbf16> to vector<64x128xbf16>
    %c1 = arith.constant 1 : index
    %c0_9 = arith.constant 0 : index
    %c0_10 = arith.constant 0 : index
    %12 = vector.load %arg3[%c1, %c0_9, %c0_10] : memref<9x128x128xbf16, #tpu.memory_space<vmem>>, vector<1x128x128xbf16>
    %13 = vector.shape_cast %12 : vector<1x128x128xbf16> to vector<128x128xbf16>
    %cst_11 = arith.constant dense<0.000000e+00> : vector<64x128xf32>
    %14 = tpu.matmul %11, %13, %cst_11 {dimension_numbers = #tpu.dot_dimension_numbers<[1], [0], [0], [1], [0, 0, 1, 1], [], []>} : vector<64x128xbf16>, vector<128x128xbf16>, vector<64x128xf32> -> vector<64x128xf32>
    %15 = arith.addf %10, %14 : vector<64x128xf32>
    %16 = vector.extract_strided_slice %4 {offsets = [128, 0], sizes = [64, 128], strides = [1, 1]} : vector<576x128xbf16> to vector<64x128xbf16>
    %c2 = arith.constant 2 : index
    %c0_12 = arith.constant 0 : index
    %c0_13 = arith.constant 0 : index
    %17 = vector.load %arg3[%c2, %c0_12, %c0_13] : memref<9x128x128xbf16, #tpu.memory_space<vmem>>, vector<1x128x128xbf16>
    %18 = vector.shape_cast %17 : vector<1x128x128xbf16> to vector<128x128xbf16>
    %cst_14 = arith.constant dense<0.000000e+00> : vector<64x128xf32>
    %19 = tpu.matmul %16, %18, %cst_14 {dimension_numbers = #tpu.dot_dimension_numbers<[1], [0], [0], [1], [0, 0, 1, 1], [], []>} : vector<64x128xbf16>, vector<128x128xbf16>, vector<64x128xf32> -> vector<64x128xf32>
    %20 = arith.addf %15, %19 : vector<64x128xf32>
    %21 = vector.extract_strided_slice %4 {offsets = [192, 0], sizes = [64, 128], strides = [1, 1]} : vector<576x128xbf16> to vector<64x128xbf16>
    %c3 = arith.constant 3 : index
    %c0_15 = arith.constant 0 : index
    %c0_16 = arith.constant 0 : index
    %22 = vector.load %arg3[%c3, %c0_15, %c0_16] : memref<9x128x128xbf16, #tpu.memory_space<vmem>>, vector<1x128x128xbf16>
    %23 = vector.shape_cast %22 : vector<1x128x128xbf16> to vector<128x128xbf16>
    %cst_17 = arith.constant dense<0.000000e+00> : vector<64x128xf32>
    %24 = tpu.matmul %21, %23, %cst_17 {dimension_numbers = #tpu.dot_dimension_numbers<[1], [0], [0], [1], [0, 0, 1, 1], [], []>} : vector<64x128xbf16>, vector<128x128xbf16>, vector<64x128xf32> -> vector<64x128xf32>
    %25 = arith.addf %20, %24 : vector<64x128xf32>
    %26 = vector.extract_strided_slice %4 {offsets = [256, 0], sizes = [64, 128], strides = [1, 1]} : vector<576x128xbf16> to vector<64x128xbf16>
    %c4 = arith.constant 4 : index
    %c0_18 = arith.constant 0 : index
    %c0_19 = arith.constant 0 : index
    %27 = vector.load %arg3[%c4, %c0_18, %c0_19] : memref<9x128x128xbf16, #tpu.memory_space<vmem>>, vector<1x128x128xbf16>
    %28 = vector.shape_cast %27 : vector<1x128x128xbf16> to vector<128x128xbf16>
    %cst_20 = arith.constant dense<0.000000e+00> : vector<64x128xf32>
    %29 = tpu.matmul %26, %28, %cst_20 {dimension_numbers = #tpu.dot_dimension_numbers<[1], [0], [0], [1], [0, 0, 1, 1], [], []>} : vector<64x128xbf16>, vector<128x128xbf16>, vector<64x128xf32> -> vector<64x128xf32>
    %30 = arith.addf %25, %29 : vector<64x128xf32>
    %31 = vector.extract_strided_slice %4 {offsets = [320, 0], sizes = [64, 128], strides = [1, 1]} : vector<576x128xbf16> to vector<64x128xbf16>
    %c5 = arith.constant 5 : index
    %c0_21 = arith.constant 0 : index
    %c0_22 = arith.constant 0 : index
    %32 = vector.load %arg3[%c5, %c0_21, %c0_22] : memref<9x128x128xbf16, #tpu.memory_space<vmem>>, vector<1x128x128xbf16>
    %33 = vector.shape_cast %32 : vector<1x128x128xbf16> to vector<128x128xbf16>
    %cst_23 = arith.constant dense<0.000000e+00> : vector<64x128xf32>
    %34 = tpu.matmul %31, %33, %cst_23 {dimension_numbers = #tpu.dot_dimension_numbers<[1], [0], [0], [1], [0, 0, 1, 1], [], []>} : vector<64x128xbf16>, vector<128x128xbf16>, vector<64x128xf32> -> vector<64x128xf32>
    %35 = arith.addf %30, %34 : vector<64x128xf32>
    %36 = vector.extract_strided_slice %4 {offsets = [384, 0], sizes = [64, 128], strides = [1, 1]} : vector<576x128xbf16> to vector<64x128xbf16>
    %c6 = arith.constant 6 : index
    %c0_24 = arith.constant 0 : index
    %c0_25 = arith.constant 0 : index
    %37 = vector.load %arg3[%c6, %c0_24, %c0_25] : memref<9x128x128xbf16, #tpu.memory_space<vmem>>, vector<1x128x128xbf16>
    %38 = vector.shape_cast %37 : vector<1x128x128xbf16> to vector<128x128xbf16>
    %cst_26 = arith.constant dense<0.000000e+00> : vector<64x128xf32>
    %39 = tpu.matmul %36, %38, %cst_26 {dimension_numbers = #tpu.dot_dimension_numbers<[1], [0], [0], [1], [0, 0, 1, 1], [], []>} : vector<64x128xbf16>, vector<128x128xbf16>, vector<64x128xf32> -> vector<64x128xf32>
    %40 = arith.addf %35, %39 : vector<64x128xf32>
    %41 = vector.extract_strided_slice %4 {offsets = [448, 0], sizes = [64, 128], strides = [1, 1]} : vector<576x128xbf16> to vector<64x128xbf16>
    %c7 = arith.constant 7 : index
    %c0_27 = arith.constant 0 : index
    %c0_28 = arith.constant 0 : index
    %42 = vector.load %arg3[%c7, %c0_27, %c0_28] : memref<9x128x128xbf16, #tpu.memory_space<vmem>>, vector<1x128x128xbf16>
    %43 = vector.shape_cast %42 : vector<1x128x128xbf16> to vector<128x128xbf16>
    %cst_29 = arith.constant dense<0.000000e+00> : vector<64x128xf32>
    %44 = tpu.matmul %41, %43, %cst_29 {dimension_numbers = #tpu.dot_dimension_numbers<[1], [0], [0], [1], [0, 0, 1, 1], [], []>} : vector<64x128xbf16>, vector<128x128xbf16>, vector<64x128xf32> -> vector<64x128xf32>
    %45 = arith.addf %40, %44 : vector<64x128xf32>
    %46 = vector.extract_strided_slice %4 {offsets = [512, 0], sizes = [64, 128], strides = [1, 1]} : vector<576x128xbf16> to vector<64x128xbf16>
    %c8 = arith.constant 8 : index
    %c0_30 = arith.constant 0 : index
    %c0_31 = arith.constant 0 : index
    %47 = vector.load %arg3[%c8, %c0_30, %c0_31] : memref<9x128x128xbf16, #tpu.memory_space<vmem>>, vector<1x128x128xbf16>
    %48 = vector.shape_cast %47 : vector<1x128x128xbf16> to vector<128x128xbf16>
    %cst_32 = arith.constant dense<0.000000e+00> : vector<64x128xf32>
    %49 = tpu.matmul %46, %48, %cst_32 {dimension_numbers = #tpu.dot_dimension_numbers<[1], [0], [0], [1], [0, 0, 1, 1], [], []>} : vector<64x128xbf16>, vector<128x128xbf16>, vector<64x128xf32> -> vector<64x128xf32>
    %50 = arith.addf %45, %49 : vector<64x128xf32>
    %c0_33 = arith.constant 0 : index
    %c0_34 = arith.constant 0 : index
    %51 = vector.load %arg4[%c0_33, %c0_34] : memref<1x128xf32, #tpu.memory_space<vmem>>, vector<1x128xf32>
    %52 = vector.broadcast %51 : vector<1x128xf32> to vector<64x128xf32>
    %53 = arith.addf %50, %52 : vector<64x128xf32>
    %cst_35 = arith.constant 0.000000e+00 : f32
    %54 = vector.broadcast %cst_35 : f32 to vector<64x128xf32>
    %55 = arith.maximumf %53, %54 : vector<64x128xf32>
    %56 = arith.truncf %55 : vector<64x128xf32> to vector<64x128xbf16>
    %c0_36 = arith.constant 0 : index
    %c0_37 = arith.constant 0 : index
    %57 = vector.load %arg5[%c0_36, %c0_37] : memref<144x64xbf16, #tpu.memory_space<vmem>>, vector<144x64xbf16>
    %cst_38 = arith.constant dense<0.000000e+00> : vector<144x128xf32>
    %58 = tpu.matmul %57, %56, %cst_38 {dimension_numbers = #tpu.dot_dimension_numbers<[1], [0], [0], [1], [0, 0, 1, 1], [], []>} : vector<144x64xbf16>, vector<64x128xbf16>, vector<144x128xf32> -> vector<144x128xf32>
    %59 = arith.truncf %58 : vector<144x128xf32> to vector<144x128xbf16>
    %cst_39 = arith.constant 0.000000e+00 : f32
    %60 = vector.broadcast %cst_39 : f32 to vector<16x128xf32>
    %61 = vector.extract_strided_slice %59 {offsets = [0, 0], sizes = [16, 128], strides = [1, 1]} : vector<144x128xbf16> to vector<16x128xbf16>
    %c0_40 = arith.constant 0 : index
    %c0_41 = arith.constant 0 : index
    %c0_42 = arith.constant 0 : index
    %62 = vector.load %arg6[%c0_40, %c0_41, %c0_42] : memref<9x128x128xbf16, #tpu.memory_space<vmem>>, vector<1x128x128xbf16>
    %63 = vector.shape_cast %62 : vector<1x128x128xbf16> to vector<128x128xbf16>
    %cst_43 = arith.constant dense<0.000000e+00> : vector<16x128xf32>
    %64 = tpu.matmul %61, %63, %cst_43 {dimension_numbers = #tpu.dot_dimension_numbers<[1], [0], [0], [1], [0, 0, 1, 1], [], []>} : vector<16x128xbf16>, vector<128x128xbf16>, vector<16x128xf32> -> vector<16x128xf32>
    %65 = arith.addf %60, %64 : vector<16x128xf32>
    %66 = vector.extract_strided_slice %59 {offsets = [16, 0], sizes = [16, 128], strides = [1, 1]} : vector<144x128xbf16> to vector<16x128xbf16>
    %c1_44 = arith.constant 1 : index
    %c0_45 = arith.constant 0 : index
    %c0_46 = arith.constant 0 : index
    %67 = vector.load %arg6[%c1_44, %c0_45, %c0_46] : memref<9x128x128xbf16, #tpu.memory_space<vmem>>, vector<1x128x128xbf16>
    %68 = vector.shape_cast %67 : vector<1x128x128xbf16> to vector<128x128xbf16>
    %cst_47 = arith.constant dense<0.000000e+00> : vector<16x128xf32>
    %69 = tpu.matmul %66, %68, %cst_47 {dimension_numbers = #tpu.dot_dimension_numbers<[1], [0], [0], [1], [0, 0, 1, 1], [], []>} : vector<16x128xbf16>, vector<128x128xbf16>, vector<16x128xf32> -> vector<16x128xf32>
    %70 = arith.addf %65, %69 : vector<16x128xf32>
    %71 = vector.extract_strided_slice %59 {offsets = [32, 0], sizes = [16, 128], strides = [1, 1]} : vector<144x128xbf16> to vector<16x128xbf16>
    %c2_48 = arith.constant 2 : index
    %c0_49 = arith.constant 0 : index
    %c0_50 = arith.constant 0 : index
    %72 = vector.load %arg6[%c2_48, %c0_49, %c0_50] : memref<9x128x128xbf16, #tpu.memory_space<vmem>>, vector<1x128x128xbf16>
    %73 = vector.shape_cast %72 : vector<1x128x128xbf16> to vector<128x128xbf16>
    %cst_51 = arith.constant dense<0.000000e+00> : vector<16x128xf32>
    %74 = tpu.matmul %71, %73, %cst_51 {dimension_numbers = #tpu.dot_dimension_numbers<[1], [0], [0], [1], [0, 0, 1, 1], [], []>} : vector<16x128xbf16>, vector<128x128xbf16>, vector<16x128xf32> -> vector<16x128xf32>
    %75 = arith.addf %70, %74 : vector<16x128xf32>
    %76 = vector.extract_strided_slice %59 {offsets = [48, 0], sizes = [16, 128], strides = [1, 1]} : vector<144x128xbf16> to vector<16x128xbf16>
    %c3_52 = arith.constant 3 : index
    %c0_53 = arith.constant 0 : index
    %c0_54 = arith.constant 0 : index
    %77 = vector.load %arg6[%c3_52, %c0_53, %c0_54] : memref<9x128x128xbf16, #tpu.memory_space<vmem>>, vector<1x128x128xbf16>
    %78 = vector.shape_cast %77 : vector<1x128x128xbf16> to vector<128x128xbf16>
    %cst_55 = arith.constant dense<0.000000e+00> : vector<16x128xf32>
    %79 = tpu.matmul %76, %78, %cst_55 {dimension_numbers = #tpu.dot_dimension_numbers<[1], [0], [0], [1], [0, 0, 1, 1], [], []>} : vector<16x128xbf16>, vector<128x128xbf16>, vector<16x128xf32> -> vector<16x128xf32>
    %80 = arith.addf %75, %79 : vector<16x128xf32>
    %81 = vector.extract_strided_slice %59 {offsets = [64, 0], sizes = [16, 128], strides = [1, 1]} : vector<144x128xbf16> to vector<16x128xbf16>
    %c4_56 = arith.constant 4 : index
    %c0_57 = arith.constant 0 : index
    %c0_58 = arith.constant 0 : index
    %82 = vector.load %arg6[%c4_56, %c0_57, %c0_58] : memref<9x128x128xbf16, #tpu.memory_space<vmem>>, vector<1x128x128xbf16>
    %83 = vector.shape_cast %82 : vector<1x128x128xbf16> to vector<128x128xbf16>
    %cst_59 = arith.constant dense<0.000000e+00> : vector<16x128xf32>
    %84 = tpu.matmul %81, %83, %cst_59 {dimension_numbers = #tpu.dot_dimension_numbers<[1], [0], [0], [1], [0, 0, 1, 1], [], []>} : vector<16x128xbf16>, vector<128x128xbf16>, vector<16x128xf32> -> vector<16x128xf32>
    %85 = arith.addf %80, %84 : vector<16x128xf32>
    %86 = vector.extract_strided_slice %59 {offsets = [80, 0], sizes = [16, 128], strides = [1, 1]} : vector<144x128xbf16> to vector<16x128xbf16>
    %c5_60 = arith.constant 5 : index
    %c0_61 = arith.constant 0 : index
    %c0_62 = arith.constant 0 : index
    %87 = vector.load %arg6[%c5_60, %c0_61, %c0_62] : memref<9x128x128xbf16, #tpu.memory_space<vmem>>, vector<1x128x128xbf16>
    %88 = vector.shape_cast %87 : vector<1x128x128xbf16> to vector<128x128xbf16>
    %cst_63 = arith.constant dense<0.000000e+00> : vector<16x128xf32>
    %89 = tpu.matmul %86, %88, %cst_63 {dimension_numbers = #tpu.dot_dimension_numbers<[1], [0], [0], [1], [0, 0, 1, 1], [], []>} : vector<16x128xbf16>, vector<128x128xbf16>, vector<16x128xf32> -> vector<16x128xf32>
    %90 = arith.addf %85, %89 : vector<16x128xf32>
    %91 = vector.extract_strided_slice %59 {offsets = [96, 0], sizes = [16, 128], strides = [1, 1]} : vector<144x128xbf16> to vector<16x128xbf16>
    %c6_64 = arith.constant 6 : index
    %c0_65 = arith.constant 0 : index
    %c0_66 = arith.constant 0 : index
    %92 = vector.load %arg6[%c6_64, %c0_65, %c0_66] : memref<9x128x128xbf16, #tpu.memory_space<vmem>>, vector<1x128x128xbf16>
    %93 = vector.shape_cast %92 : vector<1x128x128xbf16> to vector<128x128xbf16>
    %cst_67 = arith.constant dense<0.000000e+00> : vector<16x128xf32>
    %94 = tpu.matmul %91, %93, %cst_67 {dimension_numbers = #tpu.dot_dimension_numbers<[1], [0], [0], [1], [0, 0, 1, 1], [], []>} : vector<16x128xbf16>, vector<128x128xbf16>, vector<16x128xf32> -> vector<16x128xf32>
    %95 = arith.addf %90, %94 : vector<16x128xf32>
    %96 = vector.extract_strided_slice %59 {offsets = [112, 0], sizes = [16, 128], strides = [1, 1]} : vector<144x128xbf16> to vector<16x128xbf16>
    %c7_68 = arith.constant 7 : index
    %c0_69 = arith.constant 0 : index
    %c0_70 = arith.constant 0 : index
    %97 = vector.load %arg6[%c7_68, %c0_69, %c0_70] : memref<9x128x128xbf16, #tpu.memory_space<vmem>>, vector<1x128x128xbf16>
    %98 = vector.shape_cast %97 : vector<1x128x128xbf16> to vector<128x128xbf16>
    %cst_71 = arith.constant dense<0.000000e+00> : vector<16x128xf32>
    %99 = tpu.matmul %96, %98, %cst_71 {dimension_numbers = #tpu.dot_dimension_numbers<[1], [0], [0], [1], [0, 0, 1, 1], [], []>} : vector<16x128xbf16>, vector<128x128xbf16>, vector<16x128xf32> -> vector<16x128xf32>
    %100 = arith.addf %95, %99 : vector<16x128xf32>
    %101 = vector.extract_strided_slice %59 {offsets = [128, 0], sizes = [16, 128], strides = [1, 1]} : vector<144x128xbf16> to vector<16x128xbf16>
    %c8_72 = arith.constant 8 : index
    %c0_73 = arith.constant 0 : index
    %c0_74 = arith.constant 0 : index
    %102 = vector.load %arg6[%c8_72, %c0_73, %c0_74] : memref<9x128x128xbf16, #tpu.memory_space<vmem>>, vector<1x128x128xbf16>
    %103 = vector.shape_cast %102 : vector<1x128x128xbf16> to vector<128x128xbf16>
    %cst_75 = arith.constant dense<0.000000e+00> : vector<16x128xf32>
    %104 = tpu.matmul %101, %103, %cst_75 {dimension_numbers = #tpu.dot_dimension_numbers<[1], [0], [0], [1], [0, 0, 1, 1], [], []>} : vector<16x128xbf16>, vector<128x128xbf16>, vector<16x128xf32> -> vector<16x128xf32>
    %105 = arith.addf %100, %104 : vector<16x128xf32>
    %c0_76 = arith.constant 0 : index
    %c0_77 = arith.constant 0 : index
    %106 = vector.load %arg7[%c0_76, %c0_77] : memref<1x128xf32, #tpu.memory_space<vmem>>, vector<1x128xf32>
    %107 = vector.broadcast %106 : vector<1x128xf32> to vector<16x128xf32>
    %108 = arith.addf %105, %107 : vector<16x128xf32>
    %cst_78 = arith.constant 0.000000e+00 : f32
    %109 = vector.broadcast %cst_78 : f32 to vector<16x128xf32>
    %110 = arith.maximumf %108, %109 : vector<16x128xf32>
    %111 = arith.truncf %110 : vector<16x128xf32> to vector<16x128xbf16>
    %c0_79 = arith.constant 0 : index
    %c0_80 = arith.constant 0 : index
    %112 = vector.load %arg8[%c0_79, %c0_80] : memref<144x16xbf16, #tpu.memory_space<vmem>>, vector<144x16xbf16>
    %cst_81 = arith.constant dense<0.000000e+00> : vector<144x128xf32>
    %113 = tpu.matmul %112, %111, %cst_81 {dimension_numbers = #tpu.dot_dimension_numbers<[1], [0], [0], [1], [0, 0, 1, 1], [], []>} : vector<144x16xbf16>, vector<16x128xbf16>, vector<144x128xf32> -> vector<144x128xf32>
    %114 = arith.truncf %113 : vector<144x128xf32> to vector<144x128xbf16>
    %cst_82 = arith.constant 0.000000e+00 : f32
    %115 = vector.broadcast %cst_82 : f32 to vector<16x128xf32>
    %116 = vector.extract_strided_slice %114 {offsets = [0, 0], sizes = [16, 128], strides = [1, 1]} : vector<144x128xbf16> to vector<16x128xbf16>
    %c0_83 = arith.constant 0 : index
    %c0_84 = arith.constant 0 : index
    %c0_85 = arith.constant 0 : index
    %117 = vector.load %arg9[%c0_83, %c0_84, %c0_85] : memref<9x128x128xbf16, #tpu.memory_space<vmem>>, vector<1x128x128xbf16>
    %118 = vector.shape_cast %117 : vector<1x128x128xbf16> to vector<128x128xbf16>
    %cst_86 = arith.constant dense<0.000000e+00> : vector<16x128xf32>
    %119 = tpu.matmul %116, %118, %cst_86 {dimension_numbers = #tpu.dot_dimension_numbers<[1], [0], [0], [1], [0, 0, 1, 1], [], []>} : vector<16x128xbf16>, vector<128x128xbf16>, vector<16x128xf32> -> vector<16x128xf32>
    %120 = arith.addf %115, %119 : vector<16x128xf32>
    %121 = vector.extract_strided_slice %114 {offsets = [16, 0], sizes = [16, 128], strides = [1, 1]} : vector<144x128xbf16> to vector<16x128xbf16>
    %c1_87 = arith.constant 1 : index
    %c0_88 = arith.constant 0 : index
    %c0_89 = arith.constant 0 : index
    %122 = vector.load %arg9[%c1_87, %c0_88, %c0_89] : memref<9x128x128xbf16, #tpu.memory_space<vmem>>, vector<1x128x128xbf16>
    %123 = vector.shape_cast %122 : vector<1x128x128xbf16> to vector<128x128xbf16>
    %cst_90 = arith.constant dense<0.000000e+00> : vector<16x128xf32>
    %124 = tpu.matmul %121, %123, %cst_90 {dimension_numbers = #tpu.dot_dimension_numbers<[1], [0], [0], [1], [0, 0, 1, 1], [], []>} : vector<16x128xbf16>, vector<128x128xbf16>, vector<16x128xf32> -> vector<16x128xf32>
    %125 = arith.addf %120, %124 : vector<16x128xf32>
    %126 = vector.extract_strided_slice %114 {offsets = [32, 0], sizes = [16, 128], strides = [1, 1]} : vector<144x128xbf16> to vector<16x128xbf16>
    %c2_91 = arith.constant 2 : index
    %c0_92 = arith.constant 0 : index
    %c0_93 = arith.constant 0 : index
    %127 = vector.load %arg9[%c2_91, %c0_92, %c0_93] : memref<9x128x128xbf16, #tpu.memory_space<vmem>>, vector<1x128x128xbf16>
    %128 = vector.shape_cast %127 : vector<1x128x128xbf16> to vector<128x128xbf16>
    %cst_94 = arith.constant dense<0.000000e+00> : vector<16x128xf32>
    %129 = tpu.matmul %126, %128, %cst_94 {dimension_numbers = #tpu.dot_dimension_numbers<[1], [0], [0], [1], [0, 0, 1, 1], [], []>} : vector<16x128xbf16>, vector<128x128xbf16>, vector<16x128xf32> -> vector<16x128xf32>
    %130 = arith.addf %125, %129 : vector<16x128xf32>
    %131 = vector.extract_strided_slice %114 {offsets = [48, 0], sizes = [16, 128], strides = [1, 1]} : vector<144x128xbf16> to vector<16x128xbf16>
    %c3_95 = arith.constant 3 : index
    %c0_96 = arith.constant 0 : index
    %c0_97 = arith.constant 0 : index
    %132 = vector.load %arg9[%c3_95, %c0_96, %c0_97] : memref<9x128x128xbf16, #tpu.memory_space<vmem>>, vector<1x128x128xbf16>
    %133 = vector.shape_cast %132 : vector<1x128x128xbf16> to vector<128x128xbf16>
    %cst_98 = arith.constant dense<0.000000e+00> : vector<16x128xf32>
    %134 = tpu.matmul %131, %133, %cst_98 {dimension_numbers = #tpu.dot_dimension_numbers<[1], [0], [0], [1], [0, 0, 1, 1], [], []>} : vector<16x128xbf16>, vector<128x128xbf16>, vector<16x128xf32> -> vector<16x128xf32>
    %135 = arith.addf %130, %134 : vector<16x128xf32>
    %136 = vector.extract_strided_slice %114 {offsets = [64, 0], sizes = [16, 128], strides = [1, 1]} : vector<144x128xbf16> to vector<16x128xbf16>
    %c4_99 = arith.constant 4 : index
    %c0_100 = arith.constant 0 : index
    %c0_101 = arith.constant 0 : index
    %137 = vector.load %arg9[%c4_99, %c0_100, %c0_101] : memref<9x128x128xbf16, #tpu.memory_space<vmem>>, vector<1x128x128xbf16>
    %138 = vector.shape_cast %137 : vector<1x128x128xbf16> to vector<128x128xbf16>
    %cst_102 = arith.constant dense<0.000000e+00> : vector<16x128xf32>
    %139 = tpu.matmul %136, %138, %cst_102 {dimension_numbers = #tpu.dot_dimension_numbers<[1], [0], [0], [1], [0, 0, 1, 1], [], []>} : vector<16x128xbf16>, vector<128x128xbf16>, vector<16x128xf32> -> vector<16x128xf32>
    %140 = arith.addf %135, %139 : vector<16x128xf32>
    %141 = vector.extract_strided_slice %114 {offsets = [80, 0], sizes = [16, 128], strides = [1, 1]} : vector<144x128xbf16> to vector<16x128xbf16>
    %c5_103 = arith.constant 5 : index
    %c0_104 = arith.constant 0 : index
    %c0_105 = arith.constant 0 : index
    %142 = vector.load %arg9[%c5_103, %c0_104, %c0_105] : memref<9x128x128xbf16, #tpu.memory_space<vmem>>, vector<1x128x128xbf16>
    %143 = vector.shape_cast %142 : vector<1x128x128xbf16> to vector<128x128xbf16>
    %cst_106 = arith.constant dense<0.000000e+00> : vector<16x128xf32>
    %144 = tpu.matmul %141, %143, %cst_106 {dimension_numbers = #tpu.dot_dimension_numbers<[1], [0], [0], [1], [0, 0, 1, 1], [], []>} : vector<16x128xbf16>, vector<128x128xbf16>, vector<16x128xf32> -> vector<16x128xf32>
    %145 = arith.addf %140, %144 : vector<16x128xf32>
    %146 = vector.extract_strided_slice %114 {offsets = [96, 0], sizes = [16, 128], strides = [1, 1]} : vector<144x128xbf16> to vector<16x128xbf16>
    %c6_107 = arith.constant 6 : index
    %c0_108 = arith.constant 0 : index
    %c0_109 = arith.constant 0 : index
    %147 = vector.load %arg9[%c6_107, %c0_108, %c0_109] : memref<9x128x128xbf16, #tpu.memory_space<vmem>>, vector<1x128x128xbf16>
    %148 = vector.shape_cast %147 : vector<1x128x128xbf16> to vector<128x128xbf16>
    %cst_110 = arith.constant dense<0.000000e+00> : vector<16x128xf32>
    %149 = tpu.matmul %146, %148, %cst_110 {dimension_numbers = #tpu.dot_dimension_numbers<[1], [0], [0], [1], [0, 0, 1, 1], [], []>} : vector<16x128xbf16>, vector<128x128xbf16>, vector<16x128xf32> -> vector<16x128xf32>
    %150 = arith.addf %145, %149 : vector<16x128xf32>
    %151 = vector.extract_strided_slice %114 {offsets = [112, 0], sizes = [16, 128], strides = [1, 1]} : vector<144x128xbf16> to vector<16x128xbf16>
    %c7_111 = arith.constant 7 : index
    %c0_112 = arith.constant 0 : index
    %c0_113 = arith.constant 0 : index
    %152 = vector.load %arg9[%c7_111, %c0_112, %c0_113] : memref<9x128x128xbf16, #tpu.memory_space<vmem>>, vector<1x128x128xbf16>
    %153 = vector.shape_cast %152 : vector<1x128x128xbf16> to vector<128x128xbf16>
    %cst_114 = arith.constant dense<0.000000e+00> : vector<16x128xf32>
    %154 = tpu.matmul %151, %153, %cst_114 {dimension_numbers = #tpu.dot_dimension_numbers<[1], [0], [0], [1], [0, 0, 1, 1], [], []>} : vector<16x128xbf16>, vector<128x128xbf16>, vector<16x128xf32> -> vector<16x128xf32>
    %155 = arith.addf %150, %154 : vector<16x128xf32>
    %156 = vector.extract_strided_slice %114 {offsets = [128, 0], sizes = [16, 128], strides = [1, 1]} : vector<144x128xbf16> to vector<16x128xbf16>
    %c8_115 = arith.constant 8 : index
    %c0_116 = arith.constant 0 : index
    %c0_117 = arith.constant 0 : index
    %157 = vector.load %arg9[%c8_115, %c0_116, %c0_117] : memref<9x128x128xbf16, #tpu.memory_space<vmem>>, vector<1x128x128xbf16>
    %158 = vector.shape_cast %157 : vector<1x128x128xbf16> to vector<128x128xbf16>
    %cst_118 = arith.constant dense<0.000000e+00> : vector<16x128xf32>
    %159 = tpu.matmul %156, %158, %cst_118 {dimension_numbers = #tpu.dot_dimension_numbers<[1], [0], [0], [1], [0, 0, 1, 1], [], []>} : vector<16x128xbf16>, vector<128x128xbf16>, vector<16x128xf32> -> vector<16x128xf32>
    %160 = arith.addf %155, %159 : vector<16x128xf32>
    %c0_119 = arith.constant 0 : index
    %c0_120 = arith.constant 0 : index
    %161 = vector.load %arg10[%c0_119, %c0_120] : memref<1x128xf32, #tpu.memory_space<vmem>>, vector<1x128xf32>
    %162 = vector.broadcast %161 : vector<1x128xf32> to vector<16x128xf32>
    %163 = arith.addf %160, %162 : vector<16x128xf32>
    %cst_121 = arith.constant 0.000000e+00 : f32
    %164 = vector.broadcast %cst_121 : f32 to vector<16x128xf32>
    %165 = arith.maximumf %163, %164 : vector<16x128xf32>
    %166 = arith.truncf %165 : vector<16x128xf32> to vector<16x128xbf16>
    %c0_122 = arith.constant 0 : index
    %c0_123 = arith.constant 0 : index
    %167 = vector.load %arg11[%c0_122, %c0_123] : memref<144x16xbf16, #tpu.memory_space<vmem>>, vector<144x16xbf16>
    %cst_124 = arith.constant dense<0.000000e+00> : vector<144x128xf32>
    %168 = tpu.matmul %167, %166, %cst_124 {dimension_numbers = #tpu.dot_dimension_numbers<[1], [0], [0], [1], [0, 0, 1, 1], [], []>} : vector<144x16xbf16>, vector<16x128xbf16>, vector<144x128xf32> -> vector<144x128xf32>
    %169 = arith.truncf %168 : vector<144x128xf32> to vector<144x128xbf16>
    %cst_125 = arith.constant 0.000000e+00 : f32
    %170 = vector.broadcast %cst_125 : f32 to vector<16x128xf32>
    %171 = vector.extract_strided_slice %169 {offsets = [0, 0], sizes = [16, 128], strides = [1, 1]} : vector<144x128xbf16> to vector<16x128xbf16>
    %c0_126 = arith.constant 0 : index
    %c0_127 = arith.constant 0 : index
    %c0_128 = arith.constant 0 : index
    %172 = vector.load %arg12[%c0_126, %c0_127, %c0_128] : memref<9x128x128xbf16, #tpu.memory_space<vmem>>, vector<1x128x128xbf16>
    %173 = vector.shape_cast %172 : vector<1x128x128xbf16> to vector<128x128xbf16>
    %cst_129 = arith.constant dense<0.000000e+00> : vector<16x128xf32>
    %174 = tpu.matmul %171, %173, %cst_129 {dimension_numbers = #tpu.dot_dimension_numbers<[1], [0], [0], [1], [0, 0, 1, 1], [], []>} : vector<16x128xbf16>, vector<128x128xbf16>, vector<16x128xf32> -> vector<16x128xf32>
    %175 = arith.addf %170, %174 : vector<16x128xf32>
    %176 = vector.extract_strided_slice %169 {offsets = [16, 0], sizes = [16, 128], strides = [1, 1]} : vector<144x128xbf16> to vector<16x128xbf16>
    %c1_130 = arith.constant 1 : index
    %c0_131 = arith.constant 0 : index
    %c0_132 = arith.constant 0 : index
    %177 = vector.load %arg12[%c1_130, %c0_131, %c0_132] : memref<9x128x128xbf16, #tpu.memory_space<vmem>>, vector<1x128x128xbf16>
    %178 = vector.shape_cast %177 : vector<1x128x128xbf16> to vector<128x128xbf16>
    %cst_133 = arith.constant dense<0.000000e+00> : vector<16x128xf32>
    %179 = tpu.matmul %176, %178, %cst_133 {dimension_numbers = #tpu.dot_dimension_numbers<[1], [0], [0], [1], [0, 0, 1, 1], [], []>} : vector<16x128xbf16>, vector<128x128xbf16>, vector<16x128xf32> -> vector<16x128xf32>
    %180 = arith.addf %175, %179 : vector<16x128xf32>
    %181 = vector.extract_strided_slice %169 {offsets = [32, 0], sizes = [16, 128], strides = [1, 1]} : vector<144x128xbf16> to vector<16x128xbf16>
    %c2_134 = arith.constant 2 : index
    %c0_135 = arith.constant 0 : index
    %c0_136 = arith.constant 0 : index
    %182 = vector.load %arg12[%c2_134, %c0_135, %c0_136] : memref<9x128x128xbf16, #tpu.memory_space<vmem>>, vector<1x128x128xbf16>
    %183 = vector.shape_cast %182 : vector<1x128x128xbf16> to vector<128x128xbf16>
    %cst_137 = arith.constant dense<0.000000e+00> : vector<16x128xf32>
    %184 = tpu.matmul %181, %183, %cst_137 {dimension_numbers = #tpu.dot_dimension_numbers<[1], [0], [0], [1], [0, 0, 1, 1], [], []>} : vector<16x128xbf16>, vector<128x128xbf16>, vector<16x128xf32> -> vector<16x128xf32>
    %185 = arith.addf %180, %184 : vector<16x128xf32>
    %186 = vector.extract_strided_slice %169 {offsets = [48, 0], sizes = [16, 128], strides = [1, 1]} : vector<144x128xbf16> to vector<16x128xbf16>
    %c3_138 = arith.constant 3 : index
    %c0_139 = arith.constant 0 : index
    %c0_140 = arith.constant 0 : index
    %187 = vector.load %arg12[%c3_138, %c0_139, %c0_140] : memref<9x128x128xbf16, #tpu.memory_space<vmem>>, vector<1x128x128xbf16>
    %188 = vector.shape_cast %187 : vector<1x128x128xbf16> to vector<128x128xbf16>
    %cst_141 = arith.constant dense<0.000000e+00> : vector<16x128xf32>
    %189 = tpu.matmul %186, %188, %cst_141 {dimension_numbers = #tpu.dot_dimension_numbers<[1], [0], [0], [1], [0, 0, 1, 1], [], []>} : vector<16x128xbf16>, vector<128x128xbf16>, vector<16x128xf32> -> vector<16x128xf32>
    %190 = arith.addf %185, %189 : vector<16x128xf32>
    %191 = vector.extract_strided_slice %169 {offsets = [64, 0], sizes = [16, 128], strides = [1, 1]} : vector<144x128xbf16> to vector<16x128xbf16>
    %c4_142 = arith.constant 4 : index
    %c0_143 = arith.constant 0 : index
    %c0_144 = arith.constant 0 : index
    %192 = vector.load %arg12[%c4_142, %c0_143, %c0_144] : memref<9x128x128xbf16, #tpu.memory_space<vmem>>, vector<1x128x128xbf16>
    %193 = vector.shape_cast %192 : vector<1x128x128xbf16> to vector<128x128xbf16>
    %cst_145 = arith.constant dense<0.000000e+00> : vector<16x128xf32>
    %194 = tpu.matmul %191, %193, %cst_145 {dimension_numbers = #tpu.dot_dimension_numbers<[1], [0], [0], [1], [0, 0, 1, 1], [], []>} : vector<16x128xbf16>, vector<128x128xbf16>, vector<16x128xf32> -> vector<16x128xf32>
    %195 = arith.addf %190, %194 : vector<16x128xf32>
    %196 = vector.extract_strided_slice %169 {offsets = [80, 0], sizes = [16, 128], strides = [1, 1]} : vector<144x128xbf16> to vector<16x128xbf16>
    %c5_146 = arith.constant 5 : index
    %c0_147 = arith.constant 0 : index
    %c0_148 = arith.constant 0 : index
    %197 = vector.load %arg12[%c5_146, %c0_147, %c0_148] : memref<9x128x128xbf16, #tpu.memory_space<vmem>>, vector<1x128x128xbf16>
    %198 = vector.shape_cast %197 : vector<1x128x128xbf16> to vector<128x128xbf16>
    %cst_149 = arith.constant dense<0.000000e+00> : vector<16x128xf32>
    %199 = tpu.matmul %196, %198, %cst_149 {dimension_numbers = #tpu.dot_dimension_numbers<[1], [0], [0], [1], [0, 0, 1, 1], [], []>} : vector<16x128xbf16>, vector<128x128xbf16>, vector<16x128xf32> -> vector<16x128xf32>
    %200 = arith.addf %195, %199 : vector<16x128xf32>
    %201 = vector.extract_strided_slice %169 {offsets = [96, 0], sizes = [16, 128], strides = [1, 1]} : vector<144x128xbf16> to vector<16x128xbf16>
    %c6_150 = arith.constant 6 : index
    %c0_151 = arith.constant 0 : index
    %c0_152 = arith.constant 0 : index
    %202 = vector.load %arg12[%c6_150, %c0_151, %c0_152] : memref<9x128x128xbf16, #tpu.memory_space<vmem>>, vector<1x128x128xbf16>
    %203 = vector.shape_cast %202 : vector<1x128x128xbf16> to vector<128x128xbf16>
    %cst_153 = arith.constant dense<0.000000e+00> : vector<16x128xf32>
    %204 = tpu.matmul %201, %203, %cst_153 {dimension_numbers = #tpu.dot_dimension_numbers<[1], [0], [0], [1], [0, 0, 1, 1], [], []>} : vector<16x128xbf16>, vector<128x128xbf16>, vector<16x128xf32> -> vector<16x128xf32>
    %205 = arith.addf %200, %204 : vector<16x128xf32>
    %206 = vector.extract_strided_slice %169 {offsets = [112, 0], sizes = [16, 128], strides = [1, 1]} : vector<144x128xbf16> to vector<16x128xbf16>
    %c7_154 = arith.constant 7 : index
    %c0_155 = arith.constant 0 : index
    %c0_156 = arith.constant 0 : index
    %207 = vector.load %arg12[%c7_154, %c0_155, %c0_156] : memref<9x128x128xbf16, #tpu.memory_space<vmem>>, vector<1x128x128xbf16>
    %208 = vector.shape_cast %207 : vector<1x128x128xbf16> to vector<128x128xbf16>
    %cst_157 = arith.constant dense<0.000000e+00> : vector<16x128xf32>
    %209 = tpu.matmul %206, %208, %cst_157 {dimension_numbers = #tpu.dot_dimension_numbers<[1], [0], [0], [1], [0, 0, 1, 1], [], []>} : vector<16x128xbf16>, vector<128x128xbf16>, vector<16x128xf32> -> vector<16x128xf32>
    %210 = arith.addf %205, %209 : vector<16x128xf32>
    %211 = vector.extract_strided_slice %169 {offsets = [128, 0], sizes = [16, 128], strides = [1, 1]} : vector<144x128xbf16> to vector<16x128xbf16>
    %c8_158 = arith.constant 8 : index
    %c0_159 = arith.constant 0 : index
    %c0_160 = arith.constant 0 : index
    %212 = vector.load %arg12[%c8_158, %c0_159, %c0_160] : memref<9x128x128xbf16, #tpu.memory_space<vmem>>, vector<1x128x128xbf16>
    %213 = vector.shape_cast %212 : vector<1x128x128xbf16> to vector<128x128xbf16>
    %cst_161 = arith.constant dense<0.000000e+00> : vector<16x128xf32>
    %214 = tpu.matmul %211, %213, %cst_161 {dimension_numbers = #tpu.dot_dimension_numbers<[1], [0], [0], [1], [0, 0, 1, 1], [], []>} : vector<16x128xbf16>, vector<128x128xbf16>, vector<16x128xf32> -> vector<16x128xf32>
    %215 = arith.addf %210, %214 : vector<16x128xf32>
    %c0_162 = arith.constant 0 : index
    %c0_163 = arith.constant 0 : index
    %216 = vector.load %arg13[%c0_162, %c0_163] : memref<1x128xf32, #tpu.memory_space<vmem>>, vector<1x128xf32>
    %217 = vector.broadcast %216 : vector<1x128xf32> to vector<16x128xf32>
    %218 = arith.addf %215, %217 : vector<16x128xf32>
    %cst_164 = arith.constant 0.000000e+00 : f32
    %219 = vector.broadcast %cst_164 : f32 to vector<16x128xf32>
    %220 = arith.maximumf %218, %219 : vector<16x128xf32>
    %221 = tpu.iota {dimensions = array<i32: 0>} : vector<16x128xi32>
    %c4_i32 = arith.constant 4 : i32
    %222 = vector.broadcast %c4_i32 : i32 to vector<16x128xi32>
    %223 = arith.cmpi slt, %221, %222 : vector<16x128xi32>
    %cst_165 = arith.constant 0.000000e+00 : f32
    %224 = vector.broadcast %cst_165 : f32 to vector<16x128xf32>
    %225 = arith.select %223, %220, %224 : vector<16x128xi1>, vector<16x128xf32>
    %c0_166 = arith.constant 0 : index
    %c0_167 = arith.constant 0 : index
    %c0_168 = arith.constant 0 : index
    %226 = vector.load %arg14[%c0_166, %c0_167, %c0_168] : memref<1x16x128xf32, #tpu.memory_space<vmem>>, vector<1x16x128xf32>
    %227 = vector.shape_cast %226 : vector<1x16x128xf32> to vector<16x128xf32>
    %228 = vector.shape_cast %225 : vector<16x128xf32> to vector<1x16x128xf32>
    tpu.vector_store %arg14[%c0_166, %c0_167, %c0_168], %228 {strides = array<i32>} : memref<1x16x128xf32, #tpu.memory_space<vmem>>, vector<1x16x128xf32>,
    return
  }
  func.func @transform_0(%arg0: i32) -> (i32, i32, i32) {
    %c0_i32 = arith.constant 0 : i32
    %c0_i32_0 = arith.constant 0 : i32
    %c0_i32_1 = arith.constant 0 : i32
    return %arg0, %c0_i32, %c0_i32_0 : i32, i32, i32
  }
  func.func @transform_1(%arg0: i32) -> (i32, i32) {
    %c0_i32 = arith.constant 0 : i32
    %c0_i32_0 = arith.constant 0 : i32
    %c0_i32_1 = arith.constant 0 : i32
    return %c0_i32, %c0_i32_0 : i32, i32
  }
  func.func @transform_2(%arg0: i32) -> (i32, i32, i32) {
    %c0_i32 = arith.constant 0 : i32
    %c0_i32_0 = arith.constant 0 : i32
    %c0_i32_1 = arith.constant 0 : i32
    %c0_i32_2 = arith.constant 0 : i32
    return %c0_i32, %c0_i32_0, %c0_i32_1 : i32, i32, i32
  }
  func.func @transform_3(%arg0: i32) -> (i32, i32) {
    %c0_i32 = arith.constant 0 : i32
    %c0_i32_0 = arith.constant 0 : i32
    %c0_i32_1 = arith.constant 0 : i32
    return %c0_i32, %c0_i32_0 : i32, i32
  }
  func.func @transform_4(%arg0: i32) -> (i32, i32) {
    %c0_i32 = arith.constant 0 : i32
    %c0_i32_0 = arith.constant 0 : i32
    %c0_i32_1 = arith.constant 0 : i32
    return %c0_i32, %c0_i32_0 : i32, i32
  }
  func.func @transform_5(%arg0: i32) -> (i32, i32, i32) {
    %c0_i32 = arith.constant 0 : i32
    %c0_i32_0 = arith.constant 0 : i32
    %c0_i32_1 = arith.constant 0 : i32
    %c0_i32_2 = arith.constant 0 : i32
    return %c0_i32, %c0_i32_0, %c0_i32_1 : i32, i32, i32
  }
  func.func @transform_6(%arg0: i32) -> (i32, i32) {
    %c0_i32 = arith.constant 0 : i32
    %c0_i32_0 = arith.constant 0 : i32
    %c0_i32_1 = arith.constant 0 : i32
    return %c0_i32, %c0_i32_0 : i32, i32
  }
  func.func @transform_7(%arg0: i32) -> (i32, i32) {
    %c0_i32 = arith.constant 0 : i32
    %c0_i32_0 = arith.constant 0 : i32
    %c0_i32_1 = arith.constant 0 : i32
    return %c0_i32, %c0_i32_0 : i32, i32
  }
  func.func @transform_8(%arg0: i32) -> (i32, i32, i32) {
    %c0_i32 = arith.constant 0 : i32
    %c0_i32_0 = arith.constant 0 : i32
    %c0_i32_1 = arith.constant 0 : i32
    %c0_i32_2 = arith.constant 0 : i32
    return %c0_i32, %c0_i32_0, %c0_i32_1 : i32, i32, i32
  }
  func.func @transform_9(%arg0: i32) -> (i32, i32) {
    %c0_i32 = arith.constant 0 : i32
    %c0_i32_0 = arith.constant 0 : i32
    %c0_i32_1 = arith.constant 0 : i32
    return %c0_i32, %c0_i32_0 : i32, i32
  }
  func.func @transform_10(%arg0: i32) -> (i32, i32) {
    %c0_i32 = arith.constant 0 : i32
    %c0_i32_0 = arith.constant 0 : i32
    %c0_i32_1 = arith.constant 0 : i32
    return %c0_i32, %c0_i32_0 : i32, i32
  }
  func.func @transform_11(%arg0: i32) -> (i32, i32, i32) {
    %c0_i32 = arith.constant 0 : i32
    %c0_i32_0 = arith.constant 0 : i32
    %c0_i32_1 = arith.constant 0 : i32
    %c0_i32_2 = arith.constant 0 : i32
    return %c0_i32, %c0_i32_0, %c0_i32_1 : i32, i32, i32
  }
  func.func @transform_12(%arg0: i32) -> (i32, i32) {
    %c0_i32 = arith.constant 0 : i32
    %c0_i32_0 = arith.constant 0 : i32
    %c0_i32_1 = arith.constant 0 : i32
    return %c0_i32, %c0_i32_0 : i32, i32
  }
  func.func @transform_13(%arg0: i32) -> (i32, i32, i32) {
    %c0_i32 = arith.constant 0 : i32
    %c0_i32_0 = arith.constant 0 : i32
    %c0_i32_1 = arith.constant 0 : i32
    return %arg0, %c0_i32, %c0_i32_0 : i32, i32, i32
  }
}

</mosaic_0001>

<llo_original>
// kernel: forward.1
$region0: #{forward.1}
  #allocation0 [shape = 'u32[]', space=smem, size = 0x4, offset = 0x4, fixed_abs, tag = 'smem constant byte address 0x4 - core index']
  #allocation1 [shape = 'u32[144,128]{1,0:T(1,128)}', space=vmem, size = 0x12000, scoped, tag = 'internal scratch']
  %s0 = inlined_call_operand.vmem [shape: bf16[2,256,128], index: 0, kind: input, shape index: {}]
  %s1 = inlined_call_operand.hbm [shape: bf16[576,256], index: 1, kind: input, shape index: {}]
  %s2 = inlined_call_operand.hbm [shape: bf16[9,128,128], index: 2, kind: input, shape index: {}]
  %s3 = inlined_call_operand.vmem [shape: f32[1,128], index: 3, kind: input, shape index: {}]
  %s4 = inlined_call_operand.vmem [shape: bf16[144,64], index: 4, kind: input, shape index: {}]
  %s5 = inlined_call_operand.hbm [shape: bf16[9,128,128], index: 5, kind: input, shape index: {}]
  %s6 = inlined_call_operand.vmem [shape: f32[1,128], index: 6, kind: input, shape index: {}]
  %s7 = inlined_call_operand.vmem [shape: bf16[144,16], index: 7, kind: input, shape index: {}]
  %s8 = inlined_call_operand.hbm [shape: bf16[9,128,128], index: 8, kind: input, shape index: {}]
  %s9 = inlined_call_operand.vmem [shape: f32[1,128], index: 9, kind: input, shape index: {}]
  %s10 = inlined_call_operand.vmem [shape: bf16[144,16], index: 10, kind: input, shape index: {}]
  %s11 = inlined_call_operand.vmem [shape: bf16[9,128,128], index: 11, kind: input, shape index: {}]
  %s12 = inlined_call_operand.vmem [shape: f32[1,128], index: 12, kind: input, shape index: {}]
  %s13 = inlined_call_operand.vmem [shape: f32[2,16,128], index: 13, kind: output, shape index: {}]
  %s14 = sld [smem:[#allocation0]]
  $region101: #{forward.1} parent=0
    _
  %s16 = ssub.s32 1, %s14
  %s17 = scalar_select 0, %s16, %s14
  $region1: #{forward.1} parent=0
    #allocation2 [shape = 'u8[294912]{0}', space=vmem, size = 0x48000, scoped, tag = 'input window, operand 1, single buffered']
    #allocation3 [shape = 's32[2]{0}', space=sflag, size = 0x8, scoped, tag = 'scoped memory for forward.1']
    #allocation4 [shape = 'u8[294912]{0}', space=vmem, size = 0x48000, scoped, tag = 'input window, operand 2, single buffered']
    #allocation5 [shape = 's32[1]{0}', space=sflag, size = 0x4, scoped, tag = 'scoped memory for forward.1']
    #allocation6 [shape = 'u8[294912]{0}', space=vmem, size = 0x48000, scoped, tag = 'input window, operand 5, single buffered']
    #allocation7 [shape = 'u8[294912]{0}', space=vmem, size = 0x48000, scoped, tag = 'input window, operand 8, single buffered']
    #allocation8 [shape = 's32[1]{0}', space=sflag, size = 0x4, scoped, tag = 'scoped memory for forward.1']
    %18 = vsyncpa [#allocation3], 0
    %19 = vsyncpa [#allocation5], 0
    %20 = vsyncpa [#allocation8], 0
    loop: start=0, step=1, limit=4
    $region2: #{forward.1} parent=1 // loop_pre_header
      _
    $region3: #{forward.1} parent=1 // loop_header
      %s22 = sphi 0, %s26
      %p23 = scmp.ge.s32.totalorder %s22, 4
      %s32 = sphi 0, %s34
      %s35 = sphi 0, %s32
      %s36 = sphi 0, %s35
      %s52 = sphi 0, %s36
      %s56 = sphi 0, %s56
      %s58 = sphi 0, %s56
      %s59 = sphi 0, %s58
      %s73 = sphi 0, %s59
      %s77 = sphi 0, %s77
      %s79 = sphi 0, %s77
      %s80 = sphi 0, %s79
      %s94 = sphi 0, %s80
      %s98 = sphi 0, %s98
      %s100 = sphi 0, %s98
      %s101 = sphi 0, %s100
      %s115 = sphi 0, %s101
      %s119 = sphi 0, %s119
      %s121 = sphi 0, %s119
      %s122 = sphi 0, %s121
      %s136 = sphi 0, %s122
      %s140 = sphi 0, %s140
      %s142 = sphi 0, %s140
      %s143 = sphi 0, %s142
      %s157 = sphi 0, %s143
      %s161 = sphi 0, %s161
      %s163 = sphi 0, %s161
      %s164 = sphi 0, %s163
      %s178 = sphi 0, %s164
      %s182 = sphi 0, %s182
      %s184 = sphi 0, %s182
      %s185 = sphi 0, %s184
      %s199 = sphi 0, %s185
      %s203 = sphi 0, %s203
      %s205 = sphi 0, %s203
      %s206 = sphi 0, %s205
      %s220 = sphi 0, %s206
      %s224 = sphi 0, %s224
      %s226 = sphi 0, %s224
      %s227 = sphi 0, %s226
      %s241 = sphi 0, %s227
      %s245 = sphi 0, %s245
      %s247 = sphi 0, %s245
      %s248 = sphi 0, %s247
      %s262 = sphi 0, %s248
      %s266 = sphi 0, %s266
      %s268 = sphi 0, %s266
      %s269 = sphi 0, %s268
      %s283 = sphi 0, %s269
      %s287 = sphi 0, %s287
      %s289 = sphi 0, %s287
      %s290 = sphi 0, %s289
      %s304 = sphi 0, %s290
      %s310 = sphi 0, %s312
      %s313 = sphi 0, %s310
      %s314 = sphi 0, %s313
      %s330 = sphi 0, %s314
    $region4: #{forward.1} parent=1 // loop_header_branch
      %25 = sbr.rel (%p23) target = $region8
    $region5: #{forward.1} parent=1 // loop_body
      %s27 = ssub.s32 %s22, 1
      %s28 = ssub.s32 %s22, 2
      %s29 = sadd.s32 %s22, 1
      %s30 = ssub.s32 %s22, %s29
      %p31 = scmp.eq.s32.totalorder %s30, 0
      %s33 = sadd.s32 %s32, 1
      %s34 = scalar_select %p31, %s32, %s33
      %p37 = pneg %p31
      %p38 = scmp.eq.s32.totalorder %s22, 1
      %p39 = por %p37, %p38
      %p40 = scmp.ne.s32.totalorder %s32, %s35
      %p41 = scmp.eq.s32.totalorder %s22, 0
      %p42 = por %p40, %p41
      %p43 = scmp.ne.s32.totalorder %s32, %s35
      %p44 = scmp.eq.s32.totalorder %s27, 1
      %p45 = por %p43, %p44
      %p46 = scmp.ne.s32.totalorder %s35, %s36
      %p47 = scmp.eq.s32.totalorder %s27, 0
      %p48 = por %p46, %p47
      %p49 = scmp.ne.s32.totalorder %s35, %s36
      %p50 = scmp.eq.s32.totalorder %s28, 1
      %p51 = por %p49, %p50
      %p53 = scmp.ne.s32.totalorder %s36, %s52
      %p54 = scmp.eq.s32.totalorder %s28, 0
      %p55 = por %p53, %p54
      %s57 = sadd.s32 %s56, 1
      %p60 = scmp.eq.s32.totalorder %s22, 1
      %p61 = scmp.ne.s32.totalorder %s56, %s58
      %p62 = scmp.eq.s32.totalorder %s22, 0
      %p63 = por %p61, %p62
      %p64 = scmp.ne.s32.totalorder %s56, %s58
      %p65 = scmp.eq.s32.totalorder %s27, 1
      %p66 = por %p64, %p65
      %p67 = scmp.ne.s32.totalorder %s58, %s59
      %p68 = scmp.eq.s32.totalorder %s27, 0
      %p69 = por %p67, %p68
      %p70 = scmp.ne.s32.totalorder %s58, %s59
      %p71 = scmp.eq.s32.totalorder %s28, 1
      %p72 = por %p70, %p71
      %p74 = scmp.ne.s32.totalorder %s59, %s73
      %p75 = scmp.eq.s32.totalorder %s28, 0
      %p76 = por %p74, %p75
      %s78 = sadd.s32 %s77, 1
      %p81 = scmp.eq.s32.totalorder %s22, 1
      %p82 = scmp.ne.s32.totalorder %s77, %s79
      %p83 = scmp.eq.s32.totalorder %s22, 0
      %p84 = por %p82, %p83
      %p85 = scmp.ne.s32.totalorder %s77, %s79
      %p86 = scmp.eq.s32.totalorder %s27, 1
      %p87 = por %p85, %p86
      %p88 = scmp.ne.s32.totalorder %s79, %s80
      %p89 = scmp.eq.s32.totalorder %s27, 0
      %p90 = por %p88, %p89
      %p91 = scmp.ne.s32.totalorder %s79, %s80
      %p92 = scmp.eq.s32.totalorder %s28, 1
      %p93 = por %p91, %p92
      %p95 = scmp.ne.s32.totalorder %s80, %s94
      %p96 = scmp.eq.s32.totalorder %s28, 0
      %p97 = por %p95, %p96
      %s99 = sadd.s32 %s98, 1
      %p102 = scmp.eq.s32.totalorder %s22, 1
      %p103 = scmp.ne.s32.totalorder %s98, %s100
      %p104 = scmp.eq.s32.totalorder %s22, 0
      %p105 = por %p103, %p104
      %p106 = scmp.ne.s32.totalorder %s98, %s100
      %p107 = scmp.eq.s32.totalorder %s27, 1
      %p108 = por %p106, %p107
      %p109 = scmp.ne.s32.totalorder %s100, %s101
      %p110 = scmp.eq.s32.totalorder %s27, 0
      %p111 = por %p109, %p110
      %p112 = scmp.ne.s32.totalorder %s100, %s101
      %p113 = scmp.eq.s32.totalorder %s28, 1
      %p114 = por %p112, %p113
      %p116 = scmp.ne.s32.totalorder %s101, %s115
      %p117 = scmp.eq.s32.totalorder %s28, 0
      %p118 = por %p116, %p117
      %s120 = sadd.s32 %s119, 1
      %p123 = scmp.eq.s32.totalorder %s22, 1
      %p124 = scmp.ne.s32.totalorder %s119, %s121
      %p125 = scmp.eq.s32.totalorder %s22, 0
      %p126 = por %p124, %p125
      %p127 = scmp.ne.s32.totalorder %s119, %s121
      %p128 = scmp.eq.s32.totalorder %s27, 1
      %p129 = por %p127, %p128
      %p130 = scmp.ne.s32.totalorder %s121, %s122
      %p131 = scmp.eq.s32.totalorder %s27, 0
      %p132 = por %p130, %p131
      %p133 = scmp.ne.s32.totalorder %s121, %s122
      %p134 = scmp.eq.s32.totalorder %s28, 1
      %p135 = por %p133, %p134
      %p137 = scmp.ne.s32.totalorder %s122, %s136
      %p138 = scmp.eq.s32.totalorder %s28, 0
      %p139 = por %p137, %p138
      %s141 = sadd.s32 %s140, 1
      %p144 = scmp.eq.s32.totalorder %s22, 1
      %p145 = scmp.ne.s32.totalorder %s140, %s142
      %p146 = scmp.eq.s32.totalorder %s22, 0
      %p147 = por %p145, %p146
      %p148 = scmp.ne.s32.totalorder %s140, %s142
      %p149 = scmp.eq.s32.totalorder %s27, 1
      %p150 = por %p148, %p149
      %p151 = scmp.ne.s32.totalorder %s142, %s143
      %p152 = scmp.eq.s32.totalorder %s27, 0
      %p153 = por %p151, %p152
      %p154 = scmp.ne.s32.totalorder %s142, %s143
      %p155 = scmp.eq.s32.totalorder %s28, 1
      %p156 = por %p154, %p155
      %p158 = scmp.ne.s32.totalorder %s143, %s157
      %p159 = scmp.eq.s32.totalorder %s28, 0
      %p160 = por %p158, %p159
      %s162 = sadd.s32 %s161, 1
      %p165 = scmp.eq.s32.totalorder %s22, 1
      %p166 = scmp.ne.s32.totalorder %s161, %s163
      %p167 = scmp.eq.s32.totalorder %s22, 0
      %p168 = por %p166, %p167
      %p169 = scmp.ne.s32.totalorder %s161, %s163
      %p170 = scmp.eq.s32.totalorder %s27, 1
      %p171 = por %p169, %p170
      %p172 = scmp.ne.s32.totalorder %s163, %s164
      %p173 = scmp.eq.s32.totalorder %s27, 0
      %p174 = por %p172, %p173
      %p175 = scmp.ne.s32.totalorder %s163, %s164
      %p176 = scmp.eq.s32.totalorder %s28, 1
      %p177 = por %p175, %p176
      %p179 = scmp.ne.s32.totalorder %s164, %s178
      %p180 = scmp.eq.s32.totalorder %s28, 0
      %p181 = por %p179, %p180
      %s183 = sadd.s32 %s182, 1
      %p186 = scmp.eq.s32.totalorder %s22, 1
      %p187 = scmp.ne.s32.totalorder %s182, %s184
      %p188 = scmp.eq.s32.totalorder %s22, 0
      %p189 = por %p187, %p188
      %p190 = scmp.ne.s32.totalorder %s182, %s184
      %p191 = scmp.eq.s32.totalorder %s27, 1
      %p192 = por %p190, %p191
      %p193 = scmp.ne.s32.totalorder %s184, %s185
      %p194 = scmp.eq.s32.totalorder %s27, 0
      %p195 = por %p193, %p194
      %p196 = scmp.ne.s32.totalorder %s184, %s185
      %p197 = scmp.eq.s32.totalorder %s28, 1
      %p198 = por %p196, %p197
      %p200 = scmp.ne.s32.totalorder %s185, %s199
      %p201 = scmp.eq.s32.totalorder %s28, 0
      %p202 = por %p200, %p201
      %s204 = sadd.s32 %s203, 1
      %p207 = scmp.eq.s32.totalorder %s22, 1
      %p208 = scmp.ne.s32.totalorder %s203, %s205
      %p209 = scmp.eq.s32.totalorder %s22, 0
      %p210 = por %p208, %p209
      %p211 = scmp.ne.s32.totalorder %s203, %s205
      %p212 = scmp.eq.s32.totalorder %s27, 1
      %p213 = por %p211, %p212
      %p214 = scmp.ne.s32.totalorder %s205, %s206
      %p215 = scmp.eq.s32.totalorder %s27, 0
      %p216 = por %p214, %p215
      %p217 = scmp.ne.s32.totalorder %s205, %s206
      %p218 = scmp.eq.s32.totalorder %s28, 1
      %p219 = por %p217, %p218
      %p221 = scmp.ne.s32.totalorder %s206, %s220
      %p222 = scmp.eq.s32.totalorder %s28, 0
      %p223 = por %p221, %p222
      %s225 = sadd.s32 %s224, 1
      %p228 = scmp.eq.s32.totalorder %s22, 1
      %p229 = scmp.ne.s32.totalorder %s224, %s226
      %p230 = scmp.eq.s32.totalorder %s22, 0
      %p231 = por %p229, %p230
      %p232 = scmp.ne.s32.totalorder %s224, %s226
      %p233 = scmp.eq.s32.totalorder %s27, 1
      %p234 = por %p232, %p233
      %p235 = scmp.ne.s32.totalorder %s226, %s227
      %p236 = scmp.eq.s32.totalorder %s27, 0
      %p237 = por %p235, %p236
      %p238 = scmp.ne.s32.totalorder %s226, %s227
      %p239 = scmp.eq.s32.totalorder %s28, 1
      %p240 = por %p238, %p239
      %p242 = scmp.ne.s32.totalorder %s227, %s241
      %p243 = scmp.eq.s32.totalorder %s28, 0
      %p244 = por %p242, %p243
      %s246 = sadd.s32 %s245, 1
      %p249 = scmp.eq.s32.totalorder %s22, 1
      %p250 = scmp.ne.s32.totalorder %s245, %s247
      %p251 = scmp.eq.s32.totalorder %s22, 0
      %p252 = por %p250, %p251
      %p253 = scmp.ne.s32.totalorder %s245, %s247
      %p254 = scmp.eq.s32.totalorder %s27, 1
      %p255 = por %p253, %p254
      %p256 = scmp.ne.s32.totalorder %s247, %s248
      %p257 = scmp.eq.s32.totalorder %s27, 0
      %p258 = por %p256, %p257
      %p259 = scmp.ne.s32.totalorder %s247, %s248
      %p260 = scmp.eq.s32.totalorder %s28, 1
      %p261 = por %p259, %p260
      %p263 = scmp.ne.s32.totalorder %s248, %s262
      %p264 = scmp.eq.s32.totalorder %s28, 0
      %p265 = por %p263, %p264
      %s267 = sadd.s32 %s266, 1
      %p270 = scmp.eq.s32.totalorder %s22, 1
      %p271 = scmp.ne.s32.totalorder %s266, %s268
      %p272 = scmp.eq.s32.totalorder %s22, 0
      %p273 = por %p271, %p272
      %p274 = scmp.ne.s32.totalorder %s266, %s268
      %p275 = scmp.eq.s32.totalorder %s27, 1
      %p276 = por %p274, %p275
      %p277 = scmp.ne.s32.totalorder %s268, %s269
      %p278 = scmp.eq.s32.totalorder %s27, 0
      %p279 = por %p277, %p278
      %p280 = scmp.ne.s32.totalorder %s268, %s269
      %p281 = scmp.eq.s32.totalorder %s28, 1
      %p282 = por %p280, %p281
      %p284 = scmp.ne.s32.totalorder %s269, %s283
      %p285 = scmp.eq.s32.totalorder %s28, 0
      %p286 = por %p284, %p285
      %s288 = sadd.s32 %s287, 1
      %p291 = scmp.eq.s32.totalorder %s22, 1
      %p292 = scmp.ne.s32.totalorder %s287, %s289
      %p293 = scmp.eq.s32.totalorder %s22, 0
      %p294 = por %p292, %p293
      %p295 = scmp.ne.s32.totalorder %s287, %s289
      %p296 = scmp.eq.s32.totalorder %s27, 1
      %p297 = por %p295, %p296
      %p298 = scmp.ne.s32.totalorder %s289, %s290
      %p299 = scmp.eq.s32.totalorder %s27, 0
      %p300 = por %p298, %p299
      %p301 = scmp.ne.s32.totalorder %s289, %s290
      %p302 = scmp.eq.s32.totalorder %s28, 1
      %p303 = por %p301, %p302
      %p305 = scmp.ne.s32.totalorder %s290, %s304
      %p306 = scmp.eq.s32.totalorder %s28, 0
      %p307 = por %p305, %p306
      %s308 = ssub.s32 %s22, %s29
      %p309 = scmp.eq.s32.totalorder %s308, 0
      %s311 = sadd.s32 %s310, 1
      %s312 = scalar_select %p309, %s310, %s311
      %p315 = pneg %p309
      %p316 = scmp.eq.s32.totalorder %s22, 1
      %p317 = por %p315, %p316
      %p318 = scmp.ne.s32.totalorder %s310, %s313
      %p319 = scmp.eq.s32.totalorder %s22, 0
      %p320 = por %p318, %p319
      %p321 = scmp.ne.s32.totalorder %s310, %s313
      %p322 = scmp.eq.s32.totalorder %s27, 1
      %p323 = por %p321, %p322
      %p324 = scmp.ne.s32.totalorder %s313, %s314
      %p325 = scmp.eq.s32.totalorder %s27, 0
      %p326 = por %p324, %p325
      %p327 = scmp.ne.s32.totalorder %s313, %s314
      %p328 = scmp.eq.s32.totalorder %s28, 1
      %p329 = por %p327, %p328
      %p331 = scmp.ne.s32.totalorder %s314, %s330
      %p332 = scmp.eq.s32.totalorder %s28, 0
      %p333 = por %p331, %p332
      %p334 = scmp.le.s32.totalorder 1, %s22
      %p335 = scmp.lt.s32.totalorder %s22, 3
      %p336 = pnand %p334, %p335
      %p337 = pneg %p336
      // Predicated region
      $region9: #{forward.1} parent=5 // pred_check
        _
      $region10: #{forward.1} parent=5 // pred_check_branch
        %339 = sbr.rel (%p336) target = $region12
      $region11: #{forward.1} parent=5 // pred_region
        %s340 = ssub.s32 %s22, 1
        // Predicated region
        $region13: #{forward.1} parent=11 // pred_check
          %p341 = pneg %p69
        $region14: #{forward.1} parent=11 // pred_check_branch
          %343 = sbr.rel (%p341) target = $region16
        $region15: #{forward.1} parent=11 // pred_region
          %s345 = ssub.s32 9216, 9216
          %346 = vsyncadd [#allocation3], %s345
          %s347 = sshll.u32 [#allocation2], 4
          %s348 = int_to_ptr.vmem [resolvable:$true] %s347
          %353 = dma.hbm_to_vmem [thread:$0]  %s1, 9216, %s348, [#allocation3], 128, 128, 8
        $region16: #{forward.1} parent=11 // pred_fallthru
          _
        // Predicated region
        $region17: #{forward.1} parent=11 // pred_check
          %p354 = pneg %p90
        $region18: #{forward.1} parent=11 // pred_check_branch
          %356 = sbr.rel (%p354) target = $region20
        $region19: #{forward.1} parent=11 // pred_region
          %s358 = ssub.s32 9216, 9216
          %359 = vsyncadd [#allocation5], %s358
          %s360 = sshll.u32 [#allocation4], 4
          %s361 = int_to_ptr.vmem [resolvable:$true] %s360
          %366 = dma.hbm_to_vmem [thread:$0]  %s2, 9216, %s361, [#allocation5], 64, 64, 4
        $region20: #{forward.1} parent=11 // pred_fallthru
          _
        // Predicated region
        $region21: #{forward.1} parent=11 // pred_check
          %p367 = pneg %p111
        $region22: #{forward.1} parent=11 // pred_check_branch
          %369 = sbr.rel (%p367) target = $region24
        $region23: #{forward.1} parent=11 // pred_region
          _
        $region24: #{forward.1} parent=11 // pred_fallthru
          _
        // Predicated region
        $region25: #{forward.1} parent=11 // pred_check
          %p370 = pneg %p132
        $region26: #{forward.1} parent=11 // pred_check_branch
          %372 = sbr.rel (%p370) target = $region28
        $region27: #{forward.1} parent=11 // pred_region
          _
        $region28: #{forward.1} parent=11 // pred_fallthru
          _
        // Predicated region
        $region29: #{forward.1} parent=11 // pred_check
          %p373 = pneg %p153
        $region30: #{forward.1} parent=11 // pred_check_branch
          %375 = sbr.rel (%p373) target = $region32
        $region31: #{forward.1} parent=11 // pred_region
          %s377 = ssub.s32 9216, 9216
          %378 = vsyncadd [#allocation5], %s377
          %s379 = sshll.u32 [#allocation6], 4
          %s380 = int_to_ptr.vmem [resolvable:$true] %s379
          %385 = dma.hbm_to_vmem [thread:$0]  %s5, 9216, %s380, [#allocation5], 64, 64, 4
        $region32: #{forward.1} parent=11 // pred_fallthru
          _
        // Predicated region
        $region33: #{forward.1} parent=11 // pred_check
          %p386 = pneg %p174
        $region34: #{forward.1} parent=11 // pred_check_branch
          %388 = sbr.rel (%p386) target = $region36
        $region35: #{forward.1} parent=11 // pred_region
          _
        $region36: #{forward.1} parent=11 // pred_fallthru
          _
        // Predicated region
        $region37: #{forward.1} parent=11 // pred_check
          %p389 = pneg %p195
        $region38: #{forward.1} parent=11 // pred_check_branch
          %391 = sbr.rel (%p389) target = $region40
        $region39: #{forward.1} parent=11 // pred_region
          _
        $region40: #{forward.1} parent=11 // pred_fallthru
          _
        // Predicated region
        $region41: #{forward.1} parent=11 // pred_check
          %p392 = pneg %p216
        $region42: #{forward.1} parent=11 // pred_check_branch
          %394 = sbr.rel (%p392) target = $region44
        $region43: #{forward.1} parent=11 // pred_region
          %s396 = ssub.s32 9216, 9216
          %397 = vsyncadd [#allocation8], %s396
          %s398 = sshll.u32 [#allocation7], 4
          %s399 = int_to_ptr.vmem [resolvable:$true] %s398
          %404 = dma.hbm_to_vmem [thread:$0]  %s8, 9216, %s399, [#allocation8], 64, 64, 4
        $region44: #{forward.1} parent=11 // pred_fallthru
          _
        // Predicated region
        $region45: #{forward.1} parent=11 // pred_check
          %p405 = pneg %p237
        $region46: #{forward.1} parent=11 // pred_check_branch
          %407 = sbr.rel (%p405) target = $region48
        $region47: #{forward.1} parent=11 // pred_region
          _
        $region48: #{forward.1} parent=11 // pred_fallthru
          _
        // Predicated region
        $region49: #{forward.1} parent=11 // pred_check
          %p408 = pneg %p258
        $region50: #{forward.1} parent=11 // pred_check_branch
          %410 = sbr.rel (%p408) target = $region52
        $region51: #{forward.1} parent=11 // pred_region
          _
        $region52: #{forward.1} parent=11 // pred_fallthru
          _
        // Predicated region
        $region53: #{forward.1} parent=11 // pred_check
          %p411 = pneg %p279
        $region54: #{forward.1} parent=11 // pred_check_branch
          %413 = sbr.rel (%p411) target = $region56
        $region55: #{forward.1} parent=11 // pred_region
          _
        $region56: #{forward.1} parent=11 // pred_fallthru
          _
        // Predicated region
        $region57: #{forward.1} parent=11 // pred_check
          %p414 = pneg %p300
        $region58: #{forward.1} parent=11 // pred_check_branch
          %416 = sbr.rel (%p414) target = $region60
        $region59: #{forward.1} parent=11 // pred_region
          _
        $region60: #{forward.1} parent=11 // pred_fallthru
          _
      $region12: #{forward.1} parent=5 // pred_fallthru
        _
      %p417 = scmp.lt.s32.totalorder %s22, 2
      // Predicated region
      $region61: #{forward.1} parent=5 // pred_check
        %p418 = pneg %p417
      $region62: #{forward.1} parent=5 // pred_check_branch
        %420 = sbr.rel (%p418) target = $region64
      $region63: #{forward.1} parent=5 // pred_region
        // Predicated region
        $region65: #{forward.1} parent=63 // pred_check
          %p421 = pneg %p42
        $region66: #{forward.1} parent=63 // pred_check_branch
          %423 = sbr.rel (%p421) target = $region68
        $region67: #{forward.1} parent=63 // pred_region
          %p424 = scmp.lt.s32.totalorder %s22, 1
          %s425 = scalar_select %p424, %s22, 1
          %s426 = smul.addr %s425, 32
          %s427 = smul.addr %s426, 4
          %s428 = scalar_lea.vmem %s0, %s427
        $region68: #{forward.1} parent=63 // pred_fallthru
          _
      $region64: #{forward.1} parent=5 // pred_fallthru
        _
      %p429 = scmp.le.s32.totalorder 1, %s22
      %p430 = scmp.lt.s32.totalorder %s22, 3
      %p431 = pnand %p429, %p430
      %p432 = pneg %p431
      // Predicated region
      $region69: #{forward.1} parent=5 // pred_check
        _
      $region70: #{forward.1} parent=5 // pred_check_branch
        %434 = sbr.rel (%p431) target = $region72
      $region71: #{forward.1} parent=5 // pred_region
        %s435 = ssub.s32 %s22, 1
        // Predicated region
        $region73: #{forward.1} parent=71 // pred_check
          %p436 = pneg %p69
        $region74: #{forward.1} parent=71 // pred_check_branch
          %438 = sbr.rel (%p436) target = $region76
        $region75: #{forward.1} parent=71 // pred_region
          %439 = dma.done [#allocation3], 9216
        $region76: #{forward.1} parent=71 // pred_fallthru
          _
        // Predicated region
        $region77: #{forward.1} parent=71 // pred_check
          %p440 = pneg %p90
        $region78: #{forward.1} parent=71 // pred_check_branch
          %442 = sbr.rel (%p440) target = $region80
        $region79: #{forward.1} parent=71 // pred_region
          %443 = dma.done [#allocation5], 9216
        $region80: #{forward.1} parent=71 // pred_fallthru
          _
        // Predicated region
        $region81: #{forward.1} parent=71 // pred_check
          %p444 = pneg %p153
        $region82: #{forward.1} parent=71 // pred_check_branch
          %446 = sbr.rel (%p444) target = $region84
        $region83: #{forward.1} parent=71 // pred_region
          %447 = dma.done [#allocation5], 9216
        $region84: #{forward.1} parent=71 // pred_fallthru
          _
        // Predicated region
        $region85: #{forward.1} parent=71 // pred_check
          %p448 = pneg %p216
        $region86: #{forward.1} parent=71 // pred_check_branch
          %450 = sbr.rel (%p448) target = $region88
        $region87: #{forward.1} parent=71 // pred_region
          %451 = dma.done [#allocation8], 9216
        $region88: #{forward.1} parent=71 // pred_fallthru
          _
        %p452 = scmp.lt.s32.totalorder %s27, 1
        %s453 = scalar_select %p452, %s27, 1
        %s454 = smul.addr %s453, 32
        %s455 = smul.addr %s454, 4
        %s456 = scalar_lea.vmem %s0, %s455
        %p457 = pneg %p48
        %p458 = pneg %p45
        %p459 = pneg %p69
        %p460 = pneg %p66
        %p461 = pneg %p90
        %p462 = pneg %p87
        %p463 = pneg %p111
        %p464 = pneg %p108
        %p465 = pneg %p132
        %p466 = pneg %p129
        %p467 = pneg %p153
        %p468 = pneg %p150
        %p469 = pneg %p174
        %p470 = pneg %p171
        %p471 = pneg %p195
        %p472 = pneg %p192
        %p473 = pneg %p216
        %p474 = pneg %p213
        %p475 = pneg %p237
        %p476 = pneg %p234
        %p477 = pneg %p258
        %p478 = pneg %p255
        %p479 = pneg %p279
        %p480 = pneg %p276
        %p481 = pneg %p300
        %p482 = pneg %p297
        %p483 = pneg %p326
        %p484 = pneg %p323
        %p485 = scmp.lt.s32.totalorder %s27, 1
        %s486 = scalar_select %p485, %s27, 1
        %s487 = smul.addr %s486, 2
        %s488 = smul.addr %s487, 8
        %s489 = scalar_lea.vmem %s13, %s488
        %p490 = scmp.lt.s32.totalorder %s27, 1
        %s491 = scalar_select %p490, %s27, 1
        %s492 = smul.addr %s491, 32
        %s493 = smul.addr %s492, 4
        %s494 = scalar_lea.vmem %s0, %s493
        %p495 = scmp.lt.s32.totalorder %s27, 1
        %s496 = scalar_select %p495, %s27, 1
        %s497 = smul.addr %s496, 2
        %s498 = smul.addr %s497, 8
        %s499 = scalar_lea.vmem %s13, %s498
        %v501 = vld [vmem:[%s494] sm:$0xf]
        %v502 = vld [vmem:[%s494 + $0x4] sm:$0xf]
        %v503 = vld [vmem:[%s494 + $0x8] sm:$0xf]
        %v504 = vld [vmem:[%s494 + $0xc] sm:$0xf]
        %v505 = vld [vmem:[%s494 + $0x10] sm:$0xf]
        %v506 = vld [vmem:[%s494 + $0x14] sm:$0xf]
        %v507 = vld [vmem:[%s494 + $0x18] sm:$0xf]
        %v508 = vld [vmem:[%s494 + $0x1c] sm:$0xf]
        %v509 = vld [vmem:[%s494 + $0x20] sm:$0xf]
        %v510 = vld [vmem:[%s494 + $0x24] sm:$0xf]
        %v511 = vld [vmem:[%s494 + $0x28] sm:$0xf]
        %v512 = vld [vmem:[%s494 + $0x2c] sm:$0xf]
        %v513 = vld [vmem:[%s494 + $0x30] sm:$0xf]
        %v514 = vld [vmem:[%s494 + $0x34] sm:$0xf]
        %v515 = vld [vmem:[%s494 + $0x38] sm:$0xf]
        %v516 = vld [vmem:[%s494 + $0x3c] sm:$0xf]
        %v517 = vld [vmem:[%s494 + $0x40] sm:$0xf]
        %v518 = vld [vmem:[%s494 + $0x44] sm:$0xf]
        %v519 = vld [vmem:[%s494 + $0x48] sm:$0xf]
        %v520 = vld [vmem:[%s494 + $0x4c] sm:$0xf]
        %v521 = vld [vmem:[%s494 + $0x50] sm:$0xf]
        %v522 = vld [vmem:[%s494 + $0x54] sm:$0xf]
        %v523 = vld [vmem:[%s494 + $0x58] sm:$0xf]
        %v524 = vld [vmem:[%s494 + $0x5c] sm:$0xf]
        %v525 = vld [vmem:[%s494 + $0x60] sm:$0xf]
        %v526 = vld [vmem:[%s494 + $0x64] sm:$0xf]
        %v527 = vld [vmem:[%s494 + $0x68] sm:$0xf]
        %v528 = vld [vmem:[%s494 + $0x6c] sm:$0xf]
        %v529 = vld [vmem:[%s494 + $0x70] sm:$0xf]
        %v530 = vld [vmem:[%s494 + $0x74] sm:$0xf]
        %v531 = vld [vmem:[%s494 + $0x78] sm:$0xf]
        %v532 = vld [vmem:[%s494 + $0x7c] sm:$0xf]
        %v533 = vld [vmem:[#allocation2] sm:$0xff]
        %v534 = vld [vmem:[#allocation2 + $0x8] sm:$0xff]
        %v535 = vld [vmem:[#allocation2 + $0x10] sm:$0xff]
        %v536 = vld [vmem:[#allocation2 + $0x18] sm:$0xff]
        %v537 = vld [vmem:[#allocation2 + $0x20] sm:$0xff]
        %v538 = vld [vmem:[#allocation2 + $0x28] sm:$0xff]
        %v539 = vld [vmem:[#allocation2 + $0x30] sm:$0xff]
        %v540 = vld [vmem:[#allocation2 + $0x38] sm:$0xff]
        %v541 = vld [vmem:[#allocation2 + $0x40] sm:$0xff]
        %v542 = vld [vmem:[#allocation2 + $0x48] sm:$0xff]
        %v543 = vld [vmem:[#allocation2 + $0x50] sm:$0xff]
        %v544 = vld [vmem:[#allocation2 + $0x58] sm:$0xff]
        %v545 = vld [vmem:[#allocation2 + $0x60] sm:$0xff]
        %v546 = vld [vmem:[#allocation2 + $0x68] sm:$0xff]
        %v547 = vld [vmem:[#allocation2 + $0x70] sm:$0xff]
        %v548 = vld [vmem:[#allocation2 + $0x78] sm:$0xff]
        %v549 = vld [vmem:[#allocation2 + $0x80] sm:$0xff]
        %v550 = vld [vmem:[#allocation2 + $0x88] sm:$0xff]
        %v551 = vld [vmem:[#allocation2 + $0x90] sm:$0xff]
        %v552 = vld [vmem:[#allocation2 + $0x98] sm:$0xff]
        %v553 = vld [vmem:[#allocation2 + $0xa0] sm:$0xff]
        %v554 = vld [vmem:[#allocation2 + $0xa8] sm:$0xff]
        %v555 = vld [vmem:[#allocation2 + $0xb0] sm:$0xff]
        %v556 = vld [vmem:[#allocation2 + $0xb8] sm:$0xff]
        %v557 = vld [vmem:[#allocation2 + $0xc0] sm:$0xff]
        %v558 = vld [vmem:[#allocation2 + $0xc8] sm:$0xff]
        %v559 = vld [vmem:[#allocation2 + $0xd0] sm:$0xff]
        %v560 = vld [vmem:[#allocation2 + $0xd8] sm:$0xff]
        %v561 = vld [vmem:[#allocation2 + $0xe0] sm:$0xff]
        %v562 = vld [vmem:[#allocation2 + $0xe8] sm:$0xff]
        %v563 = vld [vmem:[#allocation2 + $0xf0] sm:$0xff]
        %v564 = vld [vmem:[#allocation2 + $0xf8] sm:$0xff]
        %v565 = vld [vmem:[#allocation2 + $0x100] sm:$0xff]
        %v566 = vld [vmem:[#allocation2 + $0x108] sm:$0xff]
        %v567 = vld [vmem:[#allocation2 + $0x110] sm:$0xff]
        %v568 = vld [vmem:[#allocation2 + $0x118] sm:$0xff]
        %v569 = vld [vmem:[#allocation2 + $0x120] sm:$0xff]
        %v570 = vld [vmem:[#allocation2 + $0x128] sm:$0xff]
        %v571 = vld [vmem:[#allocation2 + $0x130] sm:$0xff]
        %v572 = vld [vmem:[#allocation2 + $0x138] sm:$0xff]
        %v573 = vld [vmem:[#allocation2 + $0x140] sm:$0xff]
        %v574 = vld [vmem:[#allocation2 + $0x148] sm:$0xff]
        %v575 = vld [vmem:[#allocation2 + $0x150] sm:$0xff]
        %v576 = vld [vmem:[#allocation2 + $0x158] sm:$0xff]
        %v577 = vld [vmem:[#allocation2 + $0x160] sm:$0xff]
        %v578 = vld [vmem:[#allocation2 + $0x168] sm:$0xff]
        %v579 = vld [vmem:[#allocation2 + $0x170] sm:$0xff]
        %v580 = vld [vmem:[#allocation2 + $0x178] sm:$0xff]
        %v581 = vld [vmem:[#allocation2 + $0x180] sm:$0xff]
        %v582 = vld [vmem:[#allocation2 + $0x188] sm:$0xff]
        %v583 = vld [vmem:[#allocation2 + $0x190] sm:$0xff]
        %v584 = vld [vmem:[#allocation2 + $0x198] sm:$0xff]
        %v585 = vld [vmem:[#allocation2 + $0x1a0] sm:$0xff]
        %v586 = vld [vmem:[#allocation2 + $0x1a8] sm:$0xff]
        %v587 = vld [vmem:[#allocation2 + $0x1b0] sm:$0xff]
        %v588 = vld [vmem:[#allocation2 + $0x1b8] sm:$0xff]
        %v589 = vld [vmem:[#allocation2 + $0x1c0] sm:$0xff]
        %v590 = vld [vmem:[#allocation2 + $0x1c8] sm:$0xff]
        %v591 = vld [vmem:[#allocation2 + $0x1d0] sm:$0xff]
        %v592 = vld [vmem:[#allocation2 + $0x1d8] sm:$0xff]
        %v593 = vld [vmem:[#allocation2 + $0x1e0] sm:$0xff]
        %v594 = vld [vmem:[#allocation2 + $0x1e8] sm:$0xff]
        %v595 = vld [vmem:[#allocation2 + $0x1f0] sm:$0xff]
        %v596 = vld [vmem:[#allocation2 + $0x1f8] sm:$0xff]
        %v597 = vld [vmem:[#allocation2 + $0x200] sm:$0xff]
        %v598 = vld [vmem:[#allocation2 + $0x208] sm:$0xff]
        %v599 = vld [vmem:[#allocation2 + $0x210] sm:$0xff]
        %v600 = vld [vmem:[#allocation2 + $0x218] sm:$0xff]
        %v601 = vld [vmem:[#allocation2 + $0x220] sm:$0xff]
        %v602 = vld [vmem:[#allocation2 + $0x228] sm:$0xff]
        %v603 = vld [vmem:[#allocation2 + $0x230] sm:$0xff]
        %v604 = vld [vmem:[#allocation2 + $0x238] sm:$0xff]
        %v677 = vunpack.c.l.b16 %v533
        %v678 = vunpack.c.h.b16 %v533
        %v679 = vunpack.c.l.b16 %v534
        %v680 = vunpack.c.h.b16 %v534
        %v681 = vunpack.c.l.b16 %v535
        %v682 = vunpack.c.h.b16 %v535
        %v683 = vunpack.c.l.b16 %v536
        %v684 = vunpack.c.h.b16 %v536
        %v685 = vunpack.c.l.b16 %v537
        %v686 = vunpack.c.h.b16 %v537
        %v687 = vunpack.c.l.b16 %v538
        %v688 = vunpack.c.h.b16 %v538
        %v689 = vunpack.c.l.b16 %v539
        %v690 = vunpack.c.h.b16 %v539
        %v691 = vunpack.c.l.b16 %v540
        %v692 = vunpack.c.h.b16 %v540
        %v693 = vunpack.c.l.b16 %v541
        %v694 = vunpack.c.h.b16 %v541
        %v695 = vunpack.c.l.b16 %v542
        %v696 = vunpack.c.h.b16 %v542
        %v697 = vunpack.c.l.b16 %v543
        %v698 = vunpack.c.h.b16 %v543
        %v699 = vunpack.c.l.b16 %v544
        %v700 = vunpack.c.h.b16 %v544
        %v701 = vunpack.c.l.b16 %v545
        %v702 = vunpack.c.h.b16 %v545
        %v703 = vunpack.c.l.b16 %v546
        %v704 = vunpack.c.h.b16 %v546
        %v705 = vunpack.c.l.b16 %v547
        %v706 = vunpack.c.h.b16 %v547
        %v707 = vunpack.c.l.b16 %v548
        %v708 = vunpack.c.h.b16 %v548
        %v709 = vunpack.c.l.b16 %v549
        %v710 = vunpack.c.h.b16 %v549
        %v711 = vunpack.c.l.b16 %v550
        %v712 = vunpack.c.h.b16 %v550
        %v713 = vunpack.c.l.b16 %v551
        %v714 = vunpack.c.h.b16 %v551
        %v715 = vunpack.c.l.b16 %v552
        %v716 = vunpack.c.h.b16 %v552
        %v717 = vunpack.c.l.b16 %v553
        %v718 = vunpack.c.h.b16 %v553
        %v719 = vunpack.c.l.b16 %v554
        %v720 = vunpack.c.h.b16 %v554
        %v721 = vunpack.c.l.b16 %v555
        %v722 = vunpack.c.h.b16 %v555
        %v723 = vunpack.c.l.b16 %v556
        %v724 = vunpack.c.h.b16 %v556
        %v725 = vunpack.c.l.b16 %v557
        %v726 = vunpack.c.h.b16 %v557
        %v727 = vunpack.c.l.b16 %v558
        %v728 = vunpack.c.h.b16 %v558
        %v729 = vunpack.c.l.b16 %v559
        %v730 = vunpack.c.h.b16 %v559
        %v731 = vunpack.c.l.b16 %v560
        %v732 = vunpack.c.h.b16 %v560
        %v733 = vunpack.c.l.b16 %v561
        %v734 = vunpack.c.h.b16 %v561
        %v735 = vunpack.c.l.b16 %v562
        %v736 = vunpack.c.h.b16 %v562
        %v737 = vunpack.c.l.b16 %v563
        %v738 = vunpack.c.h.b16 %v563
        %v739 = vunpack.c.l.b16 %v564
        %v740 = vunpack.c.h.b16 %v564
        %v741 = vunpack.c.l.b16 %v565
        %v742 = vunpack.c.h.b16 %v565
        %v743 = vunpack.c.l.b16 %v566
        %v744 = vunpack.c.h.b16 %v566
        %v745 = vunpack.c.l.b16 %v567
        %v746 = vunpack.c.h.b16 %v567
        %v747 = vunpack.c.l.b16 %v568
        %v748 = vunpack.c.h.b16 %v568
        %v749 = vunpack.c.l.b16 %v569
        %v750 = vunpack.c.h.b16 %v569
        %v751 = vunpack.c.l.b16 %v570
        %v752 = vunpack.c.h.b16 %v570
        %v753 = vunpack.c.l.b16 %v571
        %v754 = vunpack.c.h.b16 %v571
        %v755 = vunpack.c.l.b16 %v572
        %v756 = vunpack.c.h.b16 %v572
        %v757 = vunpack.c.l.b16 %v573
        %v758 = vunpack.c.h.b16 %v573
        %v759 = vunpack.c.l.b16 %v574
        %v760 = vunpack.c.h.b16 %v574
        %v761 = vunpack.c.l.b16 %v575
        %v762 = vunpack.c.h.b16 %v575
        %v763 = vunpack.c.l.b16 %v576
        %v764 = vunpack.c.h.b16 %v576
        %v765 = vunpack.c.l.b16 %v577
        %v766 = vunpack.c.h.b16 %v577
        %v767 = vunpack.c.l.b16 %v578
        %v768 = vunpack.c.h.b16 %v578
        %v769 = vunpack.c.l.b16 %v579
        %v770 = vunpack.c.h.b16 %v579
        %v771 = vunpack.c.l.b16 %v580
        %v772 = vunpack.c.h.b16 %v580
        %v773 = vunpack.c.l.b16 %v581
        %v774 = vunpack.c.h.b16 %v581
        %v775 = vunpack.c.l.b16 %v582
        %v776 = vunpack.c.h.b16 %v582
        %v777 = vunpack.c.l.b16 %v583
        %v778 = vunpack.c.h.b16 %v583
        %v779 = vunpack.c.l.b16 %v584
        %v780 = vunpack.c.h.b16 %v584
        %v781 = vunpack.c.l.b16 %v585
        %v782 = vunpack.c.h.b16 %v585
        %v783 = vunpack.c.l.b16 %v586
        %v784 = vunpack.c.h.b16 %v586
        %v785 = vunpack.c.l.b16 %v587
        %v786 = vunpack.c.h.b16 %v587
        %v787 = vunpack.c.l.b16 %v588
        %v788 = vunpack.c.h.b16 %v588
        %v789 = vunpack.c.l.b16 %v589
        %v790 = vunpack.c.h.b16 %v589
        %v791 = vunpack.c.l.b16 %v590
        %v792 = vunpack.c.h.b16 %v590
        %v793 = vunpack.c.l.b16 %v591
        %v794 = vunpack.c.h.b16 %v591
        %v795 = vunpack.c.l.b16 %v592
        %v796 = vunpack.c.h.b16 %v592
        %v797 = vunpack.c.l.b16 %v593
        %v798 = vunpack.c.h.b16 %v593
        %v799 = vunpack.c.l.b16 %v594
        %v800 = vunpack.c.h.b16 %v594
        %v801 = vunpack.c.l.b16 %v595
        %v802 = vunpack.c.h.b16 %v595
        %v803 = vunpack.c.l.b16 %v596
        %v804 = vunpack.c.h.b16 %v596
        %v805 = vunpack.c.l.b16 %v597
        %v806 = vunpack.c.h.b16 %v597
        %v807 = vunpack.c.l.b16 %v598
        %v808 = vunpack.c.h.b16 %v598
        %v809 = vunpack.c.l.b16 %v599
        %v810 = vunpack.c.h.b16 %v599
        %v811 = vunpack.c.l.b16 %v600
        %v812 = vunpack.c.h.b16 %v600
        %v813 = vunpack.c.l.b16 %v601
        %v814 = vunpack.c.h.b16 %v601
        %v815 = vunpack.c.l.b16 %v602
        %v816 = vunpack.c.h.b16 %v602
        %v817 = vunpack.c.l.b16 %v603
        %v818 = vunpack.c.h.b16 %v603
        %v819 = vunpack.c.l.b16 %v604
        %v820 = vunpack.c.h.b16 %v604
        %v821 = vpack.c.b16 %v679, %v677
        %v822 = vpack.c.b16 %v680, %v678
        %v823 = vpack.c.b16 %v683, %v681
        %v824 = vpack.c.b16 %v684, %v682
        %v825 = vpack.c.b16 %v687, %v685
        %v826 = vpack.c.b16 %v688, %v686
        %v827 = vpack.c.b16 %v691, %v689
        %v828 = vpack.c.b16 %v692, %v690
        %v829 = vpack.c.b16 %v695, %v693
        %v830 = vpack.c.b16 %v696, %v694
        %v831 = vpack.c.b16 %v699, %v697
        %v832 = vpack.c.b16 %v700, %v698
        %v833 = vpack.c.b16 %v703, %v701
        %v834 = vpack.c.b16 %v704, %v702
        %v835 = vpack.c.b16 %v707, %v705
        %v836 = vpack.c.b16 %v708, %v706
        %v837 = vpack.c.b16 %v711, %v709
        %v838 = vpack.c.b16 %v712, %v710
        %v839 = vpack.c.b16 %v715, %v713
        %v840 = vpack.c.b16 %v716, %v714
        %v841 = vpack.c.b16 %v719, %v717
        %v842 = vpack.c.b16 %v720, %v718
        %v843 = vpack.c.b16 %v723, %v721
        %v844 = vpack.c.b16 %v724, %v722
        %v845 = vpack.c.b16 %v727, %v725
        %v846 = vpack.c.b16 %v728, %v726
        %v847 = vpack.c.b16 %v731, %v729
        %v848 = vpack.c.b16 %v732, %v730
        %v849 = vpack.c.b16 %v735, %v733
        %v850 = vpack.c.b16 %v736, %v734
        %v851 = vpack.c.b16 %v739, %v737
        %v852 = vpack.c.b16 %v740, %v738
        %v853 = vpack.c.b16 %v743, %v741
        %v854 = vpack.c.b16 %v744, %v742
        %v855 = vpack.c.b16 %v747, %v745
        %v856 = vpack.c.b16 %v748, %v746
        %v857 = vpack.c.b16 %v751, %v749
        %v858 = vpack.c.b16 %v752, %v750
        %v859 = vpack.c.b16 %v755, %v753
        %v860 = vpack.c.b16 %v756, %v754
        %v861 = vpack.c.b16 %v759, %v757
        %v862 = vpack.c.b16 %v760, %v758
        %v863 = vpack.c.b16 %v763, %v761
        %v864 = vpack.c.b16 %v764, %v762
        %v865 = vpack.c.b16 %v767, %v765
        %v866 = vpack.c.b16 %v768, %v766
        %v867 = vpack.c.b16 %v771, %v769
        %v868 = vpack.c.b16 %v772, %v770
        %v869 = vpack.c.b16 %v775, %v773
        %v870 = vpack.c.b16 %v776, %v774
        %v871 = vpack.c.b16 %v779, %v777
        %v872 = vpack.c.b16 %v780, %v778
        %v873 = vpack.c.b16 %v783, %v781
        %v874 = vpack.c.b16 %v784, %v782
        %v875 = vpack.c.b16 %v787, %v785
        %v876 = vpack.c.b16 %v788, %v786
        %v877 = vpack.c.b16 %v791, %v789
        %v878 = vpack.c.b16 %v792, %v790
        %v879 = vpack.c.b16 %v795, %v793
        %v880 = vpack.c.b16 %v796, %v794
        %v881 = vpack.c.b16 %v799, %v797
        %v882 = vpack.c.b16 %v800, %v798
        %v883 = vpack.c.b16 %v803, %v801
        %v884 = vpack.c.b16 %v804, %v802
        %v885 = vpack.c.b16 %v807, %v805
        %v886 = vpack.c.b16 %v808, %v806
        %v887 = vpack.c.b16 %v811, %v809
        %v888 = vpack.c.b16 %v812, %v810
        %v889 = vpack.c.b16 %v815, %v813
        %v890 = vpack.c.b16 %v816, %v814
        %v891 = vpack.c.b16 %v819, %v817
        %v892 = vpack.c.b16 %v820, %v818
        %v997 = vunpack.c.l.b16 %v501
        %v998 = vunpack.c.l.b16 %v502
        %v999 = vunpack.c.l.b16 %v503
        %v1000 = vunpack.c.l.b16 %v504
        %v1001 = vunpack.c.l.b16 %v505
        %v1002 = vunpack.c.l.b16 %v506
        %v1003 = vunpack.c.l.b16 %v507
        %v1004 = vunpack.c.l.b16 %v508
        %v1005 = vunpack.c.l.b16 %v509
        %v1006 = vunpack.c.l.b16 %v510
        %v1007 = vunpack.c.l.b16 %v511
        %v1008 = vunpack.c.l.b16 %v512
        %v1009 = vunpack.c.l.b16 %v513
        %v1010 = vunpack.c.l.b16 %v514
        %v1011 = vunpack.c.l.b16 %v515
        %v1012 = vunpack.c.l.b16 %v516
        %v1013 = vunpack.c.l.b16 %v517
        %v1014 = vunpack.c.l.b16 %v518
        %v1015 = vunpack.c.l.b16 %v519
        %v1016 = vunpack.c.l.b16 %v520
        %v1017 = vunpack.c.l.b16 %v521
        %v1018 = vunpack.c.l.b16 %v522
        %v1019 = vunpack.c.l.b16 %v523
        %v1020 = vunpack.c.l.b16 %v524
        %v1021 = vunpack.c.l.b16 %v525
        %v1022 = vunpack.c.l.b16 %v526
        %v1023 = vunpack.c.l.b16 %v527
        %v1024 = vunpack.c.l.b16 %v528
        %v1025 = vunpack.c.l.b16 %v529
        %v1026 = vunpack.c.l.b16 %v530
        %v1027 = vunpack.c.l.b16 %v531
        %v1028 = vunpack.c.l.b16 %v532
        %v1029 = vpack.c.b16 %v998, %v997
        %v1030 = vpack.c.b16 %v1000, %v999
        %v1031 = vpack.c.b16 %v1002, %v1001
        %v1032 = vpack.c.b16 %v1004, %v1003
        %v1033 = vpack.c.b16 %v1006, %v1005
        %v1034 = vpack.c.b16 %v1008, %v1007
        %v1035 = vpack.c.b16 %v1010, %v1009
        %v1036 = vpack.c.b16 %v1012, %v1011
        %v1037 = vpack.c.b16 %v1014, %v1013
        %v1038 = vpack.c.b16 %v1016, %v1015
        %v1039 = vpack.c.b16 %v1018, %v1017
        %v1040 = vpack.c.b16 %v1020, %v1019
        %v1041 = vpack.c.b16 %v1022, %v1021
        %v1042 = vpack.c.b16 %v1024, %v1023
        %v1043 = vpack.c.b16 %v1026, %v1025
        %v1044 = vpack.c.b16 %v1028, %v1027
        %1061 = vmatprep.subr.bf16.mxu0 0
        %1062 = vmatpush1.bf16.msra.mxu0 %v1036
        %1063 = vmatprep.subr.bf16.mxu0 0
        %1064 = vmatpush1.bf16.msra.mxu0 %v1035
        %1065 = vmatprep.subr.bf16.mxu0 0
        %1066 = vmatpush1.bf16.msra.mxu0 %v1034
        %1067 = vmatprep.subr.bf16.mxu0 0
        %1068 = vmatpush1.bf16.msra.mxu0 %v1033
        %1069 = vmatprep.subr.bf16.mxu0 0
        %1070 = vmatpush1.bf16.msra.mxu0 %v1032
        %1071 = vmatprep.subr.bf16.mxu0 0
        %1072 = vmatpush1.bf16.msra.mxu0 %v1031
        %1073 = vmatprep.subr.bf16.mxu0 0
        %1074 = vmatpush1.bf16.msra.mxu0 %v1030
        %1075 = vmatprep.subr.bf16.mxu0 0
        %1076 = vmatpush1.bf16.msra.mxu0 %v1029
        %1077 = vmatprep.subr.bf16.mxu0 0
        %1078 = vmatpush2.bf16.msra.mxu0 %v1044
        %1079 = vmatprep.subr.bf16.mxu0 0
        %1080 = vmatpush2.bf16.msra.mxu0 %v1043
        %1081 = vmatprep.subr.bf16.mxu0 0
        %1082 = vmatpush2.bf16.msra.mxu0 %v1042
        %1083 = vmatprep.subr.bf16.mxu0 0
        %1084 = vmatpush2.bf16.msra.mxu0 %v1041
        %1085 = vmatprep.subr.bf16.mxu0 0
        %1086 = vmatpush2.bf16.msra.mxu0 %v1040
        %1087 = vmatprep.subr.bf16.mxu0 0
        %1088 = vmatpush2.bf16.msra.mxu0 %v1039
        %1089 = vmatprep.subr.bf16.mxu0 0
        %1090 = vmatpush2.bf16.msra.mxu0 %v1038
        %1091 = vmatprep.subr.bf16.mxu0 0
        %1092 = vmatpush2.bf16.msra.mxu0 %v1037
        %1093 = vmatprep.mubr.bf16.mxu0 %v822
        %1094 = vmatmul.mubr.bf16.gmra.mxu0 %v821
        %v1095 = vpop.f32.mrf.mxu0
        %v1096 = vadd.f32 0.0, %v1095
        %v1097 = vpop.f32.mrf.mxu0
        %v1098 = vpop.f32.mrf.mxu0
        %v1099 = vadd.f32 0.0, %v1098
        %v1100 = vpop.f32.mrf.mxu0
        %1101 = vmatprep.mubr.bf16.mxu0 %v824
        %1102 = vmatmul.mubr.bf16.gmra.mxu0 %v823
        %v1103 = vpop.f32.mrf.mxu0
        %v1104 = vadd.f32 0.0, %v1103
        %v1105 = vpop.f32.mrf.mxu0
        %v1106 = vpop.f32.mrf.mxu0
        %v1107 = vadd.f32 0.0, %v1106
        %v1108 = vpop.f32.mrf.mxu0
        %1109 = vmatprep.mubr.bf16.mxu0 %v826
        %1110 = vmatmul.mubr.bf16.gmra.mxu0 %v825
        %v1111 = vpop.f32.mrf.mxu0
        %v1112 = vadd.f32 0.0, %v1111
        %v1113 = vpop.f32.mrf.mxu0
        %v1114 = vpop.f32.mrf.mxu0
        %v1115 = vadd.f32 0.0, %v1114
        %v1116 = vpop.f32.mrf.mxu0
        %1117 = vmatprep.mubr.bf16.mxu0 %v828
        %1118 = vmatmul.mubr.bf16.gmra.mxu0 %v827
        %v1119 = vpop.f32.mrf.mxu0
        %v1120 = vadd.f32 0.0, %v1119
        %v1121 = vpop.f32.mrf.mxu0
        %v1122 = vpop.f32.mrf.mxu0
        %v1123 = vadd.f32 0.0, %v1122
        %v1124 = vpop.f32.mrf.mxu0
        %1125 = vmatprep.mubr.bf16.mxu0 %v830
        %1126 = vmatmul.mubr.bf16.gmra.mxu0 %v829
        %v1127 = vpop.f32.mrf.mxu0
        %v1128 = vadd.f32 0.0, %v1127
        %v1129 = vpop.f32.mrf.mxu0
        %v1130 = vpop.f32.mrf.mxu0
        %v1131 = vadd.f32 0.0, %v1130
        %v1132 = vpop.f32.mrf.mxu0
        %1133 = vmatprep.mubr.bf16.mxu0 %v832
        %1134 = vmatmul.mubr.bf16.gmra.mxu0 %v831
        %v1135 = vpop.f32.mrf.mxu0
        %v1136 = vadd.f32 0.0, %v1135
        %v1137 = vpop.f32.mrf.mxu0
        %v1138 = vpop.f32.mrf.mxu0
        %v1139 = vadd.f32 0.0, %v1138
        %v1140 = vpop.f32.mrf.mxu0
        %1141 = vmatprep.mubr.bf16.mxu0 %v834
        %1142 = vmatmul.mubr.bf16.gmra.mxu0 %v833
        %v1143 = vpop.f32.mrf.mxu0
        %v1144 = vadd.f32 0.0, %v1143
        %v1145 = vpop.f32.mrf.mxu0
        %v1146 = vpop.f32.mrf.mxu0
        %v1147 = vadd.f32 0.0, %v1146
        %v1148 = vpop.f32.mrf.mxu0
        %1149 = vmatprep.mubr.bf16.mxu0 %v836
        %1150 = vmatmul.mubr.bf16.gmra.mxu0 %v835
        %v1151 = vpop.f32.mrf.mxu0
        %v1152 = vadd.f32 0.0, %v1151
        %v1153 = vpop.f32.mrf.mxu0
        %v1154 = vpop.f32.mrf.mxu0
        %v1155 = vadd.f32 0.0, %v1154
        %v1156 = vpop.f32.mrf.mxu0
        %1157 = vmatprep.mubr.bf16.mxu0 %v838
        %1158 = vmatmul.mubr.bf16.gmra.mxu0 %v837
        %v1159 = vpop.f32.mrf.mxu0
        %v1160 = vadd.f32 0.0, %v1159
        %v1161 = vpop.f32.mrf.mxu0
        %v1162 = vpop.f32.mrf.mxu0
        %v1163 = vadd.f32 0.0, %v1162
        %v1164 = vpop.f32.mrf.mxu0
        %1165 = vmatprep.mubr.bf16.mxu0 %v840
        %1166 = vmatmul.mubr.bf16.gmra.mxu0 %v839
        %v1167 = vpop.f32.mrf.mxu0
        %v1168 = vadd.f32 0.0, %v1167
        %v1169 = vpop.f32.mrf.mxu0
        %v1170 = vpop.f32.mrf.mxu0
        %v1171 = vadd.f32 0.0, %v1170
        %v1172 = vpop.f32.mrf.mxu0
        %1173 = vmatprep.mubr.bf16.mxu0 %v842
        %1174 = vmatmul.mubr.bf16.gmra.mxu0 %v841
        %v1175 = vpop.f32.mrf.mxu0
        %v1176 = vadd.f32 0.0, %v1175
        %v1177 = vpop.f32.mrf.mxu0
        %v1178 = vpop.f32.mrf.mxu0
        %v1179 = vadd.f32 0.0, %v1178
        %v1180 = vpop.f32.mrf.mxu0
        %1181 = vmatprep.mubr.bf16.mxu0 %v844
        %1182 = vmatmul.mubr.bf16.gmra.mxu0 %v843
        %v1183 = vpop.f32.mrf.mxu0
        %v1184 = vadd.f32 0.0, %v1183
        %v1185 = vpop.f32.mrf.mxu0
        %v1186 = vpop.f32.mrf.mxu0
        %v1187 = vadd.f32 0.0, %v1186
        %v1188 = vpop.f32.mrf.mxu0
        %1189 = vmatprep.mubr.bf16.mxu0 %v846
        %1190 = vmatmul.mubr.bf16.gmra.mxu0 %v845
        %v1191 = vpop.f32.mrf.mxu0
        %v1192 = vadd.f32 0.0, %v1191
        %v1193 = vpop.f32.mrf.mxu0
        %v1194 = vpop.f32.mrf.mxu0
        %v1195 = vadd.f32 0.0, %v1194
        %v1196 = vpop.f32.mrf.mxu0
        %1197 = vmatprep.mubr.bf16.mxu0 %v848
        %1198 = vmatmul.mubr.bf16.gmra.mxu0 %v847
        %v1199 = vpop.f32.mrf.mxu0
        %v1200 = vadd.f32 0.0, %v1199
        %v1201 = vpop.f32.mrf.mxu0
        %v1202 = vpop.f32.mrf.mxu0
        %v1203 = vadd.f32 0.0, %v1202
        %v1204 = vpop.f32.mrf.mxu0
        %1205 = vmatprep.mubr.bf16.mxu0 %v850
        %1206 = vmatmul.mubr.bf16.gmra.mxu0 %v849
        %v1207 = vpop.f32.mrf.mxu0
        %v1208 = vadd.f32 0.0, %v1207
        %v1209 = vpop.f32.mrf.mxu0
        %v1210 = vpop.f32.mrf.mxu0
        %v1211 = vadd.f32 0.0, %v1210
        %v1212 = vpop.f32.mrf.mxu0
        %1213 = vmatprep.mubr.bf16.mxu0 %v852
        %1214 = vmatmul.mubr.bf16.gmra.mxu0 %v851
        %v1215 = vpop.f32.mrf.mxu0
        %v1216 = vadd.f32 0.0, %v1215
        %v1217 = vpop.f32.mrf.mxu0
        %v1218 = vpop.f32.mrf.mxu0
        %v1219 = vadd.f32 0.0, %v1218
        %v1220 = vpop.f32.mrf.mxu0
        %1221 = vmatprep.mubr.bf16.mxu0 %v854
        %1222 = vmatmul.mubr.bf16.gmra.mxu0 %v853
        %v1223 = vpop.f32.mrf.mxu0
        %v1224 = vadd.f32 0.0, %v1223
        %v1225 = vpop.f32.mrf.mxu0
        %v1226 = vpop.f32.mrf.mxu0
        %v1227 = vadd.f32 0.0, %v1226
        %v1228 = vpop.f32.mrf.mxu0
        %1229 = vmatprep.mubr.bf16.mxu0 %v856
        %1230 = vmatmul.mubr.bf16.gmra.mxu0 %v855
        %v1231 = vpop.f32.mrf.mxu0
        %v1232 = vadd.f32 0.0, %v1231
        %v1233 = vpop.f32.mrf.mxu0
        %v1234 = vpop.f32.mrf.mxu0
        %v1235 = vadd.f32 0.0, %v1234
        %v1236 = vpop.f32.mrf.mxu0
        %1237 = vmatprep.mubr.bf16.mxu0 %v858
        %1238 = vmatmul.mubr.bf16.gmra.mxu0 %v857
        %v1239 = vpop.f32.mrf.mxu0
        %v1240 = vadd.f32 0.0, %v1239
        %v1241 = vpop.f32.mrf.mxu0
        %v1242 = vpop.f32.mrf.mxu0
        %v1243 = vadd.f32 0.0, %v1242
        %v1244 = vpop.f32.mrf.mxu0
        %1245 = vmatprep.mubr.bf16.mxu0 %v860
        %1246 = vmatmul.mubr.bf16.gmra.mxu0 %v859
        %v1247 = vpop.f32.mrf.mxu0
        %v1248 = vadd.f32 0.0, %v1247
        %v1249 = vpop.f32.mrf.mxu0
        %v1250 = vpop.f32.mrf.mxu0
        %v1251 = vadd.f32 0.0, %v1250
        %v1252 = vpop.f32.mrf.mxu0
        %1253 = vmatprep.mubr.bf16.mxu0 %v862
        %1254 = vmatmul.mubr.bf16.gmra.mxu0 %v861
        %v1255 = vpop.f32.mrf.mxu0
        %v1256 = vadd.f32 0.0, %v1255
        %v1257 = vpop.f32.mrf.mxu0
        %v1258 = vpop.f32.mrf.mxu0
        %v1259 = vadd.f32 0.0, %v1258
        %v1260 = vpop.f32.mrf.mxu0
        %1261 = vmatprep.mubr.bf16.mxu0 %v864
        %1262 = vmatmul.mubr.bf16.gmra.mxu0 %v863
        %v1263 = vpop.f32.mrf.mxu0
        %v1264 = vadd.f32 0.0, %v1263
        %v1265 = vpop.f32.mrf.mxu0
        %v1266 = vpop.f32.mrf.mxu0
        %v1267 = vadd.f32 0.0, %v1266
        %v1268 = vpop.f32.mrf.mxu0
        %1269 = vmatprep.mubr.bf16.mxu0 %v866
        %1270 = vmatmul.mubr.bf16.gmra.mxu0 %v865
        %v1271 = vpop.f32.mrf.mxu0
        %v1272 = vadd.f32 0.0, %v1271
        %v1273 = vpop.f32.mrf.mxu0
        %v1274 = vpop.f32.mrf.mxu0
        %v1275 = vadd.f32 0.0, %v1274
        %v1276 = vpop.f32.mrf.mxu0
        %1277 = vmatprep.mubr.bf16.mxu0 %v868
        %1278 = vmatmul.mubr.bf16.gmra.mxu0 %v867
        %v1279 = vpop.f32.mrf.mxu0
        %v1280 = vadd.f32 0.0, %v1279
        %v1281 = vpop.f32.mrf.mxu0
        %v1282 = vpop.f32.mrf.mxu0
        %v1283 = vadd.f32 0.0, %v1282
        %v1284 = vpop.f32.mrf.mxu0
        %1285 = vmatprep.mubr.bf16.mxu0 %v870
        %1286 = vmatmul.mubr.bf16.gmra.mxu0 %v869
        %v1287 = vpop.f32.mrf.mxu0
        %v1288 = vadd.f32 0.0, %v1287
        %v1289 = vpop.f32.mrf.mxu0
        %v1290 = vpop.f32.mrf.mxu0
        %v1291 = vadd.f32 0.0, %v1290
        %v1292 = vpop.f32.mrf.mxu0
        %1293 = vmatprep.mubr.bf16.mxu0 %v872
        %1294 = vmatmul.mubr.bf16.gmra.mxu0 %v871
        %v1295 = vpop.f32.mrf.mxu0
        %v1296 = vadd.f32 0.0, %v1295
        %v1297 = vpop.f32.mrf.mxu0
        %v1298 = vpop.f32.mrf.mxu0
        %v1299 = vadd.f32 0.0, %v1298
        %v1300 = vpop.f32.mrf.mxu0
        %1301 = vmatprep.mubr.bf16.mxu0 %v874
        %1302 = vmatmul.mubr.bf16.gmra.mxu0 %v873
        %v1303 = vpop.f32.mrf.mxu0
        %v1304 = vadd.f32 0.0, %v1303
        %v1305 = vpop.f32.mrf.mxu0
        %v1306 = vpop.f32.mrf.mxu0
        %v1307 = vadd.f32 0.0, %v1306
        %v1308 = vpop.f32.mrf.mxu0
        %1309 = vmatprep.mubr.bf16.mxu0 %v876
        %1310 = vmatmul.mubr.bf16.gmra.mxu0 %v875
        %v1311 = vpop.f32.mrf.mxu0
        %v1312 = vadd.f32 0.0, %v1311
        %v1313 = vpop.f32.mrf.mxu0
        %v1314 = vpop.f32.mrf.mxu0
        %v1315 = vadd.f32 0.0, %v1314
        %v1316 = vpop.f32.mrf.mxu0
        %1317 = vmatprep.mubr.bf16.mxu0 %v878
        %1318 = vmatmul.mubr.bf16.gmra.mxu0 %v877
        %v1319 = vpop.f32.mrf.mxu0
        %v1320 = vadd.f32 0.0, %v1319
        %v1321 = vpop.f32.mrf.mxu0
        %v1322 = vpop.f32.mrf.mxu0
        %v1323 = vadd.f32 0.0, %v1322
        %v1324 = vpop.f32.mrf.mxu0
        %1325 = vmatprep.mubr.bf16.mxu0 %v880
        %1326 = vmatmul.mubr.bf16.gmra.mxu0 %v879
        %v1327 = vpop.f32.mrf.mxu0
        %v1328 = vadd.f32 0.0, %v1327
        %v1329 = vpop.f32.mrf.mxu0
        %v1330 = vpop.f32.mrf.mxu0
        %v1331 = vadd.f32 0.0, %v1330
        %v1332 = vpop.f32.mrf.mxu0
        %1333 = vmatprep.mubr.bf16.mxu0 %v882
        %1334 = vmatmul.mubr.bf16.gmra.mxu0 %v881
        %v1335 = vpop.f32.mrf.mxu0
        %v1336 = vadd.f32 0.0, %v1335
        %v1337 = vpop.f32.mrf.mxu0
        %v1338 = vpop.f32.mrf.mxu0
        %v1339 = vadd.f32 0.0, %v1338
        %v1340 = vpop.f32.mrf.mxu0
        %1341 = vmatprep.mubr.bf16.mxu0 %v884
        %1342 = vmatmul.mubr.bf16.gmra.mxu0 %v883
        %v1343 = vpop.f32.mrf.mxu0
        %v1344 = vadd.f32 0.0, %v1343
        %v1345 = vpop.f32.mrf.mxu0
        %v1346 = vpop.f32.mrf.mxu0
        %v1347 = vadd.f32 0.0, %v1346
        %v1348 = vpop.f32.mrf.mxu0
        %1349 = vmatprep.mubr.bf16.mxu0 %v886
        %1350 = vmatmul.mubr.bf16.gmra.mxu0 %v885
        %v1351 = vpop.f32.mrf.mxu0
        %v1352 = vadd.f32 0.0, %v1351
        %v1353 = vpop.f32.mrf.mxu0
        %v1354 = vpop.f32.mrf.mxu0
        %v1355 = vadd.f32 0.0, %v1354
        %v1356 = vpop.f32.mrf.mxu0
        %1357 = vmatprep.mubr.bf16.mxu0 %v888
        %1358 = vmatmul.mubr.bf16.gmra.mxu0 %v887
        %v1359 = vpop.f32.mrf.mxu0
        %v1360 = vadd.f32 0.0, %v1359
        %v1361 = vpop.f32.mrf.mxu0
        %v1362 = vpop.f32.mrf.mxu0
        %v1363 = vadd.f32 0.0, %v1362
        %v1364 = vpop.f32.mrf.mxu0
        %1365 = vmatprep.mubr.bf16.mxu0 %v890
        %1366 = vmatmul.mubr.bf16.gmra.mxu0 %v889
        %v1367 = vpop.f32.mrf.mxu0
        %v1368 = vadd.f32 0.0, %v1367
        %v1369 = vpop.f32.mrf.mxu0
        %v1370 = vpop.f32.mrf.mxu0
        %v1371 = vadd.f32 0.0, %v1370
        %v1372 = vpop.f32.mrf.mxu0
        %1373 = vmatprep.mubr.bf16.mxu0 %v892
        %1374 = vmatmul.mubr.bf16.gmra.mxu0 %v891
        %v1375 = vpop.f32.mrf.mxu0
        %v1376 = vadd.f32 0.0, %v1375
        %v1377 = vpop.f32.mrf.mxu0
        %v1378 = vpop.f32.mrf.mxu0
        %v1379 = vadd.f32 0.0, %v1378
        %v1380 = vpop.f32.mrf.mxu0
        %1381 = vdwg.mxu0
        %v1382 = vpack.c.bf16 %v1099, %v1096
        %v1383 = vpack.c.bf16 %v1107, %v1104
        %v1384 = vpack.c.bf16 %v1115, %v1112
        %v1385 = vpack.c.bf16 %v1123, %v1120
        %v1386 = vpack.c.bf16 %v1131, %v1128
        %v1387 = vpack.c.bf16 %v1139, %v1136
        %v1388 = vpack.c.bf16 %v1147, %v1144
        %v1389 = vpack.c.bf16 %v1155, %v1152
        %v1390 = vpack.c.bf16 %v1163, %v1160
        %v1391 = vpack.c.bf16 %v1171, %v1168
        %v1392 = vpack.c.bf16 %v1179, %v1176
        %v1393 = vpack.c.bf16 %v1187, %v1184
        %v1394 = vpack.c.bf16 %v1195, %v1192
        %v1395 = vpack.c.bf16 %v1203, %v1200
        %v1396 = vpack.c.bf16 %v1211, %v1208
        %v1397 = vpack.c.bf16 %v1219, %v1216
        %v1398 = vpack.c.bf16 %v1227, %v1224
        %v1399 = vpack.c.bf16 %v1235, %v1232
        %v1400 = vpack.c.bf16 %v1243, %v1240
        %v1401 = vpack.c.bf16 %v1251, %v1248
        %v1402 = vpack.c.bf16 %v1259, %v1256
        %v1403 = vpack.c.bf16 %v1267, %v1264
        %v1404 = vpack.c.bf16 %v1275, %v1272
        %v1405 = vpack.c.bf16 %v1283, %v1280
        %v1406 = vpack.c.bf16 %v1291, %v1288
        %v1407 = vpack.c.bf16 %v1299, %v1296
        %v1408 = vpack.c.bf16 %v1307, %v1304
        %v1409 = vpack.c.bf16 %v1315, %v1312
        %v1410 = vpack.c.bf16 %v1323, %v1320
        %v1411 = vpack.c.bf16 %v1331, %v1328
        %v1412 = vpack.c.bf16 %v1339, %v1336
        %v1413 = vpack.c.bf16 %v1347, %v1344
        %v1414 = vpack.c.bf16 %v1355, %v1352
        %v1415 = vpack.c.bf16 %v1363, %v1360
        %v1416 = vpack.c.bf16 %v1371, %v1368
        %v1417 = vpack.c.bf16 %v1379, %v1376
        %v1418 = vld [vmem:[#allocation4] sm:$0xf]
        %v1419 = vld [vmem:[#allocation4 + $0x4] sm:$0xf]
        %v1420 = vld [vmem:[#allocation4 + $0x8] sm:$0xf]
        %v1421 = vld [vmem:[#allocation4 + $0xc] sm:$0xf]
        %v1422 = vld [vmem:[#allocation4 + $0x10] sm:$0xf]
        %v1423 = vld [vmem:[#allocation4 + $0x14] sm:$0xf]
        %v1424 = vld [vmem:[#allocation4 + $0x18] sm:$0xf]
        %v1425 = vld [vmem:[#allocation4 + $0x1c] sm:$0xf]
        %v1426 = vld [vmem:[#allocation4 + $0x20] sm:$0xf]
        %v1427 = vld [vmem:[#allocation4 + $0x24] sm:$0xf]
        %v1428 = vld [vmem:[#allocation4 + $0x28] sm:$0xf]
        %v1429 = vld [vmem:[#allocation4 + $0x2c] sm:$0xf]
        %v1430 = vld [vmem:[#allocation4 + $0x30] sm:$0xf]
        %v1431 = vld [vmem:[#allocation4 + $0x34] sm:$0xf]
        %v1432 = vld [vmem:[#allocation4 + $0x38] sm:$0xf]
        %v1433 = vld [vmem:[#allocation4 + $0x3c] sm:$0xf]
        %s1434 = scalar_lea.vmem [#allocation4], 64
        %v1435 = vld [vmem:[%s1434] sm:$0xf]
        %v1436 = vld [vmem:[%s1434 + $0x4] sm:$0xf]
        %v1437 = vld [vmem:[%s1434 + $0x8] sm:$0xf]
        %v1438 = vld [vmem:[%s1434 + $0xc] sm:$0xf]
        %v1439 = vld [vmem:[%s1434 + $0x10] sm:$0xf]
        %v1440 = vld [vmem:[%s1434 + $0x14] sm:$0xf]
        %v1441 = vld [vmem:[%s1434 + $0x18] sm:$0xf]
        %v1442 = vld [vmem:[%s1434 + $0x1c] sm:$0xf]
        %v1443 = vld [vmem:[%s1434 + $0x20] sm:$0xf]
        %v1444 = vld [vmem:[%s1434 + $0x24] sm:$0xf]
        %v1445 = vld [vmem:[%s1434 + $0x28] sm:$0xf]
        %v1446 = vld [vmem:[%s1434 + $0x2c] sm:$0xf]
        %v1447 = vld [vmem:[%s1434 + $0x30] sm:$0xf]
        %v1448 = vld [vmem:[%s1434 + $0x34] sm:$0xf]
        %v1449 = vld [vmem:[%s1434 + $0x38] sm:$0xf]
        %v1450 = vld [vmem:[%s1434 + $0x3c] sm:$0xf]
        %v1467 = vunpack.c.l.b16 %v1435
        %v1468 = vunpack.c.l.b16 %v1436
        %v1469 = vunpack.c.l.b16 %v1437
        %v1470 = vunpack.c.l.b16 %v1438
        %v1471 = vunpack.c.l.b16 %v1439
        %v1472 = vunpack.c.l.b16 %v1440
        %v1473 = vunpack.c.l.b16 %v1441
        %v1474 = vunpack.c.l.b16 %v1442
        %v1475 = vunpack.c.l.b16 %v1443
        %v1476 = vunpack.c.l.b16 %v1444
        %v1477 = vunpack.c.l.b16 %v1445
        %v1478 = vunpack.c.l.b16 %v1446
        %v1479 = vunpack.c.l.b16 %v1447
        %v1480 = vunpack.c.l.b16 %v1448
        %v1481 = vunpack.c.l.b16 %v1449
        %v1482 = vunpack.c.l.b16 %v1450
        %v1483 = vpack.c.b16 %v1468, %v1467
        %v1484 = vpack.c.b16 %v1470, %v1469
        %v1485 = vpack.c.b16 %v1472, %v1471
        %v1486 = vpack.c.b16 %v1474, %v1473
        %v1487 = vpack.c.b16 %v1476, %v1475
        %v1488 = vpack.c.b16 %v1478, %v1477
        %v1489 = vpack.c.b16 %v1480, %v1479
        %v1490 = vpack.c.b16 %v1482, %v1481
        %1499 = vmatprep.subr.bf16.mxu0 0
        %1500 = vmatpush1.bf16.msra.mxu0 %v1490
        %1501 = vmatprep.subr.bf16.mxu0 0
        %1502 = vmatpush1.bf16.msra.mxu0 %v1489
        %1503 = vmatprep.subr.bf16.mxu0 0
        %1504 = vmatpush1.bf16.msra.mxu0 %v1488
        %1505 = vmatprep.subr.bf16.mxu0 0
        %1506 = vmatpush1.bf16.msra.mxu0 %v1487
        %1507 = vmatprep.subr.bf16.mxu0 0
        %1508 = vmatpush1.bf16.msra.mxu0 %v1486
        %1509 = vmatprep.subr.bf16.mxu0 0
        %1510 = vmatpush1.bf16.msra.mxu0 %v1485
        %1511 = vmatprep.subr.bf16.mxu0 0
        %1512 = vmatpush1.bf16.msra.mxu0 %v1484
        %1513 = vmatprep.subr.bf16.mxu0 0
        %1514 = vmatpush1.bf16.msra.mxu0 %v1483
        %1515 = vmatprep.subr.bf16.mxu0 0
        %1516 = vmatpush2.bf16.msra.mxu0 0
        %1517 = vmatprep.subr.bf16.mxu0 0
        %1518 = vmatpush2.bf16.msra.mxu0 0
        %1519 = vmatprep.subr.bf16.mxu0 0
        %1520 = vmatpush2.bf16.msra.mxu0 0
        %1521 = vmatprep.subr.bf16.mxu0 0
        %1522 = vmatpush2.bf16.msra.mxu0 0
        %1523 = vmatprep.subr.bf16.mxu0 0
        %1524 = vmatpush2.bf16.msra.mxu0 0
        %1525 = vmatprep.subr.bf16.mxu0 0
        %1526 = vmatpush2.bf16.msra.mxu0 0
        %1527 = vmatprep.subr.bf16.mxu0 0
        %1528 = vmatpush2.bf16.msra.mxu0 0
        %1529 = vmatprep.subr.bf16.mxu0 0
        %1530 = vmatpush2.bf16.msra.mxu0 0
        %1531 = vmatprep.mubr.bf16.mxu0 0
        %1532 = vmatmul.mubr.bf16.gmra.mxu0 %v1386
        %v1533 = vpop.f32.mrf.mxu0
        %v1534 = vadd.f32 0.0, %v1533
        %v1535 = vpop.f32.mrf.mxu0
        %v1536 = vpop.f32.mrf.mxu0
        %v1537 = vadd.f32 0.0, %v1536
        %v1538 = vpop.f32.mrf.mxu0
        %1539 = vmatprep.mubr.bf16.mxu0 0
        %1540 = vmatmul.mubr.bf16.gmra.mxu0 %v1387
        %v1541 = vpop.f32.mrf.mxu0
        %v1542 = vadd.f32 0.0, %v1541
        %v1543 = vpop.f32.mrf.mxu0
        %v1544 = vpop.f32.mrf.mxu0
        %v1545 = vadd.f32 0.0, %v1544
        %v1546 = vpop.f32.mrf.mxu0
        %1547 = vmatprep.mubr.bf16.mxu0 0
        %1548 = vmatmul.mubr.bf16.gmra.mxu0 %v1388
        %v1549 = vpop.f32.mrf.mxu0
        %v1550 = vadd.f32 0.0, %v1549
        %v1551 = vpop.f32.mrf.mxu0
        %v1552 = vpop.f32.mrf.mxu0
        %v1553 = vadd.f32 0.0, %v1552
        %v1554 = vpop.f32.mrf.mxu0
        %1555 = vmatprep.mubr.bf16.mxu0 0
        %1556 = vmatmul.mubr.bf16.gmra.mxu0 %v1389
        %v1557 = vpop.f32.mrf.mxu0
        %v1558 = vadd.f32 0.0, %v1557
        %v1559 = vpop.f32.mrf.mxu0
        %v1560 = vpop.f32.mrf.mxu0
        %v1561 = vadd.f32 0.0, %v1560
        %v1562 = vpop.f32.mrf.mxu0
        %1563 = vdwg.mxu0
        %v1580 = vunpack.c.l.b16 %v1418
        %v1581 = vunpack.c.l.b16 %v1419
        %v1582 = vunpack.c.l.b16 %v1420
        %v1583 = vunpack.c.l.b16 %v1421
        %v1584 = vunpack.c.l.b16 %v1422
        %v1585 = vunpack.c.l.b16 %v1423
        %v1586 = vunpack.c.l.b16 %v1424
        %v1587 = vunpack.c.l.b16 %v1425
        %v1588 = vunpack.c.l.b16 %v1426
        %v1589 = vunpack.c.l.b16 %v1427
        %v1590 = vunpack.c.l.b16 %v1428
        %v1591 = vunpack.c.l.b16 %v1429
        %v1592 = vunpack.c.l.b16 %v1430
        %v1593 = vunpack.c.l.b16 %v1431
        %v1594 = vunpack.c.l.b16 %v1432
        %v1595 = vunpack.c.l.b16 %v1433
        %v1596 = vpack.c.b16 %v1581, %v1580
        %v1597 = vpack.c.b16 %v1583, %v1582
        %v1598 = vpack.c.b16 %v1585, %v1584
        %v1599 = vpack.c.b16 %v1587, %v1586
        %v1600 = vpack.c.b16 %v1589, %v1588
        %v1601 = vpack.c.b16 %v1591, %v1590
        %v1602 = vpack.c.b16 %v1593, %v1592
        %v1603 = vpack.c.b16 %v1595, %v1594
        %1612 = vmatprep.subr.bf16.mxu0 0
        %1613 = vmatpush1.bf16.msra.mxu0 %v1603
        %1614 = vmatprep.subr.bf16.mxu0 0
        %1615 = vmatpush1.bf16.msra.mxu0 %v1602
        %1616 = vmatprep.subr.bf16.mxu0 0
        %1617 = vmatpush1.bf16.msra.mxu0 %v1601
        %1618 = vmatprep.subr.bf16.mxu0 0
        %1619 = vmatpush1.bf16.msra.mxu0 %v1600
        %1620 = vmatprep.subr.bf16.mxu0 0
        %1621 = vmatpush1.bf16.msra.mxu0 %v1599
        %1622 = vmatprep.subr.bf16.mxu0 0
        %1623 = vmatpush1.bf16.msra.mxu0 %v1598
        %1624 = vmatprep.subr.bf16.mxu0 0
        %1625 = vmatpush1.bf16.msra.mxu0 %v1597
        %1626 = vmatprep.subr.bf16.mxu0 0
        %1627 = vmatpush1.bf16.msra.mxu0 %v1596
        %1628 = vmatprep.subr.bf16.mxu0 0
        %1629 = vmatpush2.bf16.msra.mxu0 0
        %1630 = vmatprep.subr.bf16.mxu0 0
        %1631 = vmatpush2.bf16.msra.mxu0 0
        %1632 = vmatprep.subr.bf16.mxu0 0
        %1633 = vmatpush2.bf16.msra.mxu0 0
        %1634 = vmatprep.subr.bf16.mxu0 0
        %1635 = vmatpush2.bf16.msra.mxu0 0
        %1636 = vmatprep.subr.bf16.mxu0 0
        %1637 = vmatpush2.bf16.msra.mxu0 0
        %1638 = vmatprep.subr.bf16.mxu0 0
        %1639 = vmatpush2.bf16.msra.mxu0 0
        %1640 = vmatprep.subr.bf16.mxu0 0
        %1641 = vmatpush2.bf16.msra.mxu0 0
        %1642 = vmatprep.subr.bf16.mxu0 0
        %1643 = vmatpush2.bf16.msra.mxu0 0
        %1644 = vmatprep.mubr.bf16.mxu0 0
        %1645 = vmatmul.mubr.bf16.gmra.mxu0 %v1382
        %v1646 = vpop.f32.mrf.mxu0
        %v1647 = vadd.f32 %v1534, %v1646
        %v1648 = vpop.f32.mrf.mxu0
        %v1649 = vpop.f32.mrf.mxu0
        %v1650 = vadd.f32 %v1537, %v1649
        %v1651 = vpop.f32.mrf.mxu0
        %1652 = vmatprep.mubr.bf16.mxu0 0
        %1653 = vmatmul.mubr.bf16.gmra.mxu0 %v1383
        %v1654 = vpop.f32.mrf.mxu0
        %v1655 = vadd.f32 %v1542, %v1654
        %v1656 = vpop.f32.mrf.mxu0
        %v1657 = vpop.f32.mrf.mxu0
        %v1658 = vadd.f32 %v1545, %v1657
        %v1659 = vpop.f32.mrf.mxu0
        %1660 = vmatprep.mubr.bf16.mxu0 0
        %1661 = vmatmul.mubr.bf16.gmra.mxu0 %v1384
        %v1662 = vpop.f32.mrf.mxu0
        %v1663 = vadd.f32 %v1550, %v1662
        %v1664 = vpop.f32.mrf.mxu0
        %v1665 = vpop.f32.mrf.mxu0
        %v1666 = vadd.f32 %v1553, %v1665
        %v1667 = vpop.f32.mrf.mxu0
        %1668 = vmatprep.mubr.bf16.mxu0 0
        %1669 = vmatmul.mubr.bf16.gmra.mxu0 %v1385
        %v1670 = vpop.f32.mrf.mxu0
        %v1671 = vadd.f32 %v1558, %v1670
        %v1672 = vpop.f32.mrf.mxu0
        %v1673 = vpop.f32.mrf.mxu0
        %v1674 = vadd.f32 %v1561, %v1673
        %v1675 = vpop.f32.mrf.mxu0
        %1676 = vdwg.mxu0
        %s1677 = scalar_lea.vmem [#allocation4], 128
        %v1678 = vld [vmem:[%s1677] sm:$0xf]
        %v1679 = vld [vmem:[%s1677 + $0x4] sm:$0xf]
        %v1680 = vld [vmem:[%s1677 + $0x8] sm:$0xf]
        %v1681 = vld [vmem:[%s1677 + $0xc] sm:$0xf]
        %v1682 = vld [vmem:[%s1677 + $0x10] sm:$0xf]
        %v1683 = vld [vmem:[%s1677 + $0x14] sm:$0xf]
        %v1684 = vld [vmem:[%s1677 + $0x18] sm:$0xf]
        %v1685 = vld [vmem:[%s1677 + $0x1c] sm:$0xf]
        %v1686 = vld [vmem:[%s1677 + $0x20] sm:$0xf]
        %v1687 = vld [vmem:[%s1677 + $0x24] sm:$0xf]
        %v1688 = vld [vmem:[%s1677 + $0x28] sm:$0xf]
        %v1689 = vld [vmem:[%s1677 + $0x2c] sm:$0xf]
        %v1690 = vld [vmem:[%s1677 + $0x30] sm:$0xf]
        %v1691 = vld [vmem:[%s1677 + $0x34] sm:$0xf]
        %v1692 = vld [vmem:[%s1677 + $0x38] sm:$0xf]
        %v1693 = vld [vmem:[%s1677 + $0x3c] sm:$0xf]
        %v1710 = vunpack.c.l.b16 %v1678
        %v1711 = vunpack.c.l.b16 %v1679
        %v1712 = vunpack.c.l.b16 %v1680
        %v1713 = vunpack.c.l.b16 %v1681
        %v1714 = vunpack.c.l.b16 %v1682
        %v1715 = vunpack.c.l.b16 %v1683
        %v1716 = vunpack.c.l.b16 %v1684
        %v1717 = vunpack.c.l.b16 %v1685
        %v1718 = vunpack.c.l.b16 %v1686
        %v1719 = vunpack.c.l.b16 %v1687
        %v1720 = vunpack.c.l.b16 %v1688
        %v1721 = vunpack.c.l.b16 %v1689
        %v1722 = vunpack.c.l.b16 %v1690
        %v1723 = vunpack.c.l.b16 %v1691
        %v1724 = vunpack.c.l.b16 %v1692
        %v1725 = vunpack.c.l.b16 %v1693
        %v1726 = vpack.c.b16 %v1711, %v1710
        %v1727 = vpack.c.b16 %v1713, %v1712
        %v1728 = vpack.c.b16 %v1715, %v1714
        %v1729 = vpack.c.b16 %v1717, %v1716
        %v1730 = vpack.c.b16 %v1719, %v1718
        %v1731 = vpack.c.b16 %v1721, %v1720
        %v1732 = vpack.c.b16 %v1723, %v1722
        %v1733 = vpack.c.b16 %v1725, %v1724
        %1742 = vmatprep.subr.bf16.mxu0 0
        %1743 = vmatpush1.bf16.msra.mxu0 %v1733
        %1744 = vmatprep.subr.bf16.mxu0 0
        %1745 = vmatpush1.bf16.msra.mxu0 %v1732
        %1746 = vmatprep.subr.bf16.mxu0 0
        %1747 = vmatpush1.bf16.msra.mxu0 %v1731
        %1748 = vmatprep.subr.bf16.mxu0 0
        %1749 = vmatpush1.bf16.msra.mxu0 %v1730
        %1750 = vmatprep.subr.bf16.mxu0 0
        %1751 = vmatpush1.bf16.msra.mxu0 %v1729
        %1752 = vmatprep.subr.bf16.mxu0 0
        %1753 = vmatpush1.bf16.msra.mxu0 %v1728
        %1754 = vmatprep.subr.bf16.mxu0 0
        %1755 = vmatpush1.bf16.msra.mxu0 %v1727
        %1756 = vmatprep.subr.bf16.mxu0 0
        %1757 = vmatpush1.bf16.msra.mxu0 %v1726
        %1758 = vmatprep.subr.bf16.mxu0 0
        %1759 = vmatpush2.bf16.msra.mxu0 0
        %1760 = vmatprep.subr.bf16.mxu0 0
        %1761 = vmatpush2.bf16.msra.mxu0 0
        %1762 = vmatprep.subr.bf16.mxu0 0
        %1763 = vmatpush2.bf16.msra.mxu0 0
        %1764 = vmatprep.subr.bf16.mxu0 0
        %1765 = vmatpush2.bf16.msra.mxu0 0
        %1766 = vmatprep.subr.bf16.mxu0 0
        %1767 = vmatpush2.bf16.msra.mxu0 0
        %1768 = vmatprep.subr.bf16.mxu0 0
        %1769 = vmatpush2.bf16.msra.mxu0 0
        %1770 = vmatprep.subr.bf16.mxu0 0
        %1771 = vmatpush2.bf16.msra.mxu0 0
        %1772 = vmatprep.subr.bf16.mxu0 0
        %1773 = vmatpush2.bf16.msra.mxu0 0
        %1774 = vmatprep.mubr.bf16.mxu0 0
        %1775 = vmatmul.mubr.bf16.gmra.mxu0 %v1390
        %v1776 = vpop.f32.mrf.mxu0
        %v1777 = vadd.f32 0.0, %v1776
        %v1778 = vpop.f32.mrf.mxu0
        %v1779 = vpop.f32.mrf.mxu0
        %v1780 = vadd.f32 0.0, %v1779
        %v1781 = vpop.f32.mrf.mxu0
        %1782 = vmatprep.mubr.bf16.mxu0 0
        %1783 = vmatmul.mubr.bf16.gmra.mxu0 %v1391
        %v1784 = vpop.f32.mrf.mxu0
        %v1785 = vadd.f32 0.0, %v1784
        %v1786 = vpop.f32.mrf.mxu0
        %v1787 = vpop.f32.mrf.mxu0
        %v1788 = vadd.f32 0.0, %v1787
        %v1789 = vpop.f32.mrf.mxu0
        %1790 = vmatprep.mubr.bf16.mxu0 0
        %1791 = vmatmul.mubr.bf16.gmra.mxu0 %v1392
        %v1792 = vpop.f32.mrf.mxu0
        %v1793 = vadd.f32 0.0, %v1792
        %v1794 = vpop.f32.mrf.mxu0
        %v1795 = vpop.f32.mrf.mxu0
        %v1796 = vadd.f32 0.0, %v1795
        %v1797 = vpop.f32.mrf.mxu0
        %1798 = vmatprep.mubr.bf16.mxu0 0
        %1799 = vmatmul.mubr.bf16.gmra.mxu0 %v1393
        %v1800 = vpop.f32.mrf.mxu0
        %v1801 = vadd.f32 0.0, %v1800
        %v1802 = vpop.f32.mrf.mxu0
        %v1803 = vpop.f32.mrf.mxu0
        %v1804 = vadd.f32 0.0, %v1803
        %v1805 = vpop.f32.mrf.mxu0
        %1806 = vdwg.mxu0
        %v1807 = vadd.f32 %v1647, %v1777
        %v1808 = vadd.f32 %v1650, %v1780
        %v1809 = vadd.f32 %v1655, %v1785
        %v1810 = vadd.f32 %v1658, %v1788
        %v1811 = vadd.f32 %v1663, %v1793
        %v1812 = vadd.f32 %v1666, %v1796
        %v1813 = vadd.f32 %v1671, %v1801
        %v1814 = vadd.f32 %v1674, %v1804
        %s1815 = scalar_lea.vmem [#allocation4], 192
        %v1816 = vld [vmem:[%s1815] sm:$0xf]
        %v1817 = vld [vmem:[%s1815 + $0x4] sm:$0xf]
        %v1818 = vld [vmem:[%s1815 + $0x8] sm:$0xf]
        %v1819 = vld [vmem:[%s1815 + $0xc] sm:$0xf]
        %v1820 = vld [vmem:[%s1815 + $0x10] sm:$0xf]
        %v1821 = vld [vmem:[%s1815 + $0x14] sm:$0xf]
        %v1822 = vld [vmem:[%s1815 + $0x18] sm:$0xf]
        %v1823 = vld [vmem:[%s1815 + $0x1c] sm:$0xf]
        %v1824 = vld [vmem:[%s1815 + $0x20] sm:$0xf]
        %v1825 = vld [vmem:[%s1815 + $0x24] sm:$0xf]
        %v1826 = vld [vmem:[%s1815 + $0x28] sm:$0xf]
        %v1827 = vld [vmem:[%s1815 + $0x2c] sm:$0xf]
        %v1828 = vld [vmem:[%s1815 + $0x30] sm:$0xf]
        %v1829 = vld [vmem:[%s1815 + $0x34] sm:$0xf]
        %v1830 = vld [vmem:[%s1815 + $0x38] sm:$0xf]
        %v1831 = vld [vmem:[%s1815 + $0x3c] sm:$0xf]
        %v1848 = vunpack.c.l.b16 %v1816
        %v1849 = vunpack.c.l.b16 %v1817
        %v1850 = vunpack.c.l.b16 %v1818
        %v1851 = vunpack.c.l.b16 %v1819
        %v1852 = vunpack.c.l.b16 %v1820
        %v1853 = vunpack.c.l.b16 %v1821
        %v1854 = vunpack.c.l.b16 %v1822
        %v1855 = vunpack.c.l.b16 %v1823
        %v1856 = vunpack.c.l.b16 %v1824
        %v1857 = vunpack.c.l.b16 %v1825
        %v1858 = vunpack.c.l.b16 %v1826
        %v1859 = vunpack.c.l.b16 %v1827
        %v1860 = vunpack.c.l.b16 %v1828
        %v1861 = vunpack.c.l.b16 %v1829
        %v1862 = vunpack.c.l.b16 %v1830
        %v1863 = vunpack.c.l.b16 %v1831
        %v1864 = vpack.c.b16 %v1849, %v1848
        %v1865 = vpack.c.b16 %v1851, %v1850
        %v1866 = vpack.c.b16 %v1853, %v1852
        %v1867 = vpack.c.b16 %v1855, %v1854
        %v1868 = vpack.c.b16 %v1857, %v1856
        %v1869 = vpack.c.b16 %v1859, %v1858
        %v1870 = vpack.c.b16 %v1861, %v1860
        %v1871 = vpack.c.b16 %v1863, %v1862
        %1880 = vmatprep.subr.bf16.mxu0 0
        %1881 = vmatpush1.bf16.msra.mxu0 %v1871
        %1882 = vmatprep.subr.bf16.mxu0 0
        %1883 = vmatpush1.bf16.msra.mxu0 %v1870
        %1884 = vmatprep.subr.bf16.mxu0 0
        %1885 = vmatpush1.bf16.msra.mxu0 %v1869
        %1886 = vmatprep.subr.bf16.mxu0 0
        %1887 = vmatpush1.bf16.msra.mxu0 %v1868
        %1888 = vmatprep.subr.bf16.mxu0 0
        %1889 = vmatpush1.bf16.msra.mxu0 %v1867
        %1890 = vmatprep.subr.bf16.mxu0 0
        %1891 = vmatpush1.bf16.msra.mxu0 %v1866
        %1892 = vmatprep.subr.bf16.mxu0 0
        %1893 = vmatpush1.bf16.msra.mxu0 %v1865
        %1894 = vmatprep.subr.bf16.mxu0 0
        %1895 = vmatpush1.bf16.msra.mxu0 %v1864
        %1896 = vmatprep.subr.bf16.mxu0 0
        %1897 = vmatpush2.bf16.msra.mxu0 0
        %1898 = vmatprep.subr.bf16.mxu0 0
        %1899 = vmatpush2.bf16.msra.mxu0 0
        %1900 = vmatprep.subr.bf16.mxu0 0
        %1901 = vmatpush2.bf16.msra.mxu0 0
        %1902 = vmatprep.subr.bf16.mxu0 0
        %1903 = vmatpush2.bf16.msra.mxu0 0
        %1904 = vmatprep.subr.bf16.mxu0 0
        %1905 = vmatpush2.bf16.msra.mxu0 0
        %1906 = vmatprep.subr.bf16.mxu0 0
        %1907 = vmatpush2.bf16.msra.mxu0 0
        %1908 = vmatprep.subr.bf16.mxu0 0
        %1909 = vmatpush2.bf16.msra.mxu0 0
        %1910 = vmatprep.subr.bf16.mxu0 0
        %1911 = vmatpush2.bf16.msra.mxu0 0
        %1912 = vmatprep.mubr.bf16.mxu0 0
        %1913 = vmatmul.mubr.bf16.gmra.mxu0 %v1394
        %v1914 = vpop.f32.mrf.mxu0
        %v1915 = vadd.f32 0.0, %v1914
        %v1916 = vpop.f32.mrf.mxu0
        %v1917 = vpop.f32.mrf.mxu0
        %v1918 = vadd.f32 0.0, %v1917
        %v1919 = vpop.f32.mrf.mxu0
        %1920 = vmatprep.mubr.bf16.mxu0 0
        %1921 = vmatmul.mubr.bf16.gmra.mxu0 %v1395
        %v1922 = vpop.f32.mrf.mxu0
        %v1923 = vadd.f32 0.0, %v1922
        %v1924 = vpop.f32.mrf.mxu0
        %v1925 = vpop.f32.mrf.mxu0
        %v1926 = vadd.f32 0.0, %v1925
        %v1927 = vpop.f32.mrf.mxu0
        %1928 = vmatprep.mubr.bf16.mxu0 0
        %1929 = vmatmul.mubr.bf16.gmra.mxu0 %v1396
        %v1930 = vpop.f32.mrf.mxu0
        %v1931 = vadd.f32 0.0, %v1930
        %v1932 = vpop.f32.mrf.mxu0
        %v1933 = vpop.f32.mrf.mxu0
        %v1934 = vadd.f32 0.0, %v1933
        %v1935 = vpop.f32.mrf.mxu0
        %1936 = vmatprep.mubr.bf16.mxu0 0
        %1937 = vmatmul.mubr.bf16.gmra.mxu0 %v1397
        %v1938 = vpop.f32.mrf.mxu0
        %v1939 = vadd.f32 0.0, %v1938
        %v1940 = vpop.f32.mrf.mxu0
        %v1941 = vpop.f32.mrf.mxu0
        %v1942 = vadd.f32 0.0, %v1941
        %v1943 = vpop.f32.mrf.mxu0
        %1944 = vdwg.mxu0
        %v1945 = vadd.f32 %v1807, %v1915
        %v1946 = vadd.f32 %v1808, %v1918
        %v1947 = vadd.f32 %v1809, %v1923
        %v1948 = vadd.f32 %v1810, %v1926
        %v1949 = vadd.f32 %v1811, %v1931
        %v1950 = vadd.f32 %v1812, %v1934
        %v1951 = vadd.f32 %v1813, %v1939
        %v1952 = vadd.f32 %v1814, %v1942
        %s1953 = scalar_lea.vmem [#allocation4], 256
        %v1954 = vld [vmem:[%s1953] sm:$0xf]
        %v1955 = vld [vmem:[%s1953 + $0x4] sm:$0xf]
        %v1956 = vld [vmem:[%s1953 + $0x8] sm:$0xf]
        %v1957 = vld [vmem:[%s1953 + $0xc] sm:$0xf]
        %v1958 = vld [vmem:[%s1953 + $0x10] sm:$0xf]
        %v1959 = vld [vmem:[%s1953 + $0x14] sm:$0xf]
        %v1960 = vld [vmem:[%s1953 + $0x18] sm:$0xf]
        %v1961 = vld [vmem:[%s1953 + $0x1c] sm:$0xf]
        %v1962 = vld [vmem:[%s1953 + $0x20] sm:$0xf]
        %v1963 = vld [vmem:[%s1953 + $0x24] sm:$0xf]
        %v1964 = vld [vmem:[%s1953 + $0x28] sm:$0xf]
        %v1965 = vld [vmem:[%s1953 + $0x2c] sm:$0xf]
        %v1966 = vld [vmem:[%s1953 + $0x30] sm:$0xf]
        %v1967 = vld [vmem:[%s1953 + $0x34] sm:$0xf]
        %v1968 = vld [vmem:[%s1953 + $0x38] sm:$0xf]
        %v1969 = vld [vmem:[%s1953 + $0x3c] sm:$0xf]
        %v1986 = vunpack.c.l.b16 %v1954
        %v1987 = vunpack.c.l.b16 %v1955
        %v1988 = vunpack.c.l.b16 %v1956
        %v1989 = vunpack.c.l.b16 %v1957
        %v1990 = vunpack.c.l.b16 %v1958
        %v1991 = vunpack.c.l.b16 %v1959
        %v1992 = vunpack.c.l.b16 %v1960
        %v1993 = vunpack.c.l.b16 %v1961
        %v1994 = vunpack.c.l.b16 %v1962
        %v1995 = vunpack.c.l.b16 %v1963
        %v1996 = vunpack.c.l.b16 %v1964
        %v1997 = vunpack.c.l.b16 %v1965
        %v1998 = vunpack.c.l.b16 %v1966
        %v1999 = vunpack.c.l.b16 %v1967
        %v2000 = vunpack.c.l.b16 %v1968
        %v2001 = vunpack.c.l.b16 %v1969
        %v2002 = vpack.c.b16 %v1987, %v1986
        %v2003 = vpack.c.b16 %v1989, %v1988
        %v2004 = vpack.c.b16 %v1991, %v1990
        %v2005 = vpack.c.b16 %v1993, %v1992
        %v2006 = vpack.c.b16 %v1995, %v1994
        %v2007 = vpack.c.b16 %v1997, %v1996
        %v2008 = vpack.c.b16 %v1999, %v1998
        %v2009 = vpack.c.b16 %v2001, %v2000
        %2018 = vmatprep.subr.bf16.mxu0 0
        %2019 = vmatpush1.bf16.msra.mxu0 %v2009
        %2020 = vmatprep.subr.bf16.mxu0 0
        %2021 = vmatpush1.bf16.msra.mxu0 %v2008
        %2022 = vmatprep.subr.bf16.mxu0 0
        %2023 = vmatpush1.bf16.msra.mxu0 %v2007
        %2024 = vmatprep.subr.bf16.mxu0 0
        %2025 = vmatpush1.bf16.msra.mxu0 %v2006
        %2026 = vmatprep.subr.bf16.mxu0 0
        %2027 = vmatpush1.bf16.msra.mxu0 %v2005
        %2028 = vmatprep.subr.bf16.mxu0 0
        %2029 = vmatpush1.bf16.msra.mxu0 %v2004
        %2030 = vmatprep.subr.bf16.mxu0 0
        %2031 = vmatpush1.bf16.msra.mxu0 %v2003
        %2032 = vmatprep.subr.bf16.mxu0 0
        %2033 = vmatpush1.bf16.msra.mxu0 %v2002
        %2034 = vmatprep.subr.bf16.mxu0 0
        %2035 = vmatpush2.bf16.msra.mxu0 0
        %2036 = vmatprep.subr.bf16.mxu0 0
        %2037 = vmatpush2.bf16.msra.mxu0 0
        %2038 = vmatprep.subr.bf16.mxu0 0
        %2039 = vmatpush2.bf16.msra.mxu0 0
        %2040 = vmatprep.subr.bf16.mxu0 0
        %2041 = vmatpush2.bf16.msra.mxu0 0
        %2042 = vmatprep.subr.bf16.mxu0 0
        %2043 = vmatpush2.bf16.msra.mxu0 0
        %2044 = vmatprep.subr.bf16.mxu0 0
        %2045 = vmatpush2.bf16.msra.mxu0 0
        %2046 = vmatprep.subr.bf16.mxu0 0
        %2047 = vmatpush2.bf16.msra.mxu0 0
        %2048 = vmatprep.subr.bf16.mxu0 0
        %2049 = vmatpush2.bf16.msra.mxu0 0
        %2050 = vmatprep.mubr.bf16.mxu0 0
        %2051 = vmatmul.mubr.bf16.gmra.mxu0 %v1398
        %v2052 = vpop.f32.mrf.mxu0
        %v2053 = vadd.f32 0.0, %v2052
        %v2054 = vpop.f32.mrf.mxu0
        %v2055 = vpop.f32.mrf.mxu0
        %v2056 = vadd.f32 0.0, %v2055
        %v2057 = vpop.f32.mrf.mxu0
        %2058 = vmatprep.mubr.bf16.mxu0 0
        %2059 = vmatmul.mubr.bf16.gmra.mxu0 %v1399
        %v2060 = vpop.f32.mrf.mxu0
        %v2061 = vadd.f32 0.0, %v2060
        %v2062 = vpop.f32.mrf.mxu0
        %v2063 = vpop.f32.mrf.mxu0
        %v2064 = vadd.f32 0.0, %v2063
        %v2065 = vpop.f32.mrf.mxu0
        %2066 = vmatprep.mubr.bf16.mxu0 0
        %2067 = vmatmul.mubr.bf16.gmra.mxu0 %v1400
        %v2068 = vpop.f32.mrf.mxu0
        %v2069 = vadd.f32 0.0, %v2068
        %v2070 = vpop.f32.mrf.mxu0
        %v2071 = vpop.f32.mrf.mxu0
        %v2072 = vadd.f32 0.0, %v2071
        %v2073 = vpop.f32.mrf.mxu0
        %2074 = vmatprep.mubr.bf16.mxu0 0
        %2075 = vmatmul.mubr.bf16.gmra.mxu0 %v1401
        %v2076 = vpop.f32.mrf.mxu0
        %v2077 = vadd.f32 0.0, %v2076
        %v2078 = vpop.f32.mrf.mxu0
        %v2079 = vpop.f32.mrf.mxu0
        %v2080 = vadd.f32 0.0, %v2079
        %v2081 = vpop.f32.mrf.mxu0
        %2082 = vdwg.mxu0
        %v2083 = vadd.f32 %v1945, %v2053
        %v2084 = vadd.f32 %v1946, %v2056
        %v2085 = vadd.f32 %v1947, %v2061
        %v2086 = vadd.f32 %v1948, %v2064
        %v2087 = vadd.f32 %v1949, %v2069
        %v2088 = vadd.f32 %v1950, %v2072
        %v2089 = vadd.f32 %v1951, %v2077
        %v2090 = vadd.f32 %v1952, %v2080
        %s2091 = scalar_lea.vmem [#allocation4], 320
        %v2092 = vld [vmem:[%s2091] sm:$0xf]
        %v2093 = vld [vmem:[%s2091 + $0x4] sm:$0xf]
        %v2094 = vld [vmem:[%s2091 + $0x8] sm:$0xf]
        %v2095 = vld [vmem:[%s2091 + $0xc] sm:$0xf]
        %v2096 = vld [vmem:[%s2091 + $0x10] sm:$0xf]
        %v2097 = vld [vmem:[%s2091 + $0x14] sm:$0xf]
        %v2098 = vld [vmem:[%s2091 + $0x18] sm:$0xf]
        %v2099 = vld [vmem:[%s2091 + $0x1c] sm:$0xf]
        %v2100 = vld [vmem:[%s2091 + $0x20] sm:$0xf]
        %v2101 = vld [vmem:[%s2091 + $0x24] sm:$0xf]
        %v2102 = vld [vmem:[%s2091 + $0x28] sm:$0xf]
        %v2103 = vld [vmem:[%s2091 + $0x2c] sm:$0xf]
        %v2104 = vld [vmem:[%s2091 + $0x30] sm:$0xf]
        %v2105 = vld [vmem:[%s2091 + $0x34] sm:$0xf]
        %v2106 = vld [vmem:[%s2091 + $0x38] sm:$0xf]
        %v2107 = vld [vmem:[%s2091 + $0x3c] sm:$0xf]
        %v2124 = vunpack.c.l.b16 %v2092
        %v2125 = vunpack.c.l.b16 %v2093
        %v2126 = vunpack.c.l.b16 %v2094
        %v2127 = vunpack.c.l.b16 %v2095
        %v2128 = vunpack.c.l.b16 %v2096
        %v2129 = vunpack.c.l.b16 %v2097
        %v2130 = vunpack.c.l.b16 %v2098
        %v2131 = vunpack.c.l.b16 %v2099
        %v2132 = vunpack.c.l.b16 %v2100
        %v2133 = vunpack.c.l.b16 %v2101
        %v2134 = vunpack.c.l.b16 %v2102
        %v2135 = vunpack.c.l.b16 %v2103
        %v2136 = vunpack.c.l.b16 %v2104
        %v2137 = vunpack.c.l.b16 %v2105
        %v2138 = vunpack.c.l.b16 %v2106
        %v2139 = vunpack.c.l.b16 %v2107
        %v2140 = vpack.c.b16 %v2125, %v2124
        %v2141 = vpack.c.b16 %v2127, %v2126
        %v2142 = vpack.c.b16 %v2129, %v2128
        %v2143 = vpack.c.b16 %v2131, %v2130
        %v2144 = vpack.c.b16 %v2133, %v2132
        %v2145 = vpack.c.b16 %v2135, %v2134
        %v2146 = vpack.c.b16 %v2137, %v2136
        %v2147 = vpack.c.b16 %v2139, %v2138
        %2156 = vmatprep.subr.bf16.mxu0 0
        %2157 = vmatpush1.bf16.msra.mxu0 %v2147
        %2158 = vmatprep.subr.bf16.mxu0 0
        %2159 = vmatpush1.bf16.msra.mxu0 %v2146
        %2160 = vmatprep.subr.bf16.mxu0 0
        %2161 = vmatpush1.bf16.msra.mxu0 %v2145
        %2162 = vmatprep.subr.bf16.mxu0 0
        %2163 = vmatpush1.bf16.msra.mxu0 %v2144
        %2164 = vmatprep.subr.bf16.mxu0 0
        %2165 = vmatpush1.bf16.msra.mxu0 %v2143
        %2166 = vmatprep.subr.bf16.mxu0 0
        %2167 = vmatpush1.bf16.msra.mxu0 %v2142
        %2168 = vmatprep.subr.bf16.mxu0 0
        %2169 = vmatpush1.bf16.msra.mxu0 %v2141
        %2170 = vmatprep.subr.bf16.mxu0 0
        %2171 = vmatpush1.bf16.msra.mxu0 %v2140
        %2172 = vmatprep.subr.bf16.mxu0 0
        %2173 = vmatpush2.bf16.msra.mxu0 0
        %2174 = vmatprep.subr.bf16.mxu0 0
        %2175 = vmatpush2.bf16.msra.mxu0 0
        %2176 = vmatprep.subr.bf16.mxu0 0
        %2177 = vmatpush2.bf16.msra.mxu0 0
        %2178 = vmatprep.subr.bf16.mxu0 0
        %2179 = vmatpush2.bf16.msra.mxu0 0
        %2180 = vmatprep.subr.bf16.mxu0 0
        %2181 = vmatpush2.bf16.msra.mxu0 0
        %2182 = vmatprep.subr.bf16.mxu0 0
        %2183 = vmatpush2.bf16.msra.mxu0 0
        %2184 = vmatprep.subr.bf16.mxu0 0
        %2185 = vmatpush2.bf16.msra.mxu0 0
        %2186 = vmatprep.subr.bf16.mxu0 0
        %2187 = vmatpush2.bf16.msra.mxu0 0
        %2188 = vmatprep.mubr.bf16.mxu0 0
        %2189 = vmatmul.mubr.bf16.gmra.mxu0 %v1402
        %v2190 = vpop.f32.mrf.mxu0
        %v2191 = vadd.f32 0.0, %v2190
        %v2192 = vpop.f32.mrf.mxu0
        %v2193 = vpop.f32.mrf.mxu0
        %v2194 = vadd.f32 0.0, %v2193
        %v2195 = vpop.f32.mrf.mxu0
        %2196 = vmatprep.mubr.bf16.mxu0 0
        %2197 = vmatmul.mubr.bf16.gmra.mxu0 %v1403
        %v2198 = vpop.f32.mrf.mxu0
        %v2199 = vadd.f32 0.0, %v2198
        %v2200 = vpop.f32.mrf.mxu0
        %v2201 = vpop.f32.mrf.mxu0
        %v2202 = vadd.f32 0.0, %v2201
        %v2203 = vpop.f32.mrf.mxu0
        %2204 = vmatprep.mubr.bf16.mxu0 0
        %2205 = vmatmul.mubr.bf16.gmra.mxu0 %v1404
        %v2206 = vpop.f32.mrf.mxu0
        %v2207 = vadd.f32 0.0, %v2206
        %v2208 = vpop.f32.mrf.mxu0
        %v2209 = vpop.f32.mrf.mxu0
        %v2210 = vadd.f32 0.0, %v2209
        %v2211 = vpop.f32.mrf.mxu0
        %2212 = vmatprep.mubr.bf16.mxu0 0
        %2213 = vmatmul.mubr.bf16.gmra.mxu0 %v1405
        %v2214 = vpop.f32.mrf.mxu0
        %v2215 = vadd.f32 0.0, %v2214
        %v2216 = vpop.f32.mrf.mxu0
        %v2217 = vpop.f32.mrf.mxu0
        %v2218 = vadd.f32 0.0, %v2217
        %v2219 = vpop.f32.mrf.mxu0
        %2220 = vdwg.mxu0
        %v2221 = vadd.f32 %v2083, %v2191
        %v2222 = vadd.f32 %v2084, %v2194
        %v2223 = vadd.f32 %v2085, %v2199
        %v2224 = vadd.f32 %v2086, %v2202
        %v2225 = vadd.f32 %v2087, %v2207
        %v2226 = vadd.f32 %v2088, %v2210
        %v2227 = vadd.f32 %v2089, %v2215
        %v2228 = vadd.f32 %v2090, %v2218
        %s2229 = scalar_lea.vmem [#allocation4], 384
        %v2230 = vld [vmem:[%s2229] sm:$0xf]
        %v2231 = vld [vmem:[%s2229 + $0x4] sm:$0xf]
        %v2232 = vld [vmem:[%s2229 + $0x8] sm:$0xf]
        %v2233 = vld [vmem:[%s2229 + $0xc] sm:$0xf]
        %v2234 = vld [vmem:[%s2229 + $0x10] sm:$0xf]
        %v2235 = vld [vmem:[%s2229 + $0x14] sm:$0xf]
        %v2236 = vld [vmem:[%s2229 + $0x18] sm:$0xf]
        %v2237 = vld [vmem:[%s2229 + $0x1c] sm:$0xf]
        %v2238 = vld [vmem:[%s2229 + $0x20] sm:$0xf]
        %v2239 = vld [vmem:[%s2229 + $0x24] sm:$0xf]
        %v2240 = vld [vmem:[%s2229 + $0x28] sm:$0xf]
        %v2241 = vld [vmem:[%s2229 + $0x2c] sm:$0xf]
        %v2242 = vld [vmem:[%s2229 + $0x30] sm:$0xf]
        %v2243 = vld [vmem:[%s2229 + $0x34] sm:$0xf]
        %v2244 = vld [vmem:[%s2229 + $0x38] sm:$0xf]
        %v2245 = vld [vmem:[%s2229 + $0x3c] sm:$0xf]
        %v2262 = vunpack.c.l.b16 %v2230
        %v2263 = vunpack.c.l.b16 %v2231
        %v2264 = vunpack.c.l.b16 %v2232
        %v2265 = vunpack.c.l.b16 %v2233
        %v2266 = vunpack.c.l.b16 %v2234
        %v2267 = vunpack.c.l.b16 %v2235
        %v2268 = vunpack.c.l.b16 %v2236
        %v2269 = vunpack.c.l.b16 %v2237
        %v2270 = vunpack.c.l.b16 %v2238
        %v2271 = vunpack.c.l.b16 %v2239
        %v2272 = vunpack.c.l.b16 %v2240
        %v2273 = vunpack.c.l.b16 %v2241
        %v2274 = vunpack.c.l.b16 %v2242
        %v2275 = vunpack.c.l.b16 %v2243
        %v2276 = vunpack.c.l.b16 %v2244
        %v2277 = vunpack.c.l.b16 %v2245
        %v2278 = vpack.c.b16 %v2263, %v2262
        %v2279 = vpack.c.b16 %v2265, %v2264
        %v2280 = vpack.c.b16 %v2267, %v2266
        %v2281 = vpack.c.b16 %v2269, %v2268
        %v2282 = vpack.c.b16 %v2271, %v2270
        %v2283 = vpack.c.b16 %v2273, %v2272
        %v2284 = vpack.c.b16 %v2275, %v2274
        %v2285 = vpack.c.b16 %v2277, %v2276
        %2294 = vmatprep.subr.bf16.mxu0 0
        %2295 = vmatpush1.bf16.msra.mxu0 %v2285
        %2296 = vmatprep.subr.bf16.mxu0 0
        %2297 = vmatpush1.bf16.msra.mxu0 %v2284
        %2298 = vmatprep.subr.bf16.mxu0 0
        %2299 = vmatpush1.bf16.msra.mxu0 %v2283
        %2300 = vmatprep.subr.bf16.mxu0 0
        %2301 = vmatpush1.bf16.msra.mxu0 %v2282
        %2302 = vmatprep.subr.bf16.mxu0 0
        %2303 = vmatpush1.bf16.msra.mxu0 %v2281
        %2304 = vmatprep.subr.bf16.mxu0 0
        %2305 = vmatpush1.bf16.msra.mxu0 %v2280
        %2306 = vmatprep.subr.bf16.mxu0 0
        %2307 = vmatpush1.bf16.msra.mxu0 %v2279
        %2308 = vmatprep.subr.bf16.mxu0 0
        %2309 = vmatpush1.bf16.msra.mxu0 %v2278
        %2310 = vmatprep.subr.bf16.mxu0 0
        %2311 = vmatpush2.bf16.msra.mxu0 0
        %2312 = vmatprep.subr.bf16.mxu0 0
        %2313 = vmatpush2.bf16.msra.mxu0 0
        %2314 = vmatprep.subr.bf16.mxu0 0
        %2315 = vmatpush2.bf16.msra.mxu0 0
        %2316 = vmatprep.subr.bf16.mxu0 0
        %2317 = vmatpush2.bf16.msra.mxu0 0
        %2318 = vmatprep.subr.bf16.mxu0 0
        %2319 = vmatpush2.bf16.msra.mxu0 0
        %2320 = vmatprep.subr.bf16.mxu0 0
        %2321 = vmatpush2.bf16.msra.mxu0 0
        %2322 = vmatprep.subr.bf16.mxu0 0
        %2323 = vmatpush2.bf16.msra.mxu0 0
        %2324 = vmatprep.subr.bf16.mxu0 0
        %2325 = vmatpush2.bf16.msra.mxu0 0
        %2326 = vmatprep.mubr.bf16.mxu0 0
        %2327 = vmatmul.mubr.bf16.gmra.mxu0 %v1406
        %v2328 = vpop.f32.mrf.mxu0
        %v2329 = vadd.f32 0.0, %v2328
        %v2330 = vpop.f32.mrf.mxu0
        %v2331 = vpop.f32.mrf.mxu0
        %v2332 = vadd.f32 0.0, %v2331
        %v2333 = vpop.f32.mrf.mxu0
        %2334 = vmatprep.mubr.bf16.mxu0 0
        %2335 = vmatmul.mubr.bf16.gmra.mxu0 %v1407
        %v2336 = vpop.f32.mrf.mxu0
        %v2337 = vadd.f32 0.0, %v2336
        %v2338 = vpop.f32.mrf.mxu0
        %v2339 = vpop.f32.mrf.mxu0
        %v2340 = vadd.f32 0.0, %v2339
        %v2341 = vpop.f32.mrf.mxu0
        %2342 = vmatprep.mubr.bf16.mxu0 0
        %2343 = vmatmul.mubr.bf16.gmra.mxu0 %v1408
        %v2344 = vpop.f32.mrf.mxu0
        %v2345 = vadd.f32 0.0, %v2344
        %v2346 = vpop.f32.mrf.mxu0
        %v2347 = vpop.f32.mrf.mxu0
        %v2348 = vadd.f32 0.0, %v2347
        %v2349 = vpop.f32.mrf.mxu0
        %2350 = vmatprep.mubr.bf16.mxu0 0
        %2351 = vmatmul.mubr.bf16.gmra.mxu0 %v1409
        %v2352 = vpop.f32.mrf.mxu0
        %v2353 = vadd.f32 0.0, %v2352
        %v2354 = vpop.f32.mrf.mxu0
        %v2355 = vpop.f32.mrf.mxu0
        %v2356 = vadd.f32 0.0, %v2355
        %v2357 = vpop.f32.mrf.mxu0
        %2358 = vdwg.mxu0
        %v2359 = vadd.f32 %v2221, %v2329
        %v2360 = vadd.f32 %v2222, %v2332
        %v2361 = vadd.f32 %v2223, %v2337
        %v2362 = vadd.f32 %v2224, %v2340
        %v2363 = vadd.f32 %v2225, %v2345
        %v2364 = vadd.f32 %v2226, %v2348
        %v2365 = vadd.f32 %v2227, %v2353
        %v2366 = vadd.f32 %v2228, %v2356
        %s2367 = scalar_lea.vmem [#allocation4], 448
        %v2368 = vld [vmem:[%s2367] sm:$0xf]
        %v2369 = vld [vmem:[%s2367 + $0x4] sm:$0xf]
        %v2370 = vld [vmem:[%s2367 + $0x8] sm:$0xf]
        %v2371 = vld [vmem:[%s2367 + $0xc] sm:$0xf]
        %v2372 = vld [vmem:[%s2367 + $0x10] sm:$0xf]
        %v2373 = vld [vmem:[%s2367 + $0x14] sm:$0xf]
        %v2374 = vld [vmem:[%s2367 + $0x18] sm:$0xf]
        %v2375 = vld [vmem:[%s2367 + $0x1c] sm:$0xf]
        %v2376 = vld [vmem:[%s2367 + $0x20] sm:$0xf]
        %v2377 = vld [vmem:[%s2367 + $0x24] sm:$0xf]
        %v2378 = vld [vmem:[%s2367 + $0x28] sm:$0xf]
        %v2379 = vld [vmem:[%s2367 + $0x2c] sm:$0xf]
        %v2380 = vld [vmem:[%s2367 + $0x30] sm:$0xf]
        %v2381 = vld [vmem:[%s2367 + $0x34] sm:$0xf]
        %v2382 = vld [vmem:[%s2367 + $0x38] sm:$0xf]
        %v2383 = vld [vmem:[%s2367 + $0x3c] sm:$0xf]
        %v2400 = vunpack.c.l.b16 %v2368
        %v2401 = vunpack.c.l.b16 %v2369
        %v2402 = vunpack.c.l.b16 %v2370
        %v2403 = vunpack.c.l.b16 %v2371
        %v2404 = vunpack.c.l.b16 %v2372
        %v2405 = vunpack.c.l.b16 %v2373
        %v2406 = vunpack.c.l.b16 %v2374
        %v2407 = vunpack.c.l.b16 %v2375
        %v2408 = vunpack.c.l.b16 %v2376
        %v2409 = vunpack.c.l.b16 %v2377
        %v2410 = vunpack.c.l.b16 %v2378
        %v2411 = vunpack.c.l.b16 %v2379
        %v2412 = vunpack.c.l.b16 %v2380
        %v2413 = vunpack.c.l.b16 %v2381
        %v2414 = vunpack.c.l.b16 %v2382
        %v2415 = vunpack.c.l.b16 %v2383
        %v2416 = vpack.c.b16 %v2401, %v2400
        %v2417 = vpack.c.b16 %v2403, %v2402
        %v2418 = vpack.c.b16 %v2405, %v2404
        %v2419 = vpack.c.b16 %v2407, %v2406
        %v2420 = vpack.c.b16 %v2409, %v2408
        %v2421 = vpack.c.b16 %v2411, %v2410
        %v2422 = vpack.c.b16 %v2413, %v2412
        %v2423 = vpack.c.b16 %v2415, %v2414
        %2432 = vmatprep.subr.bf16.mxu0 0
        %2433 = vmatpush1.bf16.msra.mxu0 %v2423
        %2434 = vmatprep.subr.bf16.mxu0 0
        %2435 = vmatpush1.bf16.msra.mxu0 %v2422
        %2436 = vmatprep.subr.bf16.mxu0 0
        %2437 = vmatpush1.bf16.msra.mxu0 %v2421
        %2438 = vmatprep.subr.bf16.mxu0 0
        %2439 = vmatpush1.bf16.msra.mxu0 %v2420
        %2440 = vmatprep.subr.bf16.mxu0 0
        %2441 = vmatpush1.bf16.msra.mxu0 %v2419
        %2442 = vmatprep.subr.bf16.mxu0 0
        %2443 = vmatpush1.bf16.msra.mxu0 %v2418
        %2444 = vmatprep.subr.bf16.mxu0 0
        %2445 = vmatpush1.bf16.msra.mxu0 %v2417
        %2446 = vmatprep.subr.bf16.mxu0 0
        %2447 = vmatpush1.bf16.msra.mxu0 %v2416
        %2448 = vmatprep.subr.bf16.mxu0 0
        %2449 = vmatpush2.bf16.msra.mxu0 0
        %2450 = vmatprep.subr.bf16.mxu0 0
        %2451 = vmatpush2.bf16.msra.mxu0 0
        %2452 = vmatprep.subr.bf16.mxu0 0
        %2453 = vmatpush2.bf16.msra.mxu0 0
        %2454 = vmatprep.subr.bf16.mxu0 0
        %2455 = vmatpush2.bf16.msra.mxu0 0
        %2456 = vmatprep.subr.bf16.mxu0 0
        %2457 = vmatpush2.bf16.msra.mxu0 0
        %2458 = vmatprep.subr.bf16.mxu0 0
        %2459 = vmatpush2.bf16.msra.mxu0 0
        %2460 = vmatprep.subr.bf16.mxu0 0
        %2461 = vmatpush2.bf16.msra.mxu0 0
        %2462 = vmatprep.subr.bf16.mxu0 0
        %2463 = vmatpush2.bf16.msra.mxu0 0
        %2464 = vmatprep.mubr.bf16.mxu0 0
        %2465 = vmatmul.mubr.bf16.gmra.mxu0 %v1410
        %v2466 = vpop.f32.mrf.mxu0
        %v2467 = vadd.f32 0.0, %v2466
        %v2468 = vpop.f32.mrf.mxu0
        %v2469 = vpop.f32.mrf.mxu0
        %v2470 = vadd.f32 0.0, %v2469
        %v2471 = vpop.f32.mrf.mxu0
        %2472 = vmatprep.mubr.bf16.mxu0 0
        %2473 = vmatmul.mubr.bf16.gmra.mxu0 %v1411
        %v2474 = vpop.f32.mrf.mxu0
        %v2475 = vadd.f32 0.0, %v2474
        %v2476 = vpop.f32.mrf.mxu0
        %v2477 = vpop.f32.mrf.mxu0
        %v2478 = vadd.f32 0.0, %v2477
        %v2479 = vpop.f32.mrf.mxu0
        %2480 = vmatprep.mubr.bf16.mxu0 0
        %2481 = vmatmul.mubr.bf16.gmra.mxu0 %v1412
        %v2482 = vpop.f32.mrf.mxu0
        %v2483 = vadd.f32 0.0, %v2482
        %v2484 = vpop.f32.mrf.mxu0
        %v2485 = vpop.f32.mrf.mxu0
        %v2486 = vadd.f32 0.0, %v2485
        %v2487 = vpop.f32.mrf.mxu0
        %2488 = vmatprep.mubr.bf16.mxu0 0
        %2489 = vmatmul.mubr.bf16.gmra.mxu0 %v1413
        %v2490 = vpop.f32.mrf.mxu0
        %v2491 = vadd.f32 0.0, %v2490
        %v2492 = vpop.f32.mrf.mxu0
        %v2493 = vpop.f32.mrf.mxu0
        %v2494 = vadd.f32 0.0, %v2493
        %v2495 = vpop.f32.mrf.mxu0
        %2496 = vdwg.mxu0
        %v2497 = vadd.f32 %v2359, %v2467
        %v2498 = vadd.f32 %v2360, %v2470
        %v2499 = vadd.f32 %v2361, %v2475
        %v2500 = vadd.f32 %v2362, %v2478
        %v2501 = vadd.f32 %v2363, %v2483
        %v2502 = vadd.f32 %v2364, %v2486
        %v2503 = vadd.f32 %v2365, %v2491
        %v2504 = vadd.f32 %v2366, %v2494
        %s2505 = scalar_lea.vmem [#allocation4], 512
        %v2506 = vld [vmem:[%s2505] sm:$0xf]
        %v2507 = vld [vmem:[%s2505 + $0x4] sm:$0xf]
        %v2508 = vld [vmem:[%s2505 + $0x8] sm:$0xf]
        %v2509 = vld [vmem:[%s2505 + $0xc] sm:$0xf]
        %v2510 = vld [vmem:[%s2505 + $0x10] sm:$0xf]
        %v2511 = vld [vmem:[%s2505 + $0x14] sm:$0xf]
        %v2512 = vld [vmem:[%s2505 + $0x18] sm:$0xf]
        %v2513 = vld [vmem:[%s2505 + $0x1c] sm:$0xf]
        %v2514 = vld [vmem:[%s2505 + $0x20] sm:$0xf]
        %v2515 = vld [vmem:[%s2505 + $0x24] sm:$0xf]
        %v2516 = vld [vmem:[%s2505 + $0x28] sm:$0xf]
        %v2517 = vld [vmem:[%s2505 + $0x2c] sm:$0xf]
        %v2518 = vld [vmem:[%s2505 + $0x30] sm:$0xf]
        %v2519 = vld [vmem:[%s2505 + $0x34] sm:$0xf]
        %v2520 = vld [vmem:[%s2505 + $0x38] sm:$0xf]
        %v2521 = vld [vmem:[%s2505 + $0x3c] sm:$0xf]
        %v2538 = vunpack.c.l.b16 %v2506
        %v2539 = vunpack.c.l.b16 %v2507
        %v2540 = vunpack.c.l.b16 %v2508
        %v2541 = vunpack.c.l.b16 %v2509
        %v2542 = vunpack.c.l.b16 %v2510
        %v2543 = vunpack.c.l.b16 %v2511
        %v2544 = vunpack.c.l.b16 %v2512
        %v2545 = vunpack.c.l.b16 %v2513
        %v2546 = vunpack.c.l.b16 %v2514
        %v2547 = vunpack.c.l.b16 %v2515
        %v2548 = vunpack.c.l.b16 %v2516
        %v2549 = vunpack.c.l.b16 %v2517
        %v2550 = vunpack.c.l.b16 %v2518
        %v2551 = vunpack.c.l.b16 %v2519
        %v2552 = vunpack.c.l.b16 %v2520
        %v2553 = vunpack.c.l.b16 %v2521
        %v2554 = vpack.c.b16 %v2539, %v2538
        %v2555 = vpack.c.b16 %v2541, %v2540
        %v2556 = vpack.c.b16 %v2543, %v2542
        %v2557 = vpack.c.b16 %v2545, %v2544
        %v2558 = vpack.c.b16 %v2547, %v2546
        %v2559 = vpack.c.b16 %v2549, %v2548
        %v2560 = vpack.c.b16 %v2551, %v2550
        %v2561 = vpack.c.b16 %v2553, %v2552
        %2570 = vmatprep.subr.bf16.mxu0 0
        %2571 = vmatpush1.bf16.msra.mxu0 %v2561
        %2572 = vmatprep.subr.bf16.mxu0 0
        %2573 = vmatpush1.bf16.msra.mxu0 %v2560
        %2574 = vmatprep.subr.bf16.mxu0 0
        %2575 = vmatpush1.bf16.msra.mxu0 %v2559
        %2576 = vmatprep.subr.bf16.mxu0 0
        %2577 = vmatpush1.bf16.msra.mxu0 %v2558
        %2578 = vmatprep.subr.bf16.mxu0 0
        %2579 = vmatpush1.bf16.msra.mxu0 %v2557
        %2580 = vmatprep.subr.bf16.mxu0 0
        %2581 = vmatpush1.bf16.msra.mxu0 %v2556
        %2582 = vmatprep.subr.bf16.mxu0 0
        %2583 = vmatpush1.bf16.msra.mxu0 %v2555
        %2584 = vmatprep.subr.bf16.mxu0 0
        %2585 = vmatpush1.bf16.msra.mxu0 %v2554
        %2586 = vmatprep.subr.bf16.mxu0 0
        %2587 = vmatpush2.bf16.msra.mxu0 0
        %2588 = vmatprep.subr.bf16.mxu0 0
        %2589 = vmatpush2.bf16.msra.mxu0 0
        %2590 = vmatprep.subr.bf16.mxu0 0
        %2591 = vmatpush2.bf16.msra.mxu0 0
        %2592 = vmatprep.subr.bf16.mxu0 0
        %2593 = vmatpush2.bf16.msra.mxu0 0
        %2594 = vmatprep.subr.bf16.mxu0 0
        %2595 = vmatpush2.bf16.msra.mxu0 0
        %2596 = vmatprep.subr.bf16.mxu0 0
        %2597 = vmatpush2.bf16.msra.mxu0 0
        %2598 = vmatprep.subr.bf16.mxu0 0
        %2599 = vmatpush2.bf16.msra.mxu0 0
        %2600 = vmatprep.subr.bf16.mxu0 0
        %2601 = vmatpush2.bf16.msra.mxu0 0
        %2602 = vmatprep.mubr.bf16.mxu0 0
        %2603 = vmatmul.mubr.bf16.gmra.mxu0 %v1414
        %v2604 = vpop.f32.mrf.mxu0
        %v2605 = vadd.f32 0.0, %v2604
        %v2606 = vpop.f32.mrf.mxu0
        %v2607 = vpop.f32.mrf.mxu0
        %v2608 = vadd.f32 0.0, %v2607
        %v2609 = vpop.f32.mrf.mxu0
        %2610 = vmatprep.mubr.bf16.mxu0 0
        %2611 = vmatmul.mubr.bf16.gmra.mxu0 %v1415
        %v2612 = vpop.f32.mrf.mxu0
        %v2613 = vadd.f32 0.0, %v2612
        %v2614 = vpop.f32.mrf.mxu0
        %v2615 = vpop.f32.mrf.mxu0
        %v2616 = vadd.f32 0.0, %v2615
        %v2617 = vpop.f32.mrf.mxu0
        %2618 = vmatprep.mubr.bf16.mxu0 0
        %2619 = vmatmul.mubr.bf16.gmra.mxu0 %v1416
        %v2620 = vpop.f32.mrf.mxu0
        %v2621 = vadd.f32 0.0, %v2620
        %v2622 = vpop.f32.mrf.mxu0
        %v2623 = vpop.f32.mrf.mxu0
        %v2624 = vadd.f32 0.0, %v2623
        %v2625 = vpop.f32.mrf.mxu0
        %2626 = vmatprep.mubr.bf16.mxu0 0
        %2627 = vmatmul.mubr.bf16.gmra.mxu0 %v1417
        %v2628 = vpop.f32.mrf.mxu0
        %v2629 = vadd.f32 0.0, %v2628
        %v2630 = vpop.f32.mrf.mxu0
        %v2631 = vpop.f32.mrf.mxu0
        %v2632 = vadd.f32 0.0, %v2631
        %v2633 = vpop.f32.mrf.mxu0
        %2634 = vdwg.mxu0
        %v2635 = vadd.f32 %v2497, %v2605
        %v2636 = vadd.f32 %v2498, %v2608
        %v2637 = vadd.f32 %v2499, %v2613
        %v2638 = vadd.f32 %v2500, %v2616
        %v2639 = vadd.f32 %v2501, %v2621
        %v2640 = vadd.f32 %v2502, %v2624
        %v2641 = vadd.f32 %v2503, %v2629
        %v2642 = vadd.f32 %v2504, %v2632
        %v2643 = vld [vmem:[%s3] sm:$0x1]
        %v2645 = vlaneseq
        %v2646 = vshrl.u32 %v2645, 7
        %v2647 = vsub.s32 0, %v2646
        %v2648 = vrot.slane %v2643, %v2647
        %v2650 = vadd.f32 %v2635, %v2648
        %v2651 = vadd.f32 %v2636, %v2648
        %v2652 = vadd.f32 %v2637, %v2648
        %v2653 = vadd.f32 %v2638, %v2648
        %v2654 = vadd.f32 %v2639, %v2648
        %v2655 = vadd.f32 %v2640, %v2648
        %v2656 = vadd.f32 %v2641, %v2648
        %v2657 = vadd.f32 %v2642, %v2648
        %v2658 = vmax.f32 %v2650, 0.0
        %v2659 = vmax.f32 %v2651, 0.0
        %v2660 = vmax.f32 %v2652, 0.0
        %v2661 = vmax.f32 %v2653, 0.0
        %v2662 = vmax.f32 %v2654, 0.0
        %v2663 = vmax.f32 %v2655, 0.0
        %v2664 = vmax.f32 %v2656, 0.0
        %v2665 = vmax.f32 %v2657, 0.0
        %v2666 = vpack.c.bf16 %v2659, %v2658
        %v2667 = vpack.c.bf16 %v2661, %v2660
        %v2668 = vpack.c.bf16 %v2663, %v2662
        %v2669 = vpack.c.bf16 %v2665, %v2664
        %v2670 = vld [vmem:[%s4] sm:$0xf]
        %v2671 = vld [vmem:[%s4 + $0x4] sm:$0xf]
        %v2672 = vld [vmem:[%s4 + $0x8] sm:$0xf]
        %v2673 = vld [vmem:[%s4 + $0xc] sm:$0xf]
        %v2674 = vld [vmem:[%s4 + $0x10] sm:$0xf]
        %v2675 = vld [vmem:[%s4 + $0x14] sm:$0xf]
        %v2676 = vld [vmem:[%s4 + $0x18] sm:$0xf]
        %v2677 = vld [vmem:[%s4 + $0x1c] sm:$0xf]
        %v2678 = vld [vmem:[%s4 + $0x20] sm:$0xf]
        %v2679 = vld [vmem:[%s4 + $0x24] sm:$0xf]
        %v2680 = vld [vmem:[%s4 + $0x28] sm:$0xf]
        %v2681 = vld [vmem:[%s4 + $0x2c] sm:$0xf]
        %v2682 = vld [vmem:[%s4 + $0x30] sm:$0xf]
        %v2683 = vld [vmem:[%s4 + $0x34] sm:$0xf]
        %v2684 = vld [vmem:[%s4 + $0x38] sm:$0xf]
        %v2685 = vld [vmem:[%s4 + $0x3c] sm:$0xf]
        %v2686 = vld [vmem:[%s4 + $0x40] sm:$0xf]
        %v2687 = vld [vmem:[%s4 + $0x44] sm:$0xf]
        %v2706 = vunpack.c.l.b16 %v2670
        %v2707 = vunpack.c.l.b16 %v2671
        %v2708 = vunpack.c.l.b16 %v2672
        %v2709 = vunpack.c.l.b16 %v2673
        %v2710 = vunpack.c.l.b16 %v2674
        %v2711 = vunpack.c.l.b16 %v2675
        %v2712 = vunpack.c.l.b16 %v2676
        %v2713 = vunpack.c.l.b16 %v2677
        %v2714 = vunpack.c.l.b16 %v2678
        %v2715 = vunpack.c.l.b16 %v2679
        %v2716 = vunpack.c.l.b16 %v2680
        %v2717 = vunpack.c.l.b16 %v2681
        %v2718 = vunpack.c.l.b16 %v2682
        %v2719 = vunpack.c.l.b16 %v2683
        %v2720 = vunpack.c.l.b16 %v2684
        %v2721 = vunpack.c.l.b16 %v2685
        %v2722 = vunpack.c.l.b16 %v2686
        %v2723 = vunpack.c.l.b16 %v2687
        %v2724 = vpack.c.b16 %v2707, %v2706
        %v2725 = vpack.c.b16 %v2709, %v2708
        %v2726 = vpack.c.b16 %v2711, %v2710
        %v2727 = vpack.c.b16 %v2713, %v2712
        %v2728 = vpack.c.b16 %v2715, %v2714
        %v2729 = vpack.c.b16 %v2717, %v2716
        %v2730 = vpack.c.b16 %v2719, %v2718
        %v2731 = vpack.c.b16 %v2721, %v2720
        %v2732 = vpack.c.b16 %v2723, %v2722
        %vm2733 = vcmask 523264
        %v2735 = vsel %vm2733, %v2724, 0
        %v2738 = vsel %vm2733, %v2725, 0
        %v2741 = vsel %vm2733, %v2726, 0
        %v2744 = vsel %vm2733, %v2727, 0
        %v2747 = vsel %vm2733, %v2728, 0
        %v2750 = vsel %vm2733, %v2729, 0
        %v2753 = vsel %vm2733, %v2730, 0
        %v2756 = vsel %vm2733, %v2731, 0
        %v2759 = vsel %vm2733, %v2732, 0
        %2761 = vmatprep.subr.bf16.mxu0 0
        %2762 = vmatpush1.bf16.msra.mxu0 0
        %2763 = vmatprep.subr.bf16.mxu0 0
        %2764 = vmatpush1.bf16.msra.mxu0 0
        %2765 = vmatprep.subr.bf16.mxu0 0
        %2766 = vmatpush1.bf16.msra.mxu0 0
        %2767 = vmatprep.subr.bf16.mxu0 0
        %2768 = vmatpush1.bf16.msra.mxu0 0
        %2769 = vmatprep.subr.bf16.mxu0 0
        %2770 = vmatpush1.bf16.msra.mxu0 %v2669
        %2771 = vmatprep.subr.bf16.mxu0 0
        %2772 = vmatpush1.bf16.msra.mxu0 %v2668
        %2773 = vmatprep.subr.bf16.mxu0 0
        %2774 = vmatpush1.bf16.msra.mxu0 %v2667
        %2775 = vmatprep.subr.bf16.mxu0 0
        %2776 = vmatpush1.bf16.msra.mxu0 %v2666
        %2777 = vmatprep.subr.bf16.mxu0 0
        %2778 = vmatpush2.bf16.msra.mxu0 0
        %2779 = vmatprep.subr.bf16.mxu0 0
        %2780 = vmatpush2.bf16.msra.mxu0 0
        %2781 = vmatprep.subr.bf16.mxu0 0
        %2782 = vmatpush2.bf16.msra.mxu0 0
        %2783 = vmatprep.subr.bf16.mxu0 0
        %2784 = vmatpush2.bf16.msra.mxu0 0
        %2785 = vmatprep.subr.bf16.mxu0 0
        %2786 = vmatpush2.bf16.msra.mxu0 0
        %2787 = vmatprep.subr.bf16.mxu0 0
        %2788 = vmatpush2.bf16.msra.mxu0 0
        %2789 = vmatprep.subr.bf16.mxu0 0
        %2790 = vmatpush2.bf16.msra.mxu0 0
        %2791 = vmatprep.subr.bf16.mxu0 0
        %2792 = vmatpush2.bf16.msra.mxu0 0
        %2793 = vmatprep.mubr.bf16.mxu0 0
        %2794 = vmatmul.mubr.bf16.gmra.mxu0 %v2735
        %v2795 = vpop.f32.mrf.mxu0
        %v2796 = vadd.f32 0.0, %v2795
        %v2797 = vpop.f32.mrf.mxu0
        %v2798 = vpop.f32.mrf.mxu0
        %v2799 = vadd.f32 0.0, %v2798
        %v2800 = vpop.f32.mrf.mxu0
        %2801 = vmatprep.mubr.bf16.mxu0 0
        %2802 = vmatmul.mubr.bf16.gmra.mxu0 %v2738
        %v2803 = vpop.f32.mrf.mxu0
        %v2804 = vadd.f32 0.0, %v2803
        %v2805 = vpop.f32.mrf.mxu0
        %v2806 = vpop.f32.mrf.mxu0
        %v2807 = vadd.f32 0.0, %v2806
        %v2808 = vpop.f32.mrf.mxu0
        %2809 = vmatprep.mubr.bf16.mxu0 0
        %2810 = vmatmul.mubr.bf16.gmra.mxu0 %v2741
        %v2811 = vpop.f32.mrf.mxu0
        %v2812 = vadd.f32 0.0, %v2811
        %v2813 = vpop.f32.mrf.mxu0
        %v2814 = vpop.f32.mrf.mxu0
        %v2815 = vadd.f32 0.0, %v2814
        %v2816 = vpop.f32.mrf.mxu0
        %2817 = vmatprep.mubr.bf16.mxu0 0
        %2818 = vmatmul.mubr.bf16.gmra.mxu0 %v2744
        %v2819 = vpop.f32.mrf.mxu0
        %v2820 = vadd.f32 0.0, %v2819
        %v2821 = vpop.f32.mrf.mxu0
        %v2822 = vpop.f32.mrf.mxu0
        %v2823 = vadd.f32 0.0, %v2822
        %v2824 = vpop.f32.mrf.mxu0
        %2825 = vmatprep.mubr.bf16.mxu0 0
        %2826 = vmatmul.mubr.bf16.gmra.mxu0 %v2747
        %v2827 = vpop.f32.mrf.mxu0
        %v2828 = vadd.f32 0.0, %v2827
        %v2829 = vpop.f32.mrf.mxu0
        %v2830 = vpop.f32.mrf.mxu0
        %v2831 = vadd.f32 0.0, %v2830
        %v2832 = vpop.f32.mrf.mxu0
        %2833 = vmatprep.mubr.bf16.mxu0 0
        %2834 = vmatmul.mubr.bf16.gmra.mxu0 %v2750
        %v2835 = vpop.f32.mrf.mxu0
        %v2836 = vadd.f32 0.0, %v2835
        %v2837 = vpop.f32.mrf.mxu0
        %v2838 = vpop.f32.mrf.mxu0
        %v2839 = vadd.f32 0.0, %v2838
        %v2840 = vpop.f32.mrf.mxu0
        %2841 = vmatprep.mubr.bf16.mxu0 0
        %2842 = vmatmul.mubr.bf16.gmra.mxu0 %v2753
        %v2843 = vpop.f32.mrf.mxu0
        %v2844 = vadd.f32 0.0, %v2843
        %v2845 = vpop.f32.mrf.mxu0
        %v2846 = vpop.f32.mrf.mxu0
        %v2847 = vadd.f32 0.0, %v2846
        %v2848 = vpop.f32.mrf.mxu0
        %2849 = vmatprep.mubr.bf16.mxu0 0
        %2850 = vmatmul.mubr.bf16.gmra.mxu0 %v2756
        %v2851 = vpop.f32.mrf.mxu0
        %v2852 = vadd.f32 0.0, %v2851
        %v2853 = vpop.f32.mrf.mxu0
        %v2854 = vpop.f32.mrf.mxu0
        %v2855 = vadd.f32 0.0, %v2854
        %v2856 = vpop.f32.mrf.mxu0
        %2857 = vmatprep.mubr.bf16.mxu0 0
        %2858 = vmatmul.mubr.bf16.gmra.mxu0 %v2759
        %v2859 = vpop.f32.mrf.mxu0
        %v2860 = vadd.f32 0.0, %v2859
        %v2861 = vpop.f32.mrf.mxu0
        %v2862 = vpop.f32.mrf.mxu0
        %v2863 = vadd.f32 0.0, %v2862
        %v2864 = vpop.f32.mrf.mxu0
        %2865 = vdwg.mxu0
        %v2866 = vpack.c.bf16 %v2799, %v2796
        %v2867 = vpack.c.bf16 %v2807, %v2804
        %v2868 = vpack.c.bf16 %v2815, %v2812
        %v2869 = vpack.c.bf16 %v2823, %v2820
        %v2870 = vpack.c.bf16 %v2831, %v2828
        %v2871 = vpack.c.bf16 %v2839, %v2836
        %v2872 = vpack.c.bf16 %v2847, %v2844
        %v2873 = vpack.c.bf16 %v2855, %v2852
        %v2874 = vpack.c.bf16 %v2863, %v2860
        %v2875 = vld [vmem:[#allocation6] sm:$0xf]
        %v2876 = vld [vmem:[#allocation6 + $0x4] sm:$0xf]
        %v2877 = vld [vmem:[#allocation6 + $0x8] sm:$0xf]
        %v2878 = vld [vmem:[#allocation6 + $0xc] sm:$0xf]
        %v2879 = vld [vmem:[#allocation6 + $0x10] sm:$0xf]
        %v2880 = vld [vmem:[#allocation6 + $0x14] sm:$0xf]
        %v2881 = vld [vmem:[#allocation6 + $0x18] sm:$0xf]
        %v2882 = vld [vmem:[#allocation6 + $0x1c] sm:$0xf]
        %v2883 = vld [vmem:[#allocation6 + $0x20] sm:$0xf]
        %v2884 = vld [vmem:[#allocation6 + $0x24] sm:$0xf]
        %v2885 = vld [vmem:[#allocation6 + $0x28] sm:$0xf]
        %v2886 = vld [vmem:[#allocation6 + $0x2c] sm:$0xf]
        %v2887 = vld [vmem:[#allocation6 + $0x30] sm:$0xf]
        %v2888 = vld [vmem:[#allocation6 + $0x34] sm:$0xf]
        %v2889 = vld [vmem:[#allocation6 + $0x38] sm:$0xf]
        %v2890 = vld [vmem:[#allocation6 + $0x3c] sm:$0xf]
        %s2891 = scalar_lea.vmem [#allocation6], 64
        %v2892 = vld [vmem:[%s2891] sm:$0xf]
        %v2893 = vld [vmem:[%s2891 + $0x4] sm:$0xf]
        %v2894 = vld [vmem:[%s2891 + $0x8] sm:$0xf]
        %v2895 = vld [vmem:[%s2891 + $0xc] sm:$0xf]
        %v2896 = vld [vmem:[%s2891 + $0x10] sm:$0xf]
        %v2897 = vld [vmem:[%s2891 + $0x14] sm:$0xf]
        %v2898 = vld [vmem:[%s2891 + $0x18] sm:$0xf]
        %v2899 = vld [vmem:[%s2891 + $0x1c] sm:$0xf]
        %v2900 = vld [vmem:[%s2891 + $0x20] sm:$0xf]
        %v2901 = vld [vmem:[%s2891 + $0x24] sm:$0xf]
        %v2902 = vld [vmem:[%s2891 + $0x28] sm:$0xf]
        %v2903 = vld [vmem:[%s2891 + $0x2c] sm:$0xf]
        %v2904 = vld [vmem:[%s2891 + $0x30] sm:$0xf]
        %v2905 = vld [vmem:[%s2891 + $0x34] sm:$0xf]
        %v2906 = vld [vmem:[%s2891 + $0x38] sm:$0xf]
        %v2907 = vld [vmem:[%s2891 + $0x3c] sm:$0xf]
        %v2924 = vunpack.c.l.b16 %v2892
        %v2925 = vunpack.c.l.b16 %v2893
        %v2926 = vunpack.c.l.b16 %v2894
        %v2927 = vunpack.c.l.b16 %v2895
        %v2928 = vunpack.c.l.b16 %v2896
        %v2929 = vunpack.c.l.b16 %v2897
        %v2930 = vunpack.c.l.b16 %v2898
        %v2931 = vunpack.c.l.b16 %v2899
        %v2932 = vunpack.c.l.b16 %v2900
        %v2933 = vunpack.c.l.b16 %v2901
        %v2934 = vunpack.c.l.b16 %v2902
        %v2935 = vunpack.c.l.b16 %v2903
        %v2936 = vunpack.c.l.b16 %v2904
        %v2937 = vunpack.c.l.b16 %v2905
        %v2938 = vunpack.c.l.b16 %v2906
        %v2939 = vunpack.c.l.b16 %v2907
        %v2940 = vpack.c.b16 %v2925, %v2924
        %v2941 = vpack.c.b16 %v2927, %v2926
        %v2942 = vpack.c.b16 %v2929, %v2928
        %v2943 = vpack.c.b16 %v2931, %v2930
        %v2944 = vpack.c.b16 %v2933, %v2932
        %v2945 = vpack.c.b16 %v2935, %v2934
        %v2946 = vpack.c.b16 %v2937, %v2936
        %v2947 = vpack.c.b16 %v2939, %v2938
        %2956 = vmatprep.subr.bf16.mxu0 0
        %2957 = vmatpush1.bf16.msra.mxu0 %v2947
        %2958 = vmatprep.subr.bf16.mxu0 0
        %2959 = vmatpush1.bf16.msra.mxu0 %v2946
        %2960 = vmatprep.subr.bf16.mxu0 0
        %2961 = vmatpush1.bf16.msra.mxu0 %v2945
        %2962 = vmatprep.subr.bf16.mxu0 0
        %2963 = vmatpush1.bf16.msra.mxu0 %v2944
        %2964 = vmatprep.subr.bf16.mxu0 0
        %2965 = vmatpush1.bf16.msra.mxu0 %v2943
        %2966 = vmatprep.subr.bf16.mxu0 0
        %2967 = vmatpush1.bf16.msra.mxu0 %v2942
        %2968 = vmatprep.subr.bf16.mxu0 0
        %2969 = vmatpush1.bf16.msra.mxu0 %v2941
        %2970 = vmatprep.subr.bf16.mxu0 0
        %2971 = vmatpush1.bf16.msra.mxu0 %v2940
        %2972 = vmatprep.subr.bf16.mxu0 0
        %2973 = vmatpush2.bf16.msra.mxu0 0
        %2974 = vmatprep.subr.bf16.mxu0 0
        %2975 = vmatpush2.bf16.msra.mxu0 0
        %2976 = vmatprep.subr.bf16.mxu0 0
        %2977 = vmatpush2.bf16.msra.mxu0 0
        %2978 = vmatprep.subr.bf16.mxu0 0
        %2979 = vmatpush2.bf16.msra.mxu0 0
        %2980 = vmatprep.subr.bf16.mxu0 0
        %2981 = vmatpush2.bf16.msra.mxu0 0
        %2982 = vmatprep.subr.bf16.mxu0 0
        %2983 = vmatpush2.bf16.msra.mxu0 0
        %2984 = vmatprep.subr.bf16.mxu0 0
        %2985 = vmatpush2.bf16.msra.mxu0 0
        %2986 = vmatprep.subr.bf16.mxu0 0
        %2987 = vmatpush2.bf16.msra.mxu0 0
        %2988 = vmatprep.mubr.bf16.mxu0 0
        %2989 = vmatmul.mubr.bf16.gmra.mxu0 %v2867
        %v2990 = vpop.f32.mrf.mxu0
        %v2991 = vadd.f32 0.0, %v2990
        %v2992 = vpop.f32.mrf.mxu0
        %v2993 = vpop.f32.mrf.mxu0
        %v2994 = vadd.f32 0.0, %v2993
        %v2995 = vpop.f32.mrf.mxu0
        %2996 = vdwg.mxu0
        %v3013 = vunpack.c.l.b16 %v2875
        %v3014 = vunpack.c.l.b16 %v2876
        %v3015 = vunpack.c.l.b16 %v2877
        %v3016 = vunpack.c.l.b16 %v2878
        %v3017 = vunpack.c.l.b16 %v2879
        %v3018 = vunpack.c.l.b16 %v2880
        %v3019 = vunpack.c.l.b16 %v2881
        %v3020 = vunpack.c.l.b16 %v2882
        %v3021 = vunpack.c.l.b16 %v2883
        %v3022 = vunpack.c.l.b16 %v2884
        %v3023 = vunpack.c.l.b16 %v2885
        %v3024 = vunpack.c.l.b16 %v2886
        %v3025 = vunpack.c.l.b16 %v2887
        %v3026 = vunpack.c.l.b16 %v2888
        %v3027 = vunpack.c.l.b16 %v2889
        %v3028 = vunpack.c.l.b16 %v2890
        %v3029 = vpack.c.b16 %v3014, %v3013
        %v3030 = vpack.c.b16 %v3016, %v3015
        %v3031 = vpack.c.b16 %v3018, %v3017
        %v3032 = vpack.c.b16 %v3020, %v3019
        %v3033 = vpack.c.b16 %v3022, %v3021
        %v3034 = vpack.c.b16 %v3024, %v3023
        %v3035 = vpack.c.b16 %v3026, %v3025
        %v3036 = vpack.c.b16 %v3028, %v3027
        %3045 = vmatprep.subr.bf16.mxu0 0
        %3046 = vmatpush1.bf16.msra.mxu0 %v3036
        %3047 = vmatprep.subr.bf16.mxu0 0
        %3048 = vmatpush1.bf16.msra.mxu0 %v3035
        %3049 = vmatprep.subr.bf16.mxu0 0
        %3050 = vmatpush1.bf16.msra.mxu0 %v3034
        %3051 = vmatprep.subr.bf16.mxu0 0
        %3052 = vmatpush1.bf16.msra.mxu0 %v3033
        %3053 = vmatprep.subr.bf16.mxu0 0
        %3054 = vmatpush1.bf16.msra.mxu0 %v3032
        %3055 = vmatprep.subr.bf16.mxu0 0
        %3056 = vmatpush1.bf16.msra.mxu0 %v3031
        %3057 = vmatprep.subr.bf16.mxu0 0
        %3058 = vmatpush1.bf16.msra.mxu0 %v3030
        %3059 = vmatprep.subr.bf16.mxu0 0
        %3060 = vmatpush1.bf16.msra.mxu0 %v3029
        %3061 = vmatprep.subr.bf16.mxu0 0
        %3062 = vmatpush2.bf16.msra.mxu0 0
        %3063 = vmatprep.subr.bf16.mxu0 0
        %3064 = vmatpush2.bf16.msra.mxu0 0
        %3065 = vmatprep.subr.bf16.mxu0 0
        %3066 = vmatpush2.bf16.msra.mxu0 0
        %3067 = vmatprep.subr.bf16.mxu0 0
        %3068 = vmatpush2.bf16.msra.mxu0 0
        %3069 = vmatprep.subr.bf16.mxu0 0
        %3070 = vmatpush2.bf16.msra.mxu0 0
        %3071 = vmatprep.subr.bf16.mxu0 0
        %3072 = vmatpush2.bf16.msra.mxu0 0
        %3073 = vmatprep.subr.bf16.mxu0 0
        %3074 = vmatpush2.bf16.msra.mxu0 0
        %3075 = vmatprep.subr.bf16.mxu0 0
        %3076 = vmatpush2.bf16.msra.mxu0 0
        %3077 = vmatprep.mubr.bf16.mxu0 0
        %3078 = vmatmul.mubr.bf16.gmra.mxu0 %v2866
        %v3079 = vpop.f32.mrf.mxu0
        %v3080 = vadd.f32 %v2991, %v3079
        %v3081 = vpop.f32.mrf.mxu0
        %v3082 = vpop.f32.mrf.mxu0
        %v3083 = vadd.f32 %v2994, %v3082
        %v3084 = vpop.f32.mrf.mxu0
        %3085 = vdwg.mxu0
        %s3086 = scalar_lea.vmem [#allocation6], 128
        %v3087 = vld [vmem:[%s3086] sm:$0xf]
        %v3088 = vld [vmem:[%s3086 + $0x4] sm:$0xf]
        %v3089 = vld [vmem:[%s3086 + $0x8] sm:$0xf]
        %v3090 = vld [vmem:[%s3086 + $0xc] sm:$0xf]
        %v3091 = vld [vmem:[%s3086 + $0x10] sm:$0xf]
        %v3092 = vld [vmem:[%s3086 + $0x14] sm:$0xf]
        %v3093 = vld [vmem:[%s3086 + $0x18] sm:$0xf]
        %v3094 = vld [vmem:[%s3086 + $0x1c] sm:$0xf]
        %v3095 = vld [vmem:[%s3086 + $0x20] sm:$0xf]
        %v3096 = vld [vmem:[%s3086 + $0x24] sm:$0xf]
        %v3097 = vld [vmem:[%s3086 + $0x28] sm:$0xf]
        %v3098 = vld [vmem:[%s3086 + $0x2c] sm:$0xf]
        %v3099 = vld [vmem:[%s3086 + $0x30] sm:$0xf]
        %v3100 = vld [vmem:[%s3086 + $0x34] sm:$0xf]
        %v3101 = vld [vmem:[%s3086 + $0x38] sm:$0xf]
        %v3102 = vld [vmem:[%s3086 + $0x3c] sm:$0xf]
        %v3119 = vunpack.c.l.b16 %v3087
        %v3120 = vunpack.c.l.b16 %v3088
        %v3121 = vunpack.c.l.b16 %v3089
        %v3122 = vunpack.c.l.b16 %v3090
        %v3123 = vunpack.c.l.b16 %v3091
        %v3124 = vunpack.c.l.b16 %v3092
        %v3125 = vunpack.c.l.b16 %v3093
        %v3126 = vunpack.c.l.b16 %v3094
        %v3127 = vunpack.c.l.b16 %v3095
        %v3128 = vunpack.c.l.b16 %v3096
        %v3129 = vunpack.c.l.b16 %v3097
        %v3130 = vunpack.c.l.b16 %v3098
        %v3131 = vunpack.c.l.b16 %v3099
        %v3132 = vunpack.c.l.b16 %v3100
        %v3133 = vunpack.c.l.b16 %v3101
        %v3134 = vunpack.c.l.b16 %v3102
        %v3135 = vpack.c.b16 %v3120, %v3119
        %v3136 = vpack.c.b16 %v3122, %v3121
        %v3137 = vpack.c.b16 %v3124, %v3123
        %v3138 = vpack.c.b16 %v3126, %v3125
        %v3139 = vpack.c.b16 %v3128, %v3127
        %v3140 = vpack.c.b16 %v3130, %v3129
        %v3141 = vpack.c.b16 %v3132, %v3131
        %v3142 = vpack.c.b16 %v3134, %v3133
        %3151 = vmatprep.subr.bf16.mxu0 0
        %3152 = vmatpush1.bf16.msra.mxu0 %v3142
        %3153 = vmatprep.subr.bf16.mxu0 0
        %3154 = vmatpush1.bf16.msra.mxu0 %v3141
        %3155 = vmatprep.subr.bf16.mxu0 0
        %3156 = vmatpush1.bf16.msra.mxu0 %v3140
        %3157 = vmatprep.subr.bf16.mxu0 0
        %3158 = vmatpush1.bf16.msra.mxu0 %v3139
        %3159 = vmatprep.subr.bf16.mxu0 0
        %3160 = vmatpush1.bf16.msra.mxu0 %v3138
        %3161 = vmatprep.subr.bf16.mxu0 0
        %3162 = vmatpush1.bf16.msra.mxu0 %v3137
        %3163 = vmatprep.subr.bf16.mxu0 0
        %3164 = vmatpush1.bf16.msra.mxu0 %v3136
        %3165 = vmatprep.subr.bf16.mxu0 0
        %3166 = vmatpush1.bf16.msra.mxu0 %v3135
        %3167 = vmatprep.subr.bf16.mxu0 0
        %3168 = vmatpush2.bf16.msra.mxu0 0
        %3169 = vmatprep.subr.bf16.mxu0 0
        %3170 = vmatpush2.bf16.msra.mxu0 0
        %3171 = vmatprep.subr.bf16.mxu0 0
        %3172 = vmatpush2.bf16.msra.mxu0 0
        %3173 = vmatprep.subr.bf16.mxu0 0
        %3174 = vmatpush2.bf16.msra.mxu0 0
        %3175 = vmatprep.subr.bf16.mxu0 0
        %3176 = vmatpush2.bf16.msra.mxu0 0
        %3177 = vmatprep.subr.bf16.mxu0 0
        %3178 = vmatpush2.bf16.msra.mxu0 0
        %3179 = vmatprep.subr.bf16.mxu0 0
        %3180 = vmatpush2.bf16.msra.mxu0 0
        %3181 = vmatprep.subr.bf16.mxu0 0
        %3182 = vmatpush2.bf16.msra.mxu0 0
        %3183 = vmatprep.mubr.bf16.mxu0 0
        %3184 = vmatmul.mubr.bf16.gmra.mxu0 %v2868
        %v3185 = vpop.f32.mrf.mxu0
        %v3186 = vadd.f32 0.0, %v3185
        %v3187 = vpop.f32.mrf.mxu0
        %v3188 = vpop.f32.mrf.mxu0
        %v3189 = vadd.f32 0.0, %v3188
        %v3190 = vpop.f32.mrf.mxu0
        %3191 = vdwg.mxu0
        %v3192 = vadd.f32 %v3080, %v3186
        %v3193 = vadd.f32 %v3083, %v3189
        %s3194 = scalar_lea.vmem [#allocation6], 192
        %v3195 = vld [vmem:[%s3194] sm:$0xf]
        %v3196 = vld [vmem:[%s3194 + $0x4] sm:$0xf]
        %v3197 = vld [vmem:[%s3194 + $0x8] sm:$0xf]
        %v3198 = vld [vmem:[%s3194 + $0xc] sm:$0xf]
        %v3199 = vld [vmem:[%s3194 + $0x10] sm:$0xf]
        %v3200 = vld [vmem:[%s3194 + $0x14] sm:$0xf]
        %v3201 = vld [vmem:[%s3194 + $0x18] sm:$0xf]
        %v3202 = vld [vmem:[%s3194 + $0x1c] sm:$0xf]
        %v3203 = vld [vmem:[%s3194 + $0x20] sm:$0xf]
        %v3204 = vld [vmem:[%s3194 + $0x24] sm:$0xf]
        %v3205 = vld [vmem:[%s3194 + $0x28] sm:$0xf]
        %v3206 = vld [vmem:[%s3194 + $0x2c] sm:$0xf]
        %v3207 = vld [vmem:[%s3194 + $0x30] sm:$0xf]
        %v3208 = vld [vmem:[%s3194 + $0x34] sm:$0xf]
        %v3209 = vld [vmem:[%s3194 + $0x38] sm:$0xf]
        %v3210 = vld [vmem:[%s3194 + $0x3c] sm:$0xf]
        %v3227 = vunpack.c.l.b16 %v3195
        %v3228 = vunpack.c.l.b16 %v3196
        %v3229 = vunpack.c.l.b16 %v3197
        %v3230 = vunpack.c.l.b16 %v3198
        %v3231 = vunpack.c.l.b16 %v3199
        %v3232 = vunpack.c.l.b16 %v3200
        %v3233 = vunpack.c.l.b16 %v3201
        %v3234 = vunpack.c.l.b16 %v3202
        %v3235 = vunpack.c.l.b16 %v3203
        %v3236 = vunpack.c.l.b16 %v3204
        %v3237 = vunpack.c.l.b16 %v3205
        %v3238 = vunpack.c.l.b16 %v3206
        %v3239 = vunpack.c.l.b16 %v3207
        %v3240 = vunpack.c.l.b16 %v3208
        %v3241 = vunpack.c.l.b16 %v3209
        %v3242 = vunpack.c.l.b16 %v3210
        %v3243 = vpack.c.b16 %v3228, %v3227
        %v3244 = vpack.c.b16 %v3230, %v3229
        %v3245 = vpack.c.b16 %v3232, %v3231
        %v3246 = vpack.c.b16 %v3234, %v3233
        %v3247 = vpack.c.b16 %v3236, %v3235
        %v3248 = vpack.c.b16 %v3238, %v3237
        %v3249 = vpack.c.b16 %v3240, %v3239
        %v3250 = vpack.c.b16 %v3242, %v3241
        %3259 = vmatprep.subr.bf16.mxu0 0
        %3260 = vmatpush1.bf16.msra.mxu0 %v3250
        %3261 = vmatprep.subr.bf16.mxu0 0
        %3262 = vmatpush1.bf16.msra.mxu0 %v3249
        %3263 = vmatprep.subr.bf16.mxu0 0
        %3264 = vmatpush1.bf16.msra.mxu0 %v3248
        %3265 = vmatprep.subr.bf16.mxu0 0
        %3266 = vmatpush1.bf16.msra.mxu0 %v3247
        %3267 = vmatprep.subr.bf16.mxu0 0
        %3268 = vmatpush1.bf16.msra.mxu0 %v3246
        %3269 = vmatprep.subr.bf16.mxu0 0
        %3270 = vmatpush1.bf16.msra.mxu0 %v3245
        %3271 = vmatprep.subr.bf16.mxu0 0
        %3272 = vmatpush1.bf16.msra.mxu0 %v3244
        %3273 = vmatprep.subr.bf16.mxu0 0
        %3274 = vmatpush1.bf16.msra.mxu0 %v3243
        %3275 = vmatprep.subr.bf16.mxu0 0
        %3276 = vmatpush2.bf16.msra.mxu0 0
        %3277 = vmatprep.subr.bf16.mxu0 0
        %3278 = vmatpush2.bf16.msra.mxu0 0
        %3279 = vmatprep.subr.bf16.mxu0 0
        %3280 = vmatpush2.bf16.msra.mxu0 0
        %3281 = vmatprep.subr.bf16.mxu0 0
        %3282 = vmatpush2.bf16.msra.mxu0 0
        %3283 = vmatprep.subr.bf16.mxu0 0
        %3284 = vmatpush2.bf16.msra.mxu0 0
        %3285 = vmatprep.subr.bf16.mxu0 0
        %3286 = vmatpush2.bf16.msra.mxu0 0
        %3287 = vmatprep.subr.bf16.mxu0 0
        %3288 = vmatpush2.bf16.msra.mxu0 0
        %3289 = vmatprep.subr.bf16.mxu0 0
        %3290 = vmatpush2.bf16.msra.mxu0 0
        %3291 = vmatprep.mubr.bf16.mxu0 0
        %3292 = vmatmul.mubr.bf16.gmra.mxu0 %v2869
        %v3293 = vpop.f32.mrf.mxu0
        %v3294 = vadd.f32 0.0, %v3293
        %v3295 = vpop.f32.mrf.mxu0
        %v3296 = vpop.f32.mrf.mxu0
        %v3297 = vadd.f32 0.0, %v3296
        %v3298 = vpop.f32.mrf.mxu0
        %3299 = vdwg.mxu0
        %v3300 = vadd.f32 %v3192, %v3294
        %v3301 = vadd.f32 %v3193, %v3297
        %s3302 = scalar_lea.vmem [#allocation6], 256
        %v3303 = vld [vmem:[%s3302] sm:$0xf]
        %v3304 = vld [vmem:[%s3302 + $0x4] sm:$0xf]
        %v3305 = vld [vmem:[%s3302 + $0x8] sm:$0xf]
        %v3306 = vld [vmem:[%s3302 + $0xc] sm:$0xf]
        %v3307 = vld [vmem:[%s3302 + $0x10] sm:$0xf]
        %v3308 = vld [vmem:[%s3302 + $0x14] sm:$0xf]
        %v3309 = vld [vmem:[%s3302 + $0x18] sm:$0xf]
        %v3310 = vld [vmem:[%s3302 + $0x1c] sm:$0xf]
        %v3311 = vld [vmem:[%s3302 + $0x20] sm:$0xf]
        %v3312 = vld [vmem:[%s3302 + $0x24] sm:$0xf]
        %v3313 = vld [vmem:[%s3302 + $0x28] sm:$0xf]
        %v3314 = vld [vmem:[%s3302 + $0x2c] sm:$0xf]
        %v3315 = vld [vmem:[%s3302 + $0x30] sm:$0xf]
        %v3316 = vld [vmem:[%s3302 + $0x34] sm:$0xf]
        %v3317 = vld [vmem:[%s3302 + $0x38] sm:$0xf]
        %v3318 = vld [vmem:[%s3302 + $0x3c] sm:$0xf]
        %v3335 = vunpack.c.l.b16 %v3303
        %v3336 = vunpack.c.l.b16 %v3304
        %v3337 = vunpack.c.l.b16 %v3305
        %v3338 = vunpack.c.l.b16 %v3306
        %v3339 = vunpack.c.l.b16 %v3307
        %v3340 = vunpack.c.l.b16 %v3308
        %v3341 = vunpack.c.l.b16 %v3309
        %v3342 = vunpack.c.l.b16 %v3310
        %v3343 = vunpack.c.l.b16 %v3311
        %v3344 = vunpack.c.l.b16 %v3312
        %v3345 = vunpack.c.l.b16 %v3313
        %v3346 = vunpack.c.l.b16 %v3314
        %v3347 = vunpack.c.l.b16 %v3315
        %v3348 = vunpack.c.l.b16 %v3316
        %v3349 = vunpack.c.l.b16 %v3317
        %v3350 = vunpack.c.l.b16 %v3318
        %v3351 = vpack.c.b16 %v3336, %v3335
        %v3352 = vpack.c.b16 %v3338, %v3337
        %v3353 = vpack.c.b16 %v3340, %v3339
        %v3354 = vpack.c.b16 %v3342, %v3341
        %v3355 = vpack.c.b16 %v3344, %v3343
        %v3356 = vpack.c.b16 %v3346, %v3345
        %v3357 = vpack.c.b16 %v3348, %v3347
        %v3358 = vpack.c.b16 %v3350, %v3349
        %3367 = vmatprep.subr.bf16.mxu0 0
        %3368 = vmatpush1.bf16.msra.mxu0 %v3358
        %3369 = vmatprep.subr.bf16.mxu0 0
        %3370 = vmatpush1.bf16.msra.mxu0 %v3357
        %3371 = vmatprep.subr.bf16.mxu0 0
        %3372 = vmatpush1.bf16.msra.mxu0 %v3356
        %3373 = vmatprep.subr.bf16.mxu0 0
        %3374 = vmatpush1.bf16.msra.mxu0 %v3355
        %3375 = vmatprep.subr.bf16.mxu0 0
        %3376 = vmatpush1.bf16.msra.mxu0 %v3354
        %3377 = vmatprep.subr.bf16.mxu0 0
        %3378 = vmatpush1.bf16.msra.mxu0 %v3353
        %3379 = vmatprep.subr.bf16.mxu0 0
        %3380 = vmatpush1.bf16.msra.mxu0 %v3352
        %3381 = vmatprep.subr.bf16.mxu0 0
        %3382 = vmatpush1.bf16.msra.mxu0 %v3351
        %3383 = vmatprep.subr.bf16.mxu0 0
        %3384 = vmatpush2.bf16.msra.mxu0 0
        %3385 = vmatprep.subr.bf16.mxu0 0
        %3386 = vmatpush2.bf16.msra.mxu0 0
        %3387 = vmatprep.subr.bf16.mxu0 0
        %3388 = vmatpush2.bf16.msra.mxu0 0
        %3389 = vmatprep.subr.bf16.mxu0 0
        %3390 = vmatpush2.bf16.msra.mxu0 0
        %3391 = vmatprep.subr.bf16.mxu0 0
        %3392 = vmatpush2.bf16.msra.mxu0 0
        %3393 = vmatprep.subr.bf16.mxu0 0
        %3394 = vmatpush2.bf16.msra.mxu0 0
        %3395 = vmatprep.subr.bf16.mxu0 0
        %3396 = vmatpush2.bf16.msra.mxu0 0
        %3397 = vmatprep.subr.bf16.mxu0 0
        %3398 = vmatpush2.bf16.msra.mxu0 0
        %3399 = vmatprep.mubr.bf16.mxu0 0
        %3400 = vmatmul.mubr.bf16.gmra.mxu0 %v2870
        %v3401 = vpop.f32.mrf.mxu0
        %v3402 = vadd.f32 0.0, %v3401
        %v3403 = vpop.f32.mrf.mxu0
        %v3404 = vpop.f32.mrf.mxu0
        %v3405 = vadd.f32 0.0, %v3404
        %v3406 = vpop.f32.mrf.mxu0
        %3407 = vdwg.mxu0
        %v3408 = vadd.f32 %v3300, %v3402
        %v3409 = vadd.f32 %v3301, %v3405
        %s3410 = scalar_lea.vmem [#allocation6], 320
        %v3411 = vld [vmem:[%s3410] sm:$0xf]
        %v3412 = vld [vmem:[%s3410 + $0x4] sm:$0xf]
        %v3413 = vld [vmem:[%s3410 + $0x8] sm:$0xf]
        %v3414 = vld [vmem:[%s3410 + $0xc] sm:$0xf]
        %v3415 = vld [vmem:[%s3410 + $0x10] sm:$0xf]
        %v3416 = vld [vmem:[%s3410 + $0x14] sm:$0xf]
        %v3417 = vld [vmem:[%s3410 + $0x18] sm:$0xf]
        %v3418 = vld [vmem:[%s3410 + $0x1c] sm:$0xf]
        %v3419 = vld [vmem:[%s3410 + $0x20] sm:$0xf]
        %v3420 = vld [vmem:[%s3410 + $0x24] sm:$0xf]
        %v3421 = vld [vmem:[%s3410 + $0x28] sm:$0xf]
        %v3422 = vld [vmem:[%s3410 + $0x2c] sm:$0xf]
        %v3423 = vld [vmem:[%s3410 + $0x30] sm:$0xf]
        %v3424 = vld [vmem:[%s3410 + $0x34] sm:$0xf]
        %v3425 = vld [vmem:[%s3410 + $0x38] sm:$0xf]
        %v3426 = vld [vmem:[%s3410 + $0x3c] sm:$0xf]
        %v3443 = vunpack.c.l.b16 %v3411
        %v3444 = vunpack.c.l.b16 %v3412
        %v3445 = vunpack.c.l.b16 %v3413
        %v3446 = vunpack.c.l.b16 %v3414
        %v3447 = vunpack.c.l.b16 %v3415
        %v3448 = vunpack.c.l.b16 %v3416
        %v3449 = vunpack.c.l.b16 %v3417
        %v3450 = vunpack.c.l.b16 %v3418
        %v3451 = vunpack.c.l.b16 %v3419
        %v3452 = vunpack.c.l.b16 %v3420
        %v3453 = vunpack.c.l.b16 %v3421
        %v3454 = vunpack.c.l.b16 %v3422
        %v3455 = vunpack.c.l.b16 %v3423
        %v3456 = vunpack.c.l.b16 %v3424
        %v3457 = vunpack.c.l.b16 %v3425
        %v3458 = vunpack.c.l.b16 %v3426
        %v3459 = vpack.c.b16 %v3444, %v3443
        %v3460 = vpack.c.b16 %v3446, %v3445
        %v3461 = vpack.c.b16 %v3448, %v3447
        %v3462 = vpack.c.b16 %v3450, %v3449
        %v3463 = vpack.c.b16 %v3452, %v3451
        %v3464 = vpack.c.b16 %v3454, %v3453
        %v3465 = vpack.c.b16 %v3456, %v3455
        %v3466 = vpack.c.b16 %v3458, %v3457
        %3475 = vmatprep.subr.bf16.mxu0 0
        %3476 = vmatpush1.bf16.msra.mxu0 %v3466
        %3477 = vmatprep.subr.bf16.mxu0 0
        %3478 = vmatpush1.bf16.msra.mxu0 %v3465
        %3479 = vmatprep.subr.bf16.mxu0 0
        %3480 = vmatpush1.bf16.msra.mxu0 %v3464
        %3481 = vmatprep.subr.bf16.mxu0 0
        %3482 = vmatpush1.bf16.msra.mxu0 %v3463
        %3483 = vmatprep.subr.bf16.mxu0 0
        %3484 = vmatpush1.bf16.msra.mxu0 %v3462
        %3485 = vmatprep.subr.bf16.mxu0 0
        %3486 = vmatpush1.bf16.msra.mxu0 %v3461
        %3487 = vmatprep.subr.bf16.mxu0 0
        %3488 = vmatpush1.bf16.msra.mxu0 %v3460
        %3489 = vmatprep.subr.bf16.mxu0 0
        %3490 = vmatpush1.bf16.msra.mxu0 %v3459
        %3491 = vmatprep.subr.bf16.mxu0 0
        %3492 = vmatpush2.bf16.msra.mxu0 0
        %3493 = vmatprep.subr.bf16.mxu0 0
        %3494 = vmatpush2.bf16.msra.mxu0 0
        %3495 = vmatprep.subr.bf16.mxu0 0
        %3496 = vmatpush2.bf16.msra.mxu0 0
        %3497 = vmatprep.subr.bf16.mxu0 0
        %3498 = vmatpush2.bf16.msra.mxu0 0
        %3499 = vmatprep.subr.bf16.mxu0 0
        %3500 = vmatpush2.bf16.msra.mxu0 0
        %3501 = vmatprep.subr.bf16.mxu0 0
        %3502 = vmatpush2.bf16.msra.mxu0 0
        %3503 = vmatprep.subr.bf16.mxu0 0
        %3504 = vmatpush2.bf16.msra.mxu0 0
        %3505 = vmatprep.subr.bf16.mxu0 0
        %3506 = vmatpush2.bf16.msra.mxu0 0
        %3507 = vmatprep.mubr.bf16.mxu0 0
        %3508 = vmatmul.mubr.bf16.gmra.mxu0 %v2871
        %v3509 = vpop.f32.mrf.mxu0
        %v3510 = vadd.f32 0.0, %v3509
        %v3511 = vpop.f32.mrf.mxu0
        %v3512 = vpop.f32.mrf.mxu0
        %v3513 = vadd.f32 0.0, %v3512
        %v3514 = vpop.f32.mrf.mxu0
        %3515 = vdwg.mxu0
        %v3516 = vadd.f32 %v3408, %v3510
        %v3517 = vadd.f32 %v3409, %v3513
        %s3518 = scalar_lea.vmem [#allocation6], 384
        %v3519 = vld [vmem:[%s3518] sm:$0xf]
        %v3520 = vld [vmem:[%s3518 + $0x4] sm:$0xf]
        %v3521 = vld [vmem:[%s3518 + $0x8] sm:$0xf]
        %v3522 = vld [vmem:[%s3518 + $0xc] sm:$0xf]
        %v3523 = vld [vmem:[%s3518 + $0x10] sm:$0xf]
        %v3524 = vld [vmem:[%s3518 + $0x14] sm:$0xf]
        %v3525 = vld [vmem:[%s3518 + $0x18] sm:$0xf]
        %v3526 = vld [vmem:[%s3518 + $0x1c] sm:$0xf]
        %v3527 = vld [vmem:[%s3518 + $0x20] sm:$0xf]
        %v3528 = vld [vmem:[%s3518 + $0x24] sm:$0xf]
        %v3529 = vld [vmem:[%s3518 + $0x28] sm:$0xf]
        %v3530 = vld [vmem:[%s3518 + $0x2c] sm:$0xf]
        %v3531 = vld [vmem:[%s3518 + $0x30] sm:$0xf]
        %v3532 = vld [vmem:[%s3518 + $0x34] sm:$0xf]
        %v3533 = vld [vmem:[%s3518 + $0x38] sm:$0xf]
        %v3534 = vld [vmem:[%s3518 + $0x3c] sm:$0xf]
        %v3551 = vunpack.c.l.b16 %v3519
        %v3552 = vunpack.c.l.b16 %v3520
        %v3553 = vunpack.c.l.b16 %v3521
        %v3554 = vunpack.c.l.b16 %v3522
        %v3555 = vunpack.c.l.b16 %v3523
        %v3556 = vunpack.c.l.b16 %v3524
        %v3557 = vunpack.c.l.b16 %v3525
        %v3558 = vunpack.c.l.b16 %v3526
        %v3559 = vunpack.c.l.b16 %v3527
        %v3560 = vunpack.c.l.b16 %v3528
        %v3561 = vunpack.c.l.b16 %v3529
        %v3562 = vunpack.c.l.b16 %v3530
        %v3563 = vunpack.c.l.b16 %v3531
        %v3564 = vunpack.c.l.b16 %v3532
        %v3565 = vunpack.c.l.b16 %v3533
        %v3566 = vunpack.c.l.b16 %v3534
        %v3567 = vpack.c.b16 %v3552, %v3551
        %v3568 = vpack.c.b16 %v3554, %v3553
        %v3569 = vpack.c.b16 %v3556, %v3555
        %v3570 = vpack.c.b16 %v3558, %v3557
        %v3571 = vpack.c.b16 %v3560, %v3559
        %v3572 = vpack.c.b16 %v3562, %v3561
        %v3573 = vpack.c.b16 %v3564, %v3563
        %v3574 = vpack.c.b16 %v3566, %v3565
        %3583 = vmatprep.subr.bf16.mxu0 0
        %3584 = vmatpush1.bf16.msra.mxu0 %v3574
        %3585 = vmatprep.subr.bf16.mxu0 0
        %3586 = vmatpush1.bf16.msra.mxu0 %v3573
        %3587 = vmatprep.subr.bf16.mxu0 0
        %3588 = vmatpush1.bf16.msra.mxu0 %v3572
        %3589 = vmatprep.subr.bf16.mxu0 0
        %3590 = vmatpush1.bf16.msra.mxu0 %v3571
        %3591 = vmatprep.subr.bf16.mxu0 0
        %3592 = vmatpush1.bf16.msra.mxu0 %v3570
        %3593 = vmatprep.subr.bf16.mxu0 0
        %3594 = vmatpush1.bf16.msra.mxu0 %v3569
        %3595 = vmatprep.subr.bf16.mxu0 0
        %3596 = vmatpush1.bf16.msra.mxu0 %v3568
        %3597 = vmatprep.subr.bf16.mxu0 0
        %3598 = vmatpush1.bf16.msra.mxu0 %v3567
        %3599 = vmatprep.subr.bf16.mxu0 0
        %3600 = vmatpush2.bf16.msra.mxu0 0
        %3601 = vmatprep.subr.bf16.mxu0 0
        %3602 = vmatpush2.bf16.msra.mxu0 0
        %3603 = vmatprep.subr.bf16.mxu0 0
        %3604 = vmatpush2.bf16.msra.mxu0 0
        %3605 = vmatprep.subr.bf16.mxu0 0
        %3606 = vmatpush2.bf16.msra.mxu0 0
        %3607 = vmatprep.subr.bf16.mxu0 0
        %3608 = vmatpush2.bf16.msra.mxu0 0
        %3609 = vmatprep.subr.bf16.mxu0 0
        %3610 = vmatpush2.bf16.msra.mxu0 0
        %3611 = vmatprep.subr.bf16.mxu0 0
        %3612 = vmatpush2.bf16.msra.mxu0 0
        %3613 = vmatprep.subr.bf16.mxu0 0
        %3614 = vmatpush2.bf16.msra.mxu0 0
        %3615 = vmatprep.mubr.bf16.mxu0 0
        %3616 = vmatmul.mubr.bf16.gmra.mxu0 %v2872
        %v3617 = vpop.f32.mrf.mxu0
        %v3618 = vadd.f32 0.0, %v3617
        %v3619 = vpop.f32.mrf.mxu0
        %v3620 = vpop.f32.mrf.mxu0
        %v3621 = vadd.f32 0.0, %v3620
        %v3622 = vpop.f32.mrf.mxu0
        %3623 = vdwg.mxu0
        %v3624 = vadd.f32 %v3516, %v3618
        %v3625 = vadd.f32 %v3517, %v3621
        %s3626 = scalar_lea.vmem [#allocation6], 448
        %v3627 = vld [vmem:[%s3626] sm:$0xf]
        %v3628 = vld [vmem:[%s3626 + $0x4] sm:$0xf]
        %v3629 = vld [vmem:[%s3626 + $0x8] sm:$0xf]
        %v3630 = vld [vmem:[%s3626 + $0xc] sm:$0xf]
        %v3631 = vld [vmem:[%s3626 + $0x10] sm:$0xf]
        %v3632 = vld [vmem:[%s3626 + $0x14] sm:$0xf]
        %v3633 = vld [vmem:[%s3626 + $0x18] sm:$0xf]
        %v3634 = vld [vmem:[%s3626 + $0x1c] sm:$0xf]
        %v3635 = vld [vmem:[%s3626 + $0x20] sm:$0xf]
        %v3636 = vld [vmem:[%s3626 + $0x24] sm:$0xf]
        %v3637 = vld [vmem:[%s3626 + $0x28] sm:$0xf]
        %v3638 = vld [vmem:[%s3626 + $0x2c] sm:$0xf]
        %v3639 = vld [vmem:[%s3626 + $0x30] sm:$0xf]
        %v3640 = vld [vmem:[%s3626 + $0x34] sm:$0xf]
        %v3641 = vld [vmem:[%s3626 + $0x38] sm:$0xf]
        %v3642 = vld [vmem:[%s3626 + $0x3c] sm:$0xf]
        %v3659 = vunpack.c.l.b16 %v3627
        %v3660 = vunpack.c.l.b16 %v3628
        %v3661 = vunpack.c.l.b16 %v3629
        %v3662 = vunpack.c.l.b16 %v3630
        %v3663 = vunpack.c.l.b16 %v3631
        %v3664 = vunpack.c.l.b16 %v3632
        %v3665 = vunpack.c.l.b16 %v3633
        %v3666 = vunpack.c.l.b16 %v3634
        %v3667 = vunpack.c.l.b16 %v3635
        %v3668 = vunpack.c.l.b16 %v3636
        %v3669 = vunpack.c.l.b16 %v3637
        %v3670 = vunpack.c.l.b16 %v3638
        %v3671 = vunpack.c.l.b16 %v3639
        %v3672 = vunpack.c.l.b16 %v3640
        %v3673 = vunpack.c.l.b16 %v3641
        %v3674 = vunpack.c.l.b16 %v3642
        %v3675 = vpack.c.b16 %v3660, %v3659
        %v3676 = vpack.c.b16 %v3662, %v3661
        %v3677 = vpack.c.b16 %v3664, %v3663
        %v3678 = vpack.c.b16 %v3666, %v3665
        %v3679 = vpack.c.b16 %v3668, %v3667
        %v3680 = vpack.c.b16 %v3670, %v3669
        %v3681 = vpack.c.b16 %v3672, %v3671
        %v3682 = vpack.c.b16 %v3674, %v3673
        %3691 = vmatprep.subr.bf16.mxu0 0
        %3692 = vmatpush1.bf16.msra.mxu0 %v3682
        %3693 = vmatprep.subr.bf16.mxu0 0
        %3694 = vmatpush1.bf16.msra.mxu0 %v3681
        %3695 = vmatprep.subr.bf16.mxu0 0
        %3696 = vmatpush1.bf16.msra.mxu0 %v3680
        %3697 = vmatprep.subr.bf16.mxu0 0
        %3698 = vmatpush1.bf16.msra.mxu0 %v3679
        %3699 = vmatprep.subr.bf16.mxu0 0
        %3700 = vmatpush1.bf16.msra.mxu0 %v3678
        %3701 = vmatprep.subr.bf16.mxu0 0
        %3702 = vmatpush1.bf16.msra.mxu0 %v3677
        %3703 = vmatprep.subr.bf16.mxu0 0
        %3704 = vmatpush1.bf16.msra.mxu0 %v3676
        %3705 = vmatprep.subr.bf16.mxu0 0
        %3706 = vmatpush1.bf16.msra.mxu0 %v3675
        %3707 = vmatprep.subr.bf16.mxu0 0
        %3708 = vmatpush2.bf16.msra.mxu0 0
        %3709 = vmatprep.subr.bf16.mxu0 0
        %3710 = vmatpush2.bf16.msra.mxu0 0
        %3711 = vmatprep.subr.bf16.mxu0 0
        %3712 = vmatpush2.bf16.msra.mxu0 0
        %3713 = vmatprep.subr.bf16.mxu0 0
        %3714 = vmatpush2.bf16.msra.mxu0 0
        %3715 = vmatprep.subr.bf16.mxu0 0
        %3716 = vmatpush2.bf16.msra.mxu0 0
        %3717 = vmatprep.subr.bf16.mxu0 0
        %3718 = vmatpush2.bf16.msra.mxu0 0
        %3719 = vmatprep.subr.bf16.mxu0 0
        %3720 = vmatpush2.bf16.msra.mxu0 0
        %3721 = vmatprep.subr.bf16.mxu0 0
        %3722 = vmatpush2.bf16.msra.mxu0 0
        %3723 = vmatprep.mubr.bf16.mxu0 0
        %3724 = vmatmul.mubr.bf16.gmra.mxu0 %v2873
        %v3725 = vpop.f32.mrf.mxu0
        %v3726 = vadd.f32 0.0, %v3725
        %v3727 = vpop.f32.mrf.mxu0
        %v3728 = vpop.f32.mrf.mxu0
        %v3729 = vadd.f32 0.0, %v3728
        %v3730 = vpop.f32.mrf.mxu0
        %3731 = vdwg.mxu0
        %v3732 = vadd.f32 %v3624, %v3726
        %v3733 = vadd.f32 %v3625, %v3729
        %s3734 = scalar_lea.vmem [#allocation6], 512
        %v3735 = vld [vmem:[%s3734] sm:$0xf]
        %v3736 = vld [vmem:[%s3734 + $0x4] sm:$0xf]
        %v3737 = vld [vmem:[%s3734 + $0x8] sm:$0xf]
        %v3738 = vld [vmem:[%s3734 + $0xc] sm:$0xf]
        %v3739 = vld [vmem:[%s3734 + $0x10] sm:$0xf]
        %v3740 = vld [vmem:[%s3734 + $0x14] sm:$0xf]
        %v3741 = vld [vmem:[%s3734 + $0x18] sm:$0xf]
        %v3742 = vld [vmem:[%s3734 + $0x1c] sm:$0xf]
        %v3743 = vld [vmem:[%s3734 + $0x20] sm:$0xf]
        %v3744 = vld [vmem:[%s3734 + $0x24] sm:$0xf]
        %v3745 = vld [vmem:[%s3734 + $0x28] sm:$0xf]
        %v3746 = vld [vmem:[%s3734 + $0x2c] sm:$0xf]
        %v3747 = vld [vmem:[%s3734 + $0x30] sm:$0xf]
        %v3748 = vld [vmem:[%s3734 + $0x34] sm:$0xf]
        %v3749 = vld [vmem:[%s3734 + $0x38] sm:$0xf]
        %v3750 = vld [vmem:[%s3734 + $0x3c] sm:$0xf]
        %v3767 = vunpack.c.l.b16 %v3735
        %v3768 = vunpack.c.l.b16 %v3736
        %v3769 = vunpack.c.l.b16 %v3737
        %v3770 = vunpack.c.l.b16 %v3738
        %v3771 = vunpack.c.l.b16 %v3739
        %v3772 = vunpack.c.l.b16 %v3740
        %v3773 = vunpack.c.l.b16 %v3741
        %v3774 = vunpack.c.l.b16 %v3742
        %v3775 = vunpack.c.l.b16 %v3743
        %v3776 = vunpack.c.l.b16 %v3744
        %v3777 = vunpack.c.l.b16 %v3745
        %v3778 = vunpack.c.l.b16 %v3746
        %v3779 = vunpack.c.l.b16 %v3747
        %v3780 = vunpack.c.l.b16 %v3748
        %v3781 = vunpack.c.l.b16 %v3749
        %v3782 = vunpack.c.l.b16 %v3750
        %v3783 = vpack.c.b16 %v3768, %v3767
        %v3784 = vpack.c.b16 %v3770, %v3769
        %v3785 = vpack.c.b16 %v3772, %v3771
        %v3786 = vpack.c.b16 %v3774, %v3773
        %v3787 = vpack.c.b16 %v3776, %v3775
        %v3788 = vpack.c.b16 %v3778, %v3777
        %v3789 = vpack.c.b16 %v3780, %v3779
        %v3790 = vpack.c.b16 %v3782, %v3781
        %3799 = vmatprep.subr.bf16.mxu0 0
        %3800 = vmatpush1.bf16.msra.mxu0 %v3790
        %3801 = vmatprep.subr.bf16.mxu0 0
        %3802 = vmatpush1.bf16.msra.mxu0 %v3789
        %3803 = vmatprep.subr.bf16.mxu0 0
        %3804 = vmatpush1.bf16.msra.mxu0 %v3788
        %3805 = vmatprep.subr.bf16.mxu0 0
        %3806 = vmatpush1.bf16.msra.mxu0 %v3787
        %3807 = vmatprep.subr.bf16.mxu0 0
        %3808 = vmatpush1.bf16.msra.mxu0 %v3786
        %3809 = vmatprep.subr.bf16.mxu0 0
        %3810 = vmatpush1.bf16.msra.mxu0 %v3785
        %3811 = vmatprep.subr.bf16.mxu0 0
        %3812 = vmatpush1.bf16.msra.mxu0 %v3784
        %3813 = vmatprep.subr.bf16.mxu0 0
        %3814 = vmatpush1.bf16.msra.mxu0 %v3783
        %3815 = vmatprep.subr.bf16.mxu0 0
        %3816 = vmatpush2.bf16.msra.mxu0 0
        %3817 = vmatprep.subr.bf16.mxu0 0
        %3818 = vmatpush2.bf16.msra.mxu0 0
        %3819 = vmatprep.subr.bf16.mxu0 0
        %3820 = vmatpush2.bf16.msra.mxu0 0
        %3821 = vmatprep.subr.bf16.mxu0 0
        %3822 = vmatpush2.bf16.msra.mxu0 0
        %3823 = vmatprep.subr.bf16.mxu0 0
        %3824 = vmatpush2.bf16.msra.mxu0 0
        %3825 = vmatprep.subr.bf16.mxu0 0
        %3826 = vmatpush2.bf16.msra.mxu0 0
        %3827 = vmatprep.subr.bf16.mxu0 0
        %3828 = vmatpush2.bf16.msra.mxu0 0
        %3829 = vmatprep.subr.bf16.mxu0 0
        %3830 = vmatpush2.bf16.msra.mxu0 0
        %3831 = vmatprep.mubr.bf16.mxu0 0
        %3832 = vmatmul.mubr.bf16.gmra.mxu0 %v2874
        %v3833 = vpop.f32.mrf.mxu0
        %v3834 = vadd.f32 0.0, %v3833
        %v3835 = vpop.f32.mrf.mxu0
        %v3836 = vpop.f32.mrf.mxu0
        %v3837 = vadd.f32 0.0, %v3836
        %v3838 = vpop.f32.mrf.mxu0
        %3839 = vdwg.mxu0
        %v3840 = vadd.f32 %v3732, %v3834
        %v3841 = vadd.f32 %v3733, %v3837
        %v3842 = vld [vmem:[%s6] sm:$0x1]
        %v3844 = vlaneseq
        %v3845 = vshrl.u32 %v3844, 7
        %v3846 = vsub.s32 0, %v3845
        %v3847 = vrot.slane %v3842, %v3846
        %v3849 = vadd.f32 %v3840, %v3847
        %v3850 = vadd.f32 %v3841, %v3847
        %v3851 = vmax.f32 %v3849, 0.0
        %v3852 = vmax.f32 %v3850, 0.0
        %v3853 = vpack.c.bf16 %v3852, %v3851
        %v3854 = vld [vmem:[%s7] sm:$0xf]
        %v3855 = vld [vmem:[%s7 + $0x4] sm:$0xf]
        %v3856 = vld [vmem:[%s7 + $0x8] sm:$0xf]
        %v3857 = vld [vmem:[%s7 + $0xc] sm:$0xf]
        %v3858 = vld [vmem:[%s7 + $0x10] sm:$0xf]
        %v3859 = vld [vmem:[%s7 + $0x14] sm:$0xf]
        %v3860 = vld [vmem:[%s7 + $0x18] sm:$0xf]
        %v3861 = vld [vmem:[%s7 + $0x1c] sm:$0xf]
        %v3862 = vld [vmem:[%s7 + $0x20] sm:$0xf]
        %v3863 = vld [vmem:[%s7 + $0x24] sm:$0xf]
        %v3864 = vld [vmem:[%s7 + $0x28] sm:$0xf]
        %v3865 = vld [vmem:[%s7 + $0x2c] sm:$0xf]
        %v3866 = vld [vmem:[%s7 + $0x30] sm:$0xf]
        %v3867 = vld [vmem:[%s7 + $0x34] sm:$0xf]
        %v3868 = vld [vmem:[%s7 + $0x38] sm:$0xf]
        %v3869 = vld [vmem:[%s7 + $0x3c] sm:$0xf]
        %v3870 = vld [vmem:[%s7 + $0x40] sm:$0xf]
        %v3871 = vld [vmem:[%s7 + $0x44] sm:$0xf]
        %v3890 = vunpack.c.l.b16 %v3854
        %v3891 = vunpack.c.l.b16 %v3855
        %v3892 = vunpack.c.l.b16 %v3856
        %v3893 = vunpack.c.l.b16 %v3857
        %v3894 = vunpack.c.l.b16 %v3858
        %v3895 = vunpack.c.l.b16 %v3859
        %v3896 = vunpack.c.l.b16 %v3860
        %v3897 = vunpack.c.l.b16 %v3861
        %v3898 = vunpack.c.l.b16 %v3862
        %v3899 = vunpack.c.l.b16 %v3863
        %v3900 = vunpack.c.l.b16 %v3864
        %v3901 = vunpack.c.l.b16 %v3865
        %v3902 = vunpack.c.l.b16 %v3866
        %v3903 = vunpack.c.l.b16 %v3867
        %v3904 = vunpack.c.l.b16 %v3868
        %v3905 = vunpack.c.l.b16 %v3869
        %v3906 = vunpack.c.l.b16 %v3870
        %v3907 = vunpack.c.l.b16 %v3871
        %v3908 = vpack.c.b16 %v3891, %v3890
        %v3909 = vpack.c.b16 %v3893, %v3892
        %v3910 = vpack.c.b16 %v3895, %v3894
        %v3911 = vpack.c.b16 %v3897, %v3896
        %v3912 = vpack.c.b16 %v3899, %v3898
        %v3913 = vpack.c.b16 %v3901, %v3900
        %v3914 = vpack.c.b16 %v3903, %v3902
        %v3915 = vpack.c.b16 %v3905, %v3904
        %v3916 = vpack.c.b16 %v3907, %v3906
        %vm3917 = vcmask 130048
        %v3919 = vsel %vm3917, %v3908, 0
        %v3922 = vsel %vm3917, %v3909, 0
        %v3925 = vsel %vm3917, %v3910, 0
        %v3928 = vsel %vm3917, %v3911, 0
        %v3931 = vsel %vm3917, %v3912, 0
        %v3934 = vsel %vm3917, %v3913, 0
        %v3937 = vsel %vm3917, %v3914, 0
        %v3940 = vsel %vm3917, %v3915, 0
        %v3943 = vsel %vm3917, %v3916, 0
        %3945 = vmatprep.subr.bf16.mxu0 0
        %3946 = vmatpush1.bf16.msra.mxu0 0
        %3947 = vmatprep.subr.bf16.mxu0 0
        %3948 = vmatpush1.bf16.msra.mxu0 0
        %3949 = vmatprep.subr.bf16.mxu0 0
        %3950 = vmatpush1.bf16.msra.mxu0 0
        %3951 = vmatprep.subr.bf16.mxu0 0
        %3952 = vmatpush1.bf16.msra.mxu0 0
        %3953 = vmatprep.subr.bf16.mxu0 0
        %3954 = vmatpush1.bf16.msra.mxu0 0
        %3955 = vmatprep.subr.bf16.mxu0 0
        %3956 = vmatpush1.bf16.msra.mxu0 0
        %3957 = vmatprep.subr.bf16.mxu0 0
        %3958 = vmatpush1.bf16.msra.mxu0 0
        %3959 = vmatprep.subr.bf16.mxu0 0
        %3960 = vmatpush1.bf16.msra.mxu0 %v3853
        %3961 = vmatprep.subr.bf16.mxu0 0
        %3962 = vmatpush2.bf16.msra.mxu0 0
        %3963 = vmatprep.subr.bf16.mxu0 0
        %3964 = vmatpush2.bf16.msra.mxu0 0
        %3965 = vmatprep.subr.bf16.mxu0 0
        %3966 = vmatpush2.bf16.msra.mxu0 0
        %3967 = vmatprep.subr.bf16.mxu0 0
        %3968 = vmatpush2.bf16.msra.mxu0 0
        %3969 = vmatprep.subr.bf16.mxu0 0
        %3970 = vmatpush2.bf16.msra.mxu0 0
        %3971 = vmatprep.subr.bf16.mxu0 0
        %3972 = vmatpush2.bf16.msra.mxu0 0
        %3973 = vmatprep.subr.bf16.mxu0 0
        %3974 = vmatpush2.bf16.msra.mxu0 0
        %3975 = vmatprep.subr.bf16.mxu0 0
        %3976 = vmatpush2.bf16.msra.mxu0 0
        %3977 = vmatprep.mubr.bf16.mxu0 0
        %3978 = vmatmul.mubr.bf16.gmra.mxu0 %v3919
        %v3979 = vpop.f32.mrf.mxu0
        %v3980 = vadd.f32 0.0, %v3979
        %v3981 = vpop.f32.mrf.mxu0
        %v3982 = vpop.f32.mrf.mxu0
        %v3983 = vadd.f32 0.0, %v3982
        %v3984 = vpop.f32.mrf.mxu0
        %3985 = vmatprep.mubr.bf16.mxu0 0
        %3986 = vmatmul.mubr.bf16.gmra.mxu0 %v3922
        %v3987 = vpop.f32.mrf.mxu0
        %v3988 = vadd.f32 0.0, %v3987
        %v3989 = vpop.f32.mrf.mxu0
        %v3990 = vpop.f32.mrf.mxu0
        %v3991 = vadd.f32 0.0, %v3990
        %v3992 = vpop.f32.mrf.mxu0
        %3993 = vmatprep.mubr.bf16.mxu0 0
        %3994 = vmatmul.mubr.bf16.gmra.mxu0 %v3925
        %v3995 = vpop.f32.mrf.mxu0
        %v3996 = vadd.f32 0.0, %v3995
        %v3997 = vpop.f32.mrf.mxu0
        %v3998 = vpop.f32.mrf.mxu0
        %v3999 = vadd.f32 0.0, %v3998
        %v4000 = vpop.f32.mrf.mxu0
        %4001 = vmatprep.mubr.bf16.mxu0 0
        %4002 = vmatmul.mubr.bf16.gmra.mxu0 %v3928
        %v4003 = vpop.f32.mrf.mxu0
        %v4004 = vadd.f32 0.0, %v4003
        %v4005 = vpop.f32.mrf.mxu0
        %v4006 = vpop.f32.mrf.mxu0
        %v4007 = vadd.f32 0.0, %v4006
        %v4008 = vpop.f32.mrf.mxu0
        %4009 = vmatprep.mubr.bf16.mxu0 0
        %4010 = vmatmul.mubr.bf16.gmra.mxu0 %v3931
        %v4011 = vpop.f32.mrf.mxu0
        %v4012 = vadd.f32 0.0, %v4011
        %v4013 = vpop.f32.mrf.mxu0
        %v4014 = vpop.f32.mrf.mxu0
        %v4015 = vadd.f32 0.0, %v4014
        %v4016 = vpop.f32.mrf.mxu0
        %4017 = vmatprep.mubr.bf16.mxu0 0
        %4018 = vmatmul.mubr.bf16.gmra.mxu0 %v3934
        %v4019 = vpop.f32.mrf.mxu0
        %v4020 = vadd.f32 0.0, %v4019
        %v4021 = vpop.f32.mrf.mxu0
        %v4022 = vpop.f32.mrf.mxu0
        %v4023 = vadd.f32 0.0, %v4022
        %v4024 = vpop.f32.mrf.mxu0
        %4025 = vmatprep.mubr.bf16.mxu0 0
        %4026 = vmatmul.mubr.bf16.gmra.mxu0 %v3937
        %v4027 = vpop.f32.mrf.mxu0
        %v4028 = vadd.f32 0.0, %v4027
        %v4029 = vpop.f32.mrf.mxu0
        %v4030 = vpop.f32.mrf.mxu0
        %v4031 = vadd.f32 0.0, %v4030
        %v4032 = vpop.f32.mrf.mxu0
        %4033 = vmatprep.mubr.bf16.mxu0 0
        %4034 = vmatmul.mubr.bf16.gmra.mxu0 %v3940
        %v4035 = vpop.f32.mrf.mxu0
        %v4036 = vadd.f32 0.0, %v4035
        %v4037 = vpop.f32.mrf.mxu0
        %v4038 = vpop.f32.mrf.mxu0
        %v4039 = vadd.f32 0.0, %v4038
        %v4040 = vpop.f32.mrf.mxu0
        %4041 = vmatprep.mubr.bf16.mxu0 0
        %4042 = vmatmul.mubr.bf16.gmra.mxu0 %v3943
        %v4043 = vpop.f32.mrf.mxu0
        %v4044 = vadd.f32 0.0, %v4043
        %v4045 = vpop.f32.mrf.mxu0
        %v4046 = vpop.f32.mrf.mxu0
        %v4047 = vadd.f32 0.0, %v4046
        %v4048 = vpop.f32.mrf.mxu0
        %4049 = vdwg.mxu0
        %v4050 = vpack.c.bf16 %v3983, %v3980
        %v4051 = vpack.c.bf16 %v3991, %v3988
        %v4052 = vpack.c.bf16 %v3999, %v3996
        %v4053 = vpack.c.bf16 %v4007, %v4004
        %v4054 = vpack.c.bf16 %v4015, %v4012
        %v4055 = vpack.c.bf16 %v4023, %v4020
        %v4056 = vpack.c.bf16 %v4031, %v4028
        %v4057 = vpack.c.bf16 %v4039, %v4036
        %v4058 = vpack.c.bf16 %v4047, %v4044
        %v4059 = vld [vmem:[#allocation7] sm:$0xf]
        %v4060 = vld [vmem:[#allocation7 + $0x4] sm:$0xf]
        %v4061 = vld [vmem:[#allocation7 + $0x8] sm:$0xf]
        %v4062 = vld [vmem:[#allocation7 + $0xc] sm:$0xf]
        %v4063 = vld [vmem:[#allocation7 + $0x10] sm:$0xf]
        %v4064 = vld [vmem:[#allocation7 + $0x14] sm:$0xf]
        %v4065 = vld [vmem:[#allocation7 + $0x18] sm:$0xf]
        %v4066 = vld [vmem:[#allocation7 + $0x1c] sm:$0xf]
        %v4067 = vld [vmem:[#allocation7 + $0x20] sm:$0xf]
        %v4068 = vld [vmem:[#allocation7 + $0x24] sm:$0xf]
        %v4069 = vld [vmem:[#allocation7 + $0x28] sm:$0xf]
        %v4070 = vld [vmem:[#allocation7 + $0x2c] sm:$0xf]
        %v4071 = vld [vmem:[#allocation7 + $0x30] sm:$0xf]
        %v4072 = vld [vmem:[#allocation7 + $0x34] sm:$0xf]
        %v4073 = vld [vmem:[#allocation7 + $0x38] sm:$0xf]
        %v4074 = vld [vmem:[#allocation7 + $0x3c] sm:$0xf]
        %s4075 = scalar_lea.vmem [#allocation7], 64
        %v4076 = vld [vmem:[%s4075] sm:$0xf]
        %v4077 = vld [vmem:[%s4075 + $0x4] sm:$0xf]
        %v4078 = vld [vmem:[%s4075 + $0x8] sm:$0xf]
        %v4079 = vld [vmem:[%s4075 + $0xc] sm:$0xf]
        %v4080 = vld [vmem:[%s4075 + $0x10] sm:$0xf]
        %v4081 = vld [vmem:[%s4075 + $0x14] sm:$0xf]
        %v4082 = vld [vmem:[%s4075 + $0x18] sm:$0xf]
        %v4083 = vld [vmem:[%s4075 + $0x1c] sm:$0xf]
        %v4084 = vld [vmem:[%s4075 + $0x20] sm:$0xf]
        %v4085 = vld [vmem:[%s4075 + $0x24] sm:$0xf]
        %v4086 = vld [vmem:[%s4075 + $0x28] sm:$0xf]
        %v4087 = vld [vmem:[%s4075 + $0x2c] sm:$0xf]
        %v4088 = vld [vmem:[%s4075 + $0x30] sm:$0xf]
        %v4089 = vld [vmem:[%s4075 + $0x34] sm:$0xf]
        %v4090 = vld [vmem:[%s4075 + $0x38] sm:$0xf]
        %v4091 = vld [vmem:[%s4075 + $0x3c] sm:$0xf]
        %v4108 = vunpack.c.l.b16 %v4076
        %v4109 = vunpack.c.l.b16 %v4077
        %v4110 = vunpack.c.l.b16 %v4078
        %v4111 = vunpack.c.l.b16 %v4079
        %v4112 = vunpack.c.l.b16 %v4080
        %v4113 = vunpack.c.l.b16 %v4081
        %v4114 = vunpack.c.l.b16 %v4082
        %v4115 = vunpack.c.l.b16 %v4083
        %v4116 = vunpack.c.l.b16 %v4084
        %v4117 = vunpack.c.l.b16 %v4085
        %v4118 = vunpack.c.l.b16 %v4086
        %v4119 = vunpack.c.l.b16 %v4087
        %v4120 = vunpack.c.l.b16 %v4088
        %v4121 = vunpack.c.l.b16 %v4089
        %v4122 = vunpack.c.l.b16 %v4090
        %v4123 = vunpack.c.l.b16 %v4091
        %v4124 = vpack.c.b16 %v4109, %v4108
        %v4125 = vpack.c.b16 %v4111, %v4110
        %v4126 = vpack.c.b16 %v4113, %v4112
        %v4127 = vpack.c.b16 %v4115, %v4114
        %v4128 = vpack.c.b16 %v4117, %v4116
        %v4129 = vpack.c.b16 %v4119, %v4118
        %v4130 = vpack.c.b16 %v4121, %v4120
        %v4131 = vpack.c.b16 %v4123, %v4122
        %4140 = vmatprep.subr.bf16.mxu0 0
        %4141 = vmatpush1.bf16.msra.mxu0 %v4131
        %4142 = vmatprep.subr.bf16.mxu0 0
        %4143 = vmatpush1.bf16.msra.mxu0 %v4130
        %4144 = vmatprep.subr.bf16.mxu0 0
        %4145 = vmatpush1.bf16.msra.mxu0 %v4129
        %4146 = vmatprep.subr.bf16.mxu0 0
        %4147 = vmatpush1.bf16.msra.mxu0 %v4128
        %4148 = vmatprep.subr.bf16.mxu0 0
        %4149 = vmatpush1.bf16.msra.mxu0 %v4127
        %4150 = vmatprep.subr.bf16.mxu0 0
        %4151 = vmatpush1.bf16.msra.mxu0 %v4126
        %4152 = vmatprep.subr.bf16.mxu0 0
        %4153 = vmatpush1.bf16.msra.mxu0 %v4125
        %4154 = vmatprep.subr.bf16.mxu0 0
        %4155 = vmatpush1.bf16.msra.mxu0 %v4124
        %4156 = vmatprep.subr.bf16.mxu0 0
        %4157 = vmatpush2.bf16.msra.mxu0 0
        %4158 = vmatprep.subr.bf16.mxu0 0
        %4159 = vmatpush2.bf16.msra.mxu0 0
        %4160 = vmatprep.subr.bf16.mxu0 0
        %4161 = vmatpush2.bf16.msra.mxu0 0
        %4162 = vmatprep.subr.bf16.mxu0 0
        %4163 = vmatpush2.bf16.msra.mxu0 0
        %4164 = vmatprep.subr.bf16.mxu0 0
        %4165 = vmatpush2.bf16.msra.mxu0 0
        %4166 = vmatprep.subr.bf16.mxu0 0
        %4167 = vmatpush2.bf16.msra.mxu0 0
        %4168 = vmatprep.subr.bf16.mxu0 0
        %4169 = vmatpush2.bf16.msra.mxu0 0
        %4170 = vmatprep.subr.bf16.mxu0 0
        %4171 = vmatpush2.bf16.msra.mxu0 0
        %4172 = vmatprep.mubr.bf16.mxu0 0
        %4173 = vmatmul.mubr.bf16.gmra.mxu0 %v4051
        %v4174 = vpop.f32.mrf.mxu0
        %v4175 = vadd.f32 0.0, %v4174
        %v4176 = vpop.f32.mrf.mxu0
        %v4177 = vpop.f32.mrf.mxu0
        %v4178 = vadd.f32 0.0, %v4177
        %v4179 = vpop.f32.mrf.mxu0
        %4180 = vdwg.mxu0
        %v4197 = vunpack.c.l.b16 %v4059
        %v4198 = vunpack.c.l.b16 %v4060
        %v4199 = vunpack.c.l.b16 %v4061
        %v4200 = vunpack.c.l.b16 %v4062
        %v4201 = vunpack.c.l.b16 %v4063
        %v4202 = vunpack.c.l.b16 %v4064
        %v4203 = vunpack.c.l.b16 %v4065
        %v4204 = vunpack.c.l.b16 %v4066
        %v4205 = vunpack.c.l.b16 %v4067
        %v4206 = vunpack.c.l.b16 %v4068
        %v4207 = vunpack.c.l.b16 %v4069
        %v4208 = vunpack.c.l.b16 %v4070
        %v4209 = vunpack.c.l.b16 %v4071
        %v4210 = vunpack.c.l.b16 %v4072
        %v4211 = vunpack.c.l.b16 %v4073
        %v4212 = vunpack.c.l.b16 %v4074
        %v4213 = vpack.c.b16 %v4198, %v4197
        %v4214 = vpack.c.b16 %v4200, %v4199
        %v4215 = vpack.c.b16 %v4202, %v4201
        %v4216 = vpack.c.b16 %v4204, %v4203
        %v4217 = vpack.c.b16 %v4206, %v4205
        %v4218 = vpack.c.b16 %v4208, %v4207
        %v4219 = vpack.c.b16 %v4210, %v4209
        %v4220 = vpack.c.b16 %v4212, %v4211
        %4229 = vmatprep.subr.bf16.mxu0 0
        %4230 = vmatpush1.bf16.msra.mxu0 %v4220
        %4231 = vmatprep.subr.bf16.mxu0 0
        %4232 = vmatpush1.bf16.msra.mxu0 %v4219
        %4233 = vmatprep.subr.bf16.mxu0 0
        %4234 = vmatpush1.bf16.msra.mxu0 %v4218
        %4235 = vmatprep.subr.bf16.mxu0 0
        %4236 = vmatpush1.bf16.msra.mxu0 %v4217
        %4237 = vmatprep.subr.bf16.mxu0 0
        %4238 = vmatpush1.bf16.msra.mxu0 %v4216
        %4239 = vmatprep.subr.bf16.mxu0 0
        %4240 = vmatpush1.bf16.msra.mxu0 %v4215
        %4241 = vmatprep.subr.bf16.mxu0 0
        %4242 = vmatpush1.bf16.msra.mxu0 %v4214
        %4243 = vmatprep.subr.bf16.mxu0 0
        %4244 = vmatpush1.bf16.msra.mxu0 %v4213
        %4245 = vmatprep.subr.bf16.mxu0 0
        %4246 = vmatpush2.bf16.msra.mxu0 0
        %4247 = vmatprep.subr.bf16.mxu0 0
        %4248 = vmatpush2.bf16.msra.mxu0 0
        %4249 = vmatprep.subr.bf16.mxu0 0
        %4250 = vmatpush2.bf16.msra.mxu0 0
        %4251 = vmatprep.subr.bf16.mxu0 0
        %4252 = vmatpush2.bf16.msra.mxu0 0
        %4253 = vmatprep.subr.bf16.mxu0 0
        %4254 = vmatpush2.bf16.msra.mxu0 0
        %4255 = vmatprep.subr.bf16.mxu0 0
        %4256 = vmatpush2.bf16.msra.mxu0 0
        %4257 = vmatprep.subr.bf16.mxu0 0
        %4258 = vmatpush2.bf16.msra.mxu0 0
        %4259 = vmatprep.subr.bf16.mxu0 0
        %4260 = vmatpush2.bf16.msra.mxu0 0
        %4261 = vmatprep.mubr.bf16.mxu0 0
        %4262 = vmatmul.mubr.bf16.gmra.mxu0 %v4050
        %v4263 = vpop.f32.mrf.mxu0
        %v4264 = vadd.f32 %v4175, %v4263
        %v4265 = vpop.f32.mrf.mxu0
        %v4266 = vpop.f32.mrf.mxu0
        %v4267 = vadd.f32 %v4178, %v4266
        %v4268 = vpop.f32.mrf.mxu0
        %4269 = vdwg.mxu0
        %s4270 = scalar_lea.vmem [#allocation7], 128
        %v4271 = vld [vmem:[%s4270] sm:$0xf]
        %v4272 = vld [vmem:[%s4270 + $0x4] sm:$0xf]
        %v4273 = vld [vmem:[%s4270 + $0x8] sm:$0xf]
        %v4274 = vld [vmem:[%s4270 + $0xc] sm:$0xf]
        %v4275 = vld [vmem:[%s4270 + $0x10] sm:$0xf]
        %v4276 = vld [vmem:[%s4270 + $0x14] sm:$0xf]
        %v4277 = vld [vmem:[%s4270 + $0x18] sm:$0xf]
        %v4278 = vld [vmem:[%s4270 + $0x1c] sm:$0xf]
        %v4279 = vld [vmem:[%s4270 + $0x20] sm:$0xf]
        %v4280 = vld [vmem:[%s4270 + $0x24] sm:$0xf]
        %v4281 = vld [vmem:[%s4270 + $0x28] sm:$0xf]
        %v4282 = vld [vmem:[%s4270 + $0x2c] sm:$0xf]
        %v4283 = vld [vmem:[%s4270 + $0x30] sm:$0xf]
        %v4284 = vld [vmem:[%s4270 + $0x34] sm:$0xf]
        %v4285 = vld [vmem:[%s4270 + $0x38] sm:$0xf]
        %v4286 = vld [vmem:[%s4270 + $0x3c] sm:$0xf]
        %v4303 = vunpack.c.l.b16 %v4271
        %v4304 = vunpack.c.l.b16 %v4272
        %v4305 = vunpack.c.l.b16 %v4273
        %v4306 = vunpack.c.l.b16 %v4274
        %v4307 = vunpack.c.l.b16 %v4275
        %v4308 = vunpack.c.l.b16 %v4276
        %v4309 = vunpack.c.l.b16 %v4277
        %v4310 = vunpack.c.l.b16 %v4278
        %v4311 = vunpack.c.l.b16 %v4279
        %v4312 = vunpack.c.l.b16 %v4280
        %v4313 = vunpack.c.l.b16 %v4281
        %v4314 = vunpack.c.l.b16 %v4282
        %v4315 = vunpack.c.l.b16 %v4283
        %v4316 = vunpack.c.l.b16 %v4284
        %v4317 = vunpack.c.l.b16 %v4285
        %v4318 = vunpack.c.l.b16 %v4286
        %v4319 = vpack.c.b16 %v4304, %v4303
        %v4320 = vpack.c.b16 %v4306, %v4305
        %v4321 = vpack.c.b16 %v4308, %v4307
        %v4322 = vpack.c.b16 %v4310, %v4309
        %v4323 = vpack.c.b16 %v4312, %v4311
        %v4324 = vpack.c.b16 %v4314, %v4313
        %v4325 = vpack.c.b16 %v4316, %v4315
        %v4326 = vpack.c.b16 %v4318, %v4317
        %4335 = vmatprep.subr.bf16.mxu0 0
        %4336 = vmatpush1.bf16.msra.mxu0 %v4326
        %4337 = vmatprep.subr.bf16.mxu0 0
        %4338 = vmatpush1.bf16.msra.mxu0 %v4325
        %4339 = vmatprep.subr.bf16.mxu0 0
        %4340 = vmatpush1.bf16.msra.mxu0 %v4324
        %4341 = vmatprep.subr.bf16.mxu0 0
        %4342 = vmatpush1.bf16.msra.mxu0 %v4323
        %4343 = vmatprep.subr.bf16.mxu0 0
        %4344 = vmatpush1.bf16.msra.mxu0 %v4322
        %4345 = vmatprep.subr.bf16.mxu0 0
        %4346 = vmatpush1.bf16.msra.mxu0 %v4321
        %4347 = vmatprep.subr.bf16.mxu0 0
        %4348 = vmatpush1.bf16.msra.mxu0 %v4320
        %4349 = vmatprep.subr.bf16.mxu0 0
        %4350 = vmatpush1.bf16.msra.mxu0 %v4319
        %4351 = vmatprep.subr.bf16.mxu0 0
        %4352 = vmatpush2.bf16.msra.mxu0 0
        %4353 = vmatprep.subr.bf16.mxu0 0
        %4354 = vmatpush2.bf16.msra.mxu0 0
        %4355 = vmatprep.subr.bf16.mxu0 0
        %4356 = vmatpush2.bf16.msra.mxu0 0
        %4357 = vmatprep.subr.bf16.mxu0 0
        %4358 = vmatpush2.bf16.msra.mxu0 0
        %4359 = vmatprep.subr.bf16.mxu0 0
        %4360 = vmatpush2.bf16.msra.mxu0 0
        %4361 = vmatprep.subr.bf16.mxu0 0
        %4362 = vmatpush2.bf16.msra.mxu0 0
        %4363 = vmatprep.subr.bf16.mxu0 0
        %4364 = vmatpush2.bf16.msra.mxu0 0
        %4365 = vmatprep.subr.bf16.mxu0 0
        %4366 = vmatpush2.bf16.msra.mxu0 0
        %4367 = vmatprep.mubr.bf16.mxu0 0
        %4368 = vmatmul.mubr.bf16.gmra.mxu0 %v4052
        %v4369 = vpop.f32.mrf.mxu0
        %v4370 = vadd.f32 0.0, %v4369
        %v4371 = vpop.f32.mrf.mxu0
        %v4372 = vpop.f32.mrf.mxu0
        %v4373 = vadd.f32 0.0, %v4372
        %v4374 = vpop.f32.mrf.mxu0
        %4375 = vdwg.mxu0
        %v4376 = vadd.f32 %v4264, %v4370
        %v4377 = vadd.f32 %v4267, %v4373
        %s4378 = scalar_lea.vmem [#allocation7], 192
        %v4379 = vld [vmem:[%s4378] sm:$0xf]
        %v4380 = vld [vmem:[%s4378 + $0x4] sm:$0xf]
        %v4381 = vld [vmem:[%s4378 + $0x8] sm:$0xf]
        %v4382 = vld [vmem:[%s4378 + $0xc] sm:$0xf]
        %v4383 = vld [vmem:[%s4378 + $0x10] sm:$0xf]
        %v4384 = vld [vmem:[%s4378 + $0x14] sm:$0xf]
        %v4385 = vld [vmem:[%s4378 + $0x18] sm:$0xf]
        %v4386 = vld [vmem:[%s4378 + $0x1c] sm:$0xf]
        %v4387 = vld [vmem:[%s4378 + $0x20] sm:$0xf]
        %v4388 = vld [vmem:[%s4378 + $0x24] sm:$0xf]
        %v4389 = vld [vmem:[%s4378 + $0x28] sm:$0xf]
        %v4390 = vld [vmem:[%s4378 + $0x2c] sm:$0xf]
        %v4391 = vld [vmem:[%s4378 + $0x30] sm:$0xf]
        %v4392 = vld [vmem:[%s4378 + $0x34] sm:$0xf]
        %v4393 = vld [vmem:[%s4378 + $0x38] sm:$0xf]
        %v4394 = vld [vmem:[%s4378 + $0x3c] sm:$0xf]
        %v4411 = vunpack.c.l.b16 %v4379
        %v4412 = vunpack.c.l.b16 %v4380
        %v4413 = vunpack.c.l.b16 %v4381
        %v4414 = vunpack.c.l.b16 %v4382
        %v4415 = vunpack.c.l.b16 %v4383
        %v4416 = vunpack.c.l.b16 %v4384
        %v4417 = vunpack.c.l.b16 %v4385
        %v4418 = vunpack.c.l.b16 %v4386
        %v4419 = vunpack.c.l.b16 %v4387
        %v4420 = vunpack.c.l.b16 %v4388
        %v4421 = vunpack.c.l.b16 %v4389
        %v4422 = vunpack.c.l.b16 %v4390
        %v4423 = vunpack.c.l.b16 %v4391
        %v4424 = vunpack.c.l.b16 %v4392
        %v4425 = vunpack.c.l.b16 %v4393
        %v4426 = vunpack.c.l.b16 %v4394
        %v4427 = vpack.c.b16 %v4412, %v4411
        %v4428 = vpack.c.b16 %v4414, %v4413
        %v4429 = vpack.c.b16 %v4416, %v4415
        %v4430 = vpack.c.b16 %v4418, %v4417
        %v4431 = vpack.c.b16 %v4420, %v4419
        %v4432 = vpack.c.b16 %v4422, %v4421
        %v4433 = vpack.c.b16 %v4424, %v4423
        %v4434 = vpack.c.b16 %v4426, %v4425
        %4443 = vmatprep.subr.bf16.mxu0 0
        %4444 = vmatpush1.bf16.msra.mxu0 %v4434
        %4445 = vmatprep.subr.bf16.mxu0 0
        %4446 = vmatpush1.bf16.msra.mxu0 %v4433
        %4447 = vmatprep.subr.bf16.mxu0 0
        %4448 = vmatpush1.bf16.msra.mxu0 %v4432
        %4449 = vmatprep.subr.bf16.mxu0 0
        %4450 = vmatpush1.bf16.msra.mxu0 %v4431
        %4451 = vmatprep.subr.bf16.mxu0 0
        %4452 = vmatpush1.bf16.msra.mxu0 %v4430
        %4453 = vmatprep.subr.bf16.mxu0 0
        %4454 = vmatpush1.bf16.msra.mxu0 %v4429
        %4455 = vmatprep.subr.bf16.mxu0 0
        %4456 = vmatpush1.bf16.msra.mxu0 %v4428
        %4457 = vmatprep.subr.bf16.mxu0 0
        %4458 = vmatpush1.bf16.msra.mxu0 %v4427
        %4459 = vmatprep.subr.bf16.mxu0 0
        %4460 = vmatpush2.bf16.msra.mxu0 0
        %4461 = vmatprep.subr.bf16.mxu0 0
        %4462 = vmatpush2.bf16.msra.mxu0 0
        %4463 = vmatprep.subr.bf16.mxu0 0
        %4464 = vmatpush2.bf16.msra.mxu0 0
        %4465 = vmatprep.subr.bf16.mxu0 0
        %4466 = vmatpush2.bf16.msra.mxu0 0
        %4467 = vmatprep.subr.bf16.mxu0 0
        %4468 = vmatpush2.bf16.msra.mxu0 0
        %4469 = vmatprep.subr.bf16.mxu0 0
        %4470 = vmatpush2.bf16.msra.mxu0 0
        %4471 = vmatprep.subr.bf16.mxu0 0
        %4472 = vmatpush2.bf16.msra.mxu0 0
        %4473 = vmatprep.subr.bf16.mxu0 0
        %4474 = vmatpush2.bf16.msra.mxu0 0
        %4475 = vmatprep.mubr.bf16.mxu0 0
        %4476 = vmatmul.mubr.bf16.gmra.mxu0 %v4053
        %v4477 = vpop.f32.mrf.mxu0
        %v4478 = vadd.f32 0.0, %v4477
        %v4479 = vpop.f32.mrf.mxu0
        %v4480 = vpop.f32.mrf.mxu0
        %v4481 = vadd.f32 0.0, %v4480
        %v4482 = vpop.f32.mrf.mxu0
        %4483 = vdwg.mxu0
        %v4484 = vadd.f32 %v4376, %v4478
        %v4485 = vadd.f32 %v4377, %v4481
        %s4486 = scalar_lea.vmem [#allocation7], 256
        %v4487 = vld [vmem:[%s4486] sm:$0xf]
        %v4488 = vld [vmem:[%s4486 + $0x4] sm:$0xf]
        %v4489 = vld [vmem:[%s4486 + $0x8] sm:$0xf]
        %v4490 = vld [vmem:[%s4486 + $0xc] sm:$0xf]
        %v4491 = vld [vmem:[%s4486 + $0x10] sm:$0xf]
        %v4492 = vld [vmem:[%s4486 + $0x14] sm:$0xf]
        %v4493 = vld [vmem:[%s4486 + $0x18] sm:$0xf]
        %v4494 = vld [vmem:[%s4486 + $0x1c] sm:$0xf]
        %v4495 = vld [vmem:[%s4486 + $0x20] sm:$0xf]
        %v4496 = vld [vmem:[%s4486 + $0x24] sm:$0xf]
        %v4497 = vld [vmem:[%s4486 + $0x28] sm:$0xf]
        %v4498 = vld [vmem:[%s4486 + $0x2c] sm:$0xf]
        %v4499 = vld [vmem:[%s4486 + $0x30] sm:$0xf]
        %v4500 = vld [vmem:[%s4486 + $0x34] sm:$0xf]
        %v4501 = vld [vmem:[%s4486 + $0x38] sm:$0xf]
        %v4502 = vld [vmem:[%s4486 + $0x3c] sm:$0xf]
        %v4519 = vunpack.c.l.b16 %v4487
        %v4520 = vunpack.c.l.b16 %v4488
        %v4521 = vunpack.c.l.b16 %v4489
        %v4522 = vunpack.c.l.b16 %v4490
        %v4523 = vunpack.c.l.b16 %v4491
        %v4524 = vunpack.c.l.b16 %v4492
        %v4525 = vunpack.c.l.b16 %v4493
        %v4526 = vunpack.c.l.b16 %v4494
        %v4527 = vunpack.c.l.b16 %v4495
        %v4528 = vunpack.c.l.b16 %v4496
        %v4529 = vunpack.c.l.b16 %v4497
        %v4530 = vunpack.c.l.b16 %v4498
        %v4531 = vunpack.c.l.b16 %v4499
        %v4532 = vunpack.c.l.b16 %v4500
        %v4533 = vunpack.c.l.b16 %v4501
        %v4534 = vunpack.c.l.b16 %v4502
        %v4535 = vpack.c.b16 %v4520, %v4519
        %v4536 = vpack.c.b16 %v4522, %v4521
        %v4537 = vpack.c.b16 %v4524, %v4523
        %v4538 = vpack.c.b16 %v4526, %v4525
        %v4539 = vpack.c.b16 %v4528, %v4527
        %v4540 = vpack.c.b16 %v4530, %v4529
        %v4541 = vpack.c.b16 %v4532, %v4531
        %v4542 = vpack.c.b16 %v4534, %v4533
        %4551 = vmatprep.subr.bf16.mxu0 0
        %4552 = vmatpush1.bf16.msra.mxu0 %v4542
        %4553 = vmatprep.subr.bf16.mxu0 0
        %4554 = vmatpush1.bf16.msra.mxu0 %v4541
        %4555 = vmatprep.subr.bf16.mxu0 0
        %4556 = vmatpush1.bf16.msra.mxu0 %v4540
        %4557 = vmatprep.subr.bf16.mxu0 0
        %4558 = vmatpush1.bf16.msra.mxu0 %v4539
        %4559 = vmatprep.subr.bf16.mxu0 0
        %4560 = vmatpush1.bf16.msra.mxu0 %v4538
        %4561 = vmatprep.subr.bf16.mxu0 0
        %4562 = vmatpush1.bf16.msra.mxu0 %v4537
        %4563 = vmatprep.subr.bf16.mxu0 0
        %4564 = vmatpush1.bf16.msra.mxu0 %v4536
        %4565 = vmatprep.subr.bf16.mxu0 0
        %4566 = vmatpush1.bf16.msra.mxu0 %v4535
        %4567 = vmatprep.subr.bf16.mxu0 0
        %4568 = vmatpush2.bf16.msra.mxu0 0
        %4569 = vmatprep.subr.bf16.mxu0 0
        %4570 = vmatpush2.bf16.msra.mxu0 0
        %4571 = vmatprep.subr.bf16.mxu0 0
        %4572 = vmatpush2.bf16.msra.mxu0 0
        %4573 = vmatprep.subr.bf16.mxu0 0
        %4574 = vmatpush2.bf16.msra.mxu0 0
        %4575 = vmatprep.subr.bf16.mxu0 0
        %4576 = vmatpush2.bf16.msra.mxu0 0
        %4577 = vmatprep.subr.bf16.mxu0 0
        %4578 = vmatpush2.bf16.msra.mxu0 0
        %4579 = vmatprep.subr.bf16.mxu0 0
        %4580 = vmatpush2.bf16.msra.mxu0 0
        %4581 = vmatprep.subr.bf16.mxu0 0
        %4582 = vmatpush2.bf16.msra.mxu0 0
        %4583 = vmatprep.mubr.bf16.mxu0 0
        %4584 = vmatmul.mubr.bf16.gmra.mxu0 %v4054
        %v4585 = vpop.f32.mrf.mxu0
        %v4586 = vadd.f32 0.0, %v4585
        %v4587 = vpop.f32.mrf.mxu0
        %v4588 = vpop.f32.mrf.mxu0
        %v4589 = vadd.f32 0.0, %v4588
        %v4590 = vpop.f32.mrf.mxu0
        %4591 = vdwg.mxu0
        %v4592 = vadd.f32 %v4484, %v4586
        %v4593 = vadd.f32 %v4485, %v4589
        %s4594 = scalar_lea.vmem [#allocation7], 320
        %v4595 = vld [vmem:[%s4594] sm:$0xf]
        %v4596 = vld [vmem:[%s4594 + $0x4] sm:$0xf]
        %v4597 = vld [vmem:[%s4594 + $0x8] sm:$0xf]
        %v4598 = vld [vmem:[%s4594 + $0xc] sm:$0xf]
        %v4599 = vld [vmem:[%s4594 + $0x10] sm:$0xf]
        %v4600 = vld [vmem:[%s4594 + $0x14] sm:$0xf]
        %v4601 = vld [vmem:[%s4594 + $0x18] sm:$0xf]
        %v4602 = vld [vmem:[%s4594 + $0x1c] sm:$0xf]
        %v4603 = vld [vmem:[%s4594 + $0x20] sm:$0xf]
        %v4604 = vld [vmem:[%s4594 + $0x24] sm:$0xf]
        %v4605 = vld [vmem:[%s4594 + $0x28] sm:$0xf]
        %v4606 = vld [vmem:[%s4594 + $0x2c] sm:$0xf]
        %v4607 = vld [vmem:[%s4594 + $0x30] sm:$0xf]
        %v4608 = vld [vmem:[%s4594 + $0x34] sm:$0xf]
        %v4609 = vld [vmem:[%s4594 + $0x38] sm:$0xf]
        %v4610 = vld [vmem:[%s4594 + $0x3c] sm:$0xf]
        %v4627 = vunpack.c.l.b16 %v4595
        %v4628 = vunpack.c.l.b16 %v4596
        %v4629 = vunpack.c.l.b16 %v4597
        %v4630 = vunpack.c.l.b16 %v4598
        %v4631 = vunpack.c.l.b16 %v4599
        %v4632 = vunpack.c.l.b16 %v4600
        %v4633 = vunpack.c.l.b16 %v4601
        %v4634 = vunpack.c.l.b16 %v4602
        %v4635 = vunpack.c.l.b16 %v4603
        %v4636 = vunpack.c.l.b16 %v4604
        %v4637 = vunpack.c.l.b16 %v4605
        %v4638 = vunpack.c.l.b16 %v4606
        %v4639 = vunpack.c.l.b16 %v4607
        %v4640 = vunpack.c.l.b16 %v4608
        %v4641 = vunpack.c.l.b16 %v4609
        %v4642 = vunpack.c.l.b16 %v4610
        %v4643 = vpack.c.b16 %v4628, %v4627
        %v4644 = vpack.c.b16 %v4630, %v4629
        %v4645 = vpack.c.b16 %v4632, %v4631
        %v4646 = vpack.c.b16 %v4634, %v4633
        %v4647 = vpack.c.b16 %v4636, %v4635
        %v4648 = vpack.c.b16 %v4638, %v4637
        %v4649 = vpack.c.b16 %v4640, %v4639
        %v4650 = vpack.c.b16 %v4642, %v4641
        %4659 = vmatprep.subr.bf16.mxu0 0
        %4660 = vmatpush1.bf16.msra.mxu0 %v4650
        %4661 = vmatprep.subr.bf16.mxu0 0
        %4662 = vmatpush1.bf16.msra.mxu0 %v4649
        %4663 = vmatprep.subr.bf16.mxu0 0
        %4664 = vmatpush1.bf16.msra.mxu0 %v4648
        %4665 = vmatprep.subr.bf16.mxu0 0
        %4666 = vmatpush1.bf16.msra.mxu0 %v4647
        %4667 = vmatprep.subr.bf16.mxu0 0
        %4668 = vmatpush1.bf16.msra.mxu0 %v4646
        %4669 = vmatprep.subr.bf16.mxu0 0
        %4670 = vmatpush1.bf16.msra.mxu0 %v4645
        %4671 = vmatprep.subr.bf16.mxu0 0
        %4672 = vmatpush1.bf16.msra.mxu0 %v4644
        %4673 = vmatprep.subr.bf16.mxu0 0
        %4674 = vmatpush1.bf16.msra.mxu0 %v4643
        %4675 = vmatprep.subr.bf16.mxu0 0
        %4676 = vmatpush2.bf16.msra.mxu0 0
        %4677 = vmatprep.subr.bf16.mxu0 0
        %4678 = vmatpush2.bf16.msra.mxu0 0
        %4679 = vmatprep.subr.bf16.mxu0 0
        %4680 = vmatpush2.bf16.msra.mxu0 0
        %4681 = vmatprep.subr.bf16.mxu0 0
        %4682 = vmatpush2.bf16.msra.mxu0 0
        %4683 = vmatprep.subr.bf16.mxu0 0
        %4684 = vmatpush2.bf16.msra.mxu0 0
        %4685 = vmatprep.subr.bf16.mxu0 0
        %4686 = vmatpush2.bf16.msra.mxu0 0
        %4687 = vmatprep.subr.bf16.mxu0 0
        %4688 = vmatpush2.bf16.msra.mxu0 0
        %4689 = vmatprep.subr.bf16.mxu0 0
        %4690 = vmatpush2.bf16.msra.mxu0 0
        %4691 = vmatprep.mubr.bf16.mxu0 0
        %4692 = vmatmul.mubr.bf16.gmra.mxu0 %v4055
        %v4693 = vpop.f32.mrf.mxu0
        %v4694 = vadd.f32 0.0, %v4693
        %v4695 = vpop.f32.mrf.mxu0
        %v4696 = vpop.f32.mrf.mxu0
        %v4697 = vadd.f32 0.0, %v4696
        %v4698 = vpop.f32.mrf.mxu0
        %4699 = vdwg.mxu0
        %v4700 = vadd.f32 %v4592, %v4694
        %v4701 = vadd.f32 %v4593, %v4697
        %s4702 = scalar_lea.vmem [#allocation7], 384
        %v4703 = vld [vmem:[%s4702] sm:$0xf]
        %v4704 = vld [vmem:[%s4702 + $0x4] sm:$0xf]
        %v4705 = vld [vmem:[%s4702 + $0x8] sm:$0xf]
        %v4706 = vld [vmem:[%s4702 + $0xc] sm:$0xf]
        %v4707 = vld [vmem:[%s4702 + $0x10] sm:$0xf]
        %v4708 = vld [vmem:[%s4702 + $0x14] sm:$0xf]
        %v4709 = vld [vmem:[%s4702 + $0x18] sm:$0xf]
        %v4710 = vld [vmem:[%s4702 + $0x1c] sm:$0xf]
        %v4711 = vld [vmem:[%s4702 + $0x20] sm:$0xf]
        %v4712 = vld [vmem:[%s4702 + $0x24] sm:$0xf]
        %v4713 = vld [vmem:[%s4702 + $0x28] sm:$0xf]
        %v4714 = vld [vmem:[%s4702 + $0x2c] sm:$0xf]
        %v4715 = vld [vmem:[%s4702 + $0x30] sm:$0xf]
        %v4716 = vld [vmem:[%s4702 + $0x34] sm:$0xf]
        %v4717 = vld [vmem:[%s4702 + $0x38] sm:$0xf]
        %v4718 = vld [vmem:[%s4702 + $0x3c] sm:$0xf]
        %v4735 = vunpack.c.l.b16 %v4703
        %v4736 = vunpack.c.l.b16 %v4704
        %v4737 = vunpack.c.l.b16 %v4705
        %v4738 = vunpack.c.l.b16 %v4706
        %v4739 = vunpack.c.l.b16 %v4707
        %v4740 = vunpack.c.l.b16 %v4708
        %v4741 = vunpack.c.l.b16 %v4709
        %v4742 = vunpack.c.l.b16 %v4710
        %v4743 = vunpack.c.l.b16 %v4711
        %v4744 = vunpack.c.l.b16 %v4712
        %v4745 = vunpack.c.l.b16 %v4713
        %v4746 = vunpack.c.l.b16 %v4714
        %v4747 = vunpack.c.l.b16 %v4715
        %v4748 = vunpack.c.l.b16 %v4716
        %v4749 = vunpack.c.l.b16 %v4717
        %v4750 = vunpack.c.l.b16 %v4718
        %v4751 = vpack.c.b16 %v4736, %v4735
        %v4752 = vpack.c.b16 %v4738, %v4737
        %v4753 = vpack.c.b16 %v4740, %v4739
        %v4754 = vpack.c.b16 %v4742, %v4741
        %v4755 = vpack.c.b16 %v4744, %v4743
        %v4756 = vpack.c.b16 %v4746, %v4745
        %v4757 = vpack.c.b16 %v4748, %v4747
        %v4758 = vpack.c.b16 %v4750, %v4749
        %4767 = vmatprep.subr.bf16.mxu0 0
        %4768 = vmatpush1.bf16.msra.mxu0 %v4758
        %4769 = vmatprep.subr.bf16.mxu0 0
        %4770 = vmatpush1.bf16.msra.mxu0 %v4757
        %4771 = vmatprep.subr.bf16.mxu0 0
        %4772 = vmatpush1.bf16.msra.mxu0 %v4756
        %4773 = vmatprep.subr.bf16.mxu0 0
        %4774 = vmatpush1.bf16.msra.mxu0 %v4755
        %4775 = vmatprep.subr.bf16.mxu0 0
        %4776 = vmatpush1.bf16.msra.mxu0 %v4754
        %4777 = vmatprep.subr.bf16.mxu0 0
        %4778 = vmatpush1.bf16.msra.mxu0 %v4753
        %4779 = vmatprep.subr.bf16.mxu0 0
        %4780 = vmatpush1.bf16.msra.mxu0 %v4752
        %4781 = vmatprep.subr.bf16.mxu0 0
        %4782 = vmatpush1.bf16.msra.mxu0 %v4751
        %4783 = vmatprep.subr.bf16.mxu0 0
        %4784 = vmatpush2.bf16.msra.mxu0 0
        %4785 = vmatprep.subr.bf16.mxu0 0
        %4786 = vmatpush2.bf16.msra.mxu0 0
        %4787 = vmatprep.subr.bf16.mxu0 0
        %4788 = vmatpush2.bf16.msra.mxu0 0
        %4789 = vmatprep.subr.bf16.mxu0 0
        %4790 = vmatpush2.bf16.msra.mxu0 0
        %4791 = vmatprep.subr.bf16.mxu0 0
        %4792 = vmatpush2.bf16.msra.mxu0 0
        %4793 = vmatprep.subr.bf16.mxu0 0
        %4794 = vmatpush2.bf16.msra.mxu0 0
        %4795 = vmatprep.subr.bf16.mxu0 0
        %4796 = vmatpush2.bf16.msra.mxu0 0
        %4797 = vmatprep.subr.bf16.mxu0 0
        %4798 = vmatpush2.bf16.msra.mxu0 0
        %4799 = vmatprep.mubr.bf16.mxu0 0
        %4800 = vmatmul.mubr.bf16.gmra.mxu0 %v4056
        %v4801 = vpop.f32.mrf.mxu0
        %v4802 = vadd.f32 0.0, %v4801
        %v4803 = vpop.f32.mrf.mxu0
        %v4804 = vpop.f32.mrf.mxu0
        %v4805 = vadd.f32 0.0, %v4804
        %v4806 = vpop.f32.mrf.mxu0
        %4807 = vdwg.mxu0
        %v4808 = vadd.f32 %v4700, %v4802
        %v4809 = vadd.f32 %v4701, %v4805
        %s4810 = scalar_lea.vmem [#allocation7], 448
        %v4811 = vld [vmem:[%s4810] sm:$0xf]
        %v4812 = vld [vmem:[%s4810 + $0x4] sm:$0xf]
        %v4813 = vld [vmem:[%s4810 + $0x8] sm:$0xf]
        %v4814 = vld [vmem:[%s4810 + $0xc] sm:$0xf]
        %v4815 = vld [vmem:[%s4810 + $0x10] sm:$0xf]
        %v4816 = vld [vmem:[%s4810 + $0x14] sm:$0xf]
        %v4817 = vld [vmem:[%s4810 + $0x18] sm:$0xf]
        %v4818 = vld [vmem:[%s4810 + $0x1c] sm:$0xf]
        %v4819 = vld [vmem:[%s4810 + $0x20] sm:$0xf]
        %v4820 = vld [vmem:[%s4810 + $0x24] sm:$0xf]
        %v4821 = vld [vmem:[%s4810 + $0x28] sm:$0xf]
        %v4822 = vld [vmem:[%s4810 + $0x2c] sm:$0xf]
        %v4823 = vld [vmem:[%s4810 + $0x30] sm:$0xf]
        %v4824 = vld [vmem:[%s4810 + $0x34] sm:$0xf]
        %v4825 = vld [vmem:[%s4810 + $0x38] sm:$0xf]
        %v4826 = vld [vmem:[%s4810 + $0x3c] sm:$0xf]
        %v4843 = vunpack.c.l.b16 %v4811
        %v4844 = vunpack.c.l.b16 %v4812
        %v4845 = vunpack.c.l.b16 %v4813
        %v4846 = vunpack.c.l.b16 %v4814
        %v4847 = vunpack.c.l.b16 %v4815
        %v4848 = vunpack.c.l.b16 %v4816
        %v4849 = vunpack.c.l.b16 %v4817
        %v4850 = vunpack.c.l.b16 %v4818
        %v4851 = vunpack.c.l.b16 %v4819
        %v4852 = vunpack.c.l.b16 %v4820
        %v4853 = vunpack.c.l.b16 %v4821
        %v4854 = vunpack.c.l.b16 %v4822
        %v4855 = vunpack.c.l.b16 %v4823
        %v4856 = vunpack.c.l.b16 %v4824
        %v4857 = vunpack.c.l.b16 %v4825
        %v4858 = vunpack.c.l.b16 %v4826
        %v4859 = vpack.c.b16 %v4844, %v4843
        %v4860 = vpack.c.b16 %v4846, %v4845
        %v4861 = vpack.c.b16 %v4848, %v4847
        %v4862 = vpack.c.b16 %v4850, %v4849
        %v4863 = vpack.c.b16 %v4852, %v4851
        %v4864 = vpack.c.b16 %v4854, %v4853
        %v4865 = vpack.c.b16 %v4856, %v4855
        %v4866 = vpack.c.b16 %v4858, %v4857
        %4875 = vmatprep.subr.bf16.mxu0 0
        %4876 = vmatpush1.bf16.msra.mxu0 %v4866
        %4877 = vmatprep.subr.bf16.mxu0 0
        %4878 = vmatpush1.bf16.msra.mxu0 %v4865
        %4879 = vmatprep.subr.bf16.mxu0 0
        %4880 = vmatpush1.bf16.msra.mxu0 %v4864
        %4881 = vmatprep.subr.bf16.mxu0 0
        %4882 = vmatpush1.bf16.msra.mxu0 %v4863
        %4883 = vmatprep.subr.bf16.mxu0 0
        %4884 = vmatpush1.bf16.msra.mxu0 %v4862
        %4885 = vmatprep.subr.bf16.mxu0 0
        %4886 = vmatpush1.bf16.msra.mxu0 %v4861
        %4887 = vmatprep.subr.bf16.mxu0 0
        %4888 = vmatpush1.bf16.msra.mxu0 %v4860
        %4889 = vmatprep.subr.bf16.mxu0 0
        %4890 = vmatpush1.bf16.msra.mxu0 %v4859
        %4891 = vmatprep.subr.bf16.mxu0 0
        %4892 = vmatpush2.bf16.msra.mxu0 0
        %4893 = vmatprep.subr.bf16.mxu0 0
        %4894 = vmatpush2.bf16.msra.mxu0 0
        %4895 = vmatprep.subr.bf16.mxu0 0
        %4896 = vmatpush2.bf16.msra.mxu0 0
        %4897 = vmatprep.subr.bf16.mxu0 0
        %4898 = vmatpush2.bf16.msra.mxu0 0
        %4899 = vmatprep.subr.bf16.mxu0 0
        %4900 = vmatpush2.bf16.msra.mxu0 0
        %4901 = vmatprep.subr.bf16.mxu0 0
        %4902 = vmatpush2.bf16.msra.mxu0 0
        %4903 = vmatprep.subr.bf16.mxu0 0
        %4904 = vmatpush2.bf16.msra.mxu0 0
        %4905 = vmatprep.subr.bf16.mxu0 0
        %4906 = vmatpush2.bf16.msra.mxu0 0
        %4907 = vmatprep.mubr.bf16.mxu0 0
        %4908 = vmatmul.mubr.bf16.gmra.mxu0 %v4057
        %v4909 = vpop.f32.mrf.mxu0
        %v4910 = vadd.f32 0.0, %v4909
        %v4911 = vpop.f32.mrf.mxu0
        %v4912 = vpop.f32.mrf.mxu0
        %v4913 = vadd.f32 0.0, %v4912
        %v4914 = vpop.f32.mrf.mxu0
        %4915 = vdwg.mxu0
        %v4916 = vadd.f32 %v4808, %v4910
        %v4917 = vadd.f32 %v4809, %v4913
        %s4918 = scalar_lea.vmem [#allocation7], 512
        %v4919 = vld [vmem:[%s4918] sm:$0xf]
        %v4920 = vld [vmem:[%s4918 + $0x4] sm:$0xf]
        %v4921 = vld [vmem:[%s4918 + $0x8] sm:$0xf]
        %v4922 = vld [vmem:[%s4918 + $0xc] sm:$0xf]
        %v4923 = vld [vmem:[%s4918 + $0x10] sm:$0xf]
        %v4924 = vld [vmem:[%s4918 + $0x14] sm:$0xf]
        %v4925 = vld [vmem:[%s4918 + $0x18] sm:$0xf]
        %v4926 = vld [vmem:[%s4918 + $0x1c] sm:$0xf]
        %v4927 = vld [vmem:[%s4918 + $0x20] sm:$0xf]
        %v4928 = vld [vmem:[%s4918 + $0x24] sm:$0xf]
        %v4929 = vld [vmem:[%s4918 + $0x28] sm:$0xf]
        %v4930 = vld [vmem:[%s4918 + $0x2c] sm:$0xf]
        %v4931 = vld [vmem:[%s4918 + $0x30] sm:$0xf]
        %v4932 = vld [vmem:[%s4918 + $0x34] sm:$0xf]
        %v4933 = vld [vmem:[%s4918 + $0x38] sm:$0xf]
        %v4934 = vld [vmem:[%s4918 + $0x3c] sm:$0xf]
        %v4951 = vunpack.c.l.b16 %v4919
        %v4952 = vunpack.c.l.b16 %v4920
        %v4953 = vunpack.c.l.b16 %v4921
        %v4954 = vunpack.c.l.b16 %v4922
        %v4955 = vunpack.c.l.b16 %v4923
        %v4956 = vunpack.c.l.b16 %v4924
        %v4957 = vunpack.c.l.b16 %v4925
        %v4958 = vunpack.c.l.b16 %v4926
        %v4959 = vunpack.c.l.b16 %v4927
        %v4960 = vunpack.c.l.b16 %v4928
        %v4961 = vunpack.c.l.b16 %v4929
        %v4962 = vunpack.c.l.b16 %v4930
        %v4963 = vunpack.c.l.b16 %v4931
        %v4964 = vunpack.c.l.b16 %v4932
        %v4965 = vunpack.c.l.b16 %v4933
        %v4966 = vunpack.c.l.b16 %v4934
        %v4967 = vpack.c.b16 %v4952, %v4951
        %v4968 = vpack.c.b16 %v4954, %v4953
        %v4969 = vpack.c.b16 %v4956, %v4955
        %v4970 = vpack.c.b16 %v4958, %v4957
        %v4971 = vpack.c.b16 %v4960, %v4959
        %v4972 = vpack.c.b16 %v4962, %v4961
        %v4973 = vpack.c.b16 %v4964, %v4963
        %v4974 = vpack.c.b16 %v4966, %v4965
        %4983 = vmatprep.subr.bf16.mxu0 0
        %4984 = vmatpush1.bf16.msra.mxu0 %v4974
        %4985 = vmatprep.subr.bf16.mxu0 0
        %4986 = vmatpush1.bf16.msra.mxu0 %v4973
        %4987 = vmatprep.subr.bf16.mxu0 0
        %4988 = vmatpush1.bf16.msra.mxu0 %v4972
        %4989 = vmatprep.subr.bf16.mxu0 0
        %4990 = vmatpush1.bf16.msra.mxu0 %v4971
        %4991 = vmatprep.subr.bf16.mxu0 0
        %4992 = vmatpush1.bf16.msra.mxu0 %v4970
        %4993 = vmatprep.subr.bf16.mxu0 0
        %4994 = vmatpush1.bf16.msra.mxu0 %v4969
        %4995 = vmatprep.subr.bf16.mxu0 0
        %4996 = vmatpush1.bf16.msra.mxu0 %v4968
        %4997 = vmatprep.subr.bf16.mxu0 0
        %4998 = vmatpush1.bf16.msra.mxu0 %v4967
        %4999 = vmatprep.subr.bf16.mxu0 0
        %5000 = vmatpush2.bf16.msra.mxu0 0
        %5001 = vmatprep.subr.bf16.mxu0 0
        %5002 = vmatpush2.bf16.msra.mxu0 0
        %5003 = vmatprep.subr.bf16.mxu0 0
        %5004 = vmatpush2.bf16.msra.mxu0 0
        %5005 = vmatprep.subr.bf16.mxu0 0
        %5006 = vmatpush2.bf16.msra.mxu0 0
        %5007 = vmatprep.subr.bf16.mxu0 0
        %5008 = vmatpush2.bf16.msra.mxu0 0
        %5009 = vmatprep.subr.bf16.mxu0 0
        %5010 = vmatpush2.bf16.msra.mxu0 0
        %5011 = vmatprep.subr.bf16.mxu0 0
        %5012 = vmatpush2.bf16.msra.mxu0 0
        %5013 = vmatprep.subr.bf16.mxu0 0
        %5014 = vmatpush2.bf16.msra.mxu0 0
        %5015 = vmatprep.mubr.bf16.mxu0 0
        %5016 = vmatmul.mubr.bf16.gmra.mxu0 %v4058
        %v5017 = vpop.f32.mrf.mxu0
        %v5018 = vadd.f32 0.0, %v5017
        %v5019 = vpop.f32.mrf.mxu0
        %v5020 = vpop.f32.mrf.mxu0
        %v5021 = vadd.f32 0.0, %v5020
        %v5022 = vpop.f32.mrf.mxu0
        %5023 = vdwg.mxu0
        %v5024 = vadd.f32 %v4916, %v5018
        %v5025 = vadd.f32 %v4917, %v5021
        %v5026 = vld [vmem:[%s9] sm:$0x1]
        %v5028 = vlaneseq
        %v5029 = vshrl.u32 %v5028, 7
        %v5030 = vsub.s32 0, %v5029
        %v5031 = vrot.slane %v5026, %v5030
        %v5033 = vadd.f32 %v5024, %v5031
        %v5034 = vadd.f32 %v5025, %v5031
        %v5035 = vmax.f32 %v5033, 0.0
        %v5036 = vmax.f32 %v5034, 0.0
        %v5037 = vpack.c.bf16 %v5036, %v5035
        %v5038 = vld [vmem:[%s10] sm:$0xf]
        %v5039 = vld [vmem:[%s10 + $0x4] sm:$0xf]
        %v5040 = vld [vmem:[%s10 + $0x8] sm:$0xf]
        %v5041 = vld [vmem:[%s10 + $0xc] sm:$0xf]
        %v5042 = vld [vmem:[%s10 + $0x10] sm:$0xf]
        %v5043 = vld [vmem:[%s10 + $0x14] sm:$0xf]
        %v5044 = vld [vmem:[%s10 + $0x18] sm:$0xf]
        %v5045 = vld [vmem:[%s10 + $0x1c] sm:$0xf]
        %v5046 = vld [vmem:[%s10 + $0x20] sm:$0xf]
        %v5047 = vld [vmem:[%s10 + $0x24] sm:$0xf]
        %v5048 = vld [vmem:[%s10 + $0x28] sm:$0xf]
        %v5049 = vld [vmem:[%s10 + $0x2c] sm:$0xf]
        %v5050 = vld [vmem:[%s10 + $0x30] sm:$0xf]
        %v5051 = vld [vmem:[%s10 + $0x34] sm:$0xf]
        %v5052 = vld [vmem:[%s10 + $0x38] sm:$0xf]
        %v5053 = vld [vmem:[%s10 + $0x3c] sm:$0xf]
        %v5054 = vld [vmem:[%s10 + $0x40] sm:$0xf]
        %v5055 = vld [vmem:[%s10 + $0x44] sm:$0xf]
        %v5074 = vunpack.c.l.b16 %v5038
        %v5075 = vunpack.c.l.b16 %v5039
        %v5076 = vunpack.c.l.b16 %v5040
        %v5077 = vunpack.c.l.b16 %v5041
        %v5078 = vunpack.c.l.b16 %v5042
        %v5079 = vunpack.c.l.b16 %v5043
        %v5080 = vunpack.c.l.b16 %v5044
        %v5081 = vunpack.c.l.b16 %v5045
        %v5082 = vunpack.c.l.b16 %v5046
        %v5083 = vunpack.c.l.b16 %v5047
        %v5084 = vunpack.c.l.b16 %v5048
        %v5085 = vunpack.c.l.b16 %v5049
        %v5086 = vunpack.c.l.b16 %v5050
        %v5087 = vunpack.c.l.b16 %v5051
        %v5088 = vunpack.c.l.b16 %v5052
        %v5089 = vunpack.c.l.b16 %v5053
        %v5090 = vunpack.c.l.b16 %v5054
        %v5091 = vunpack.c.l.b16 %v5055
        %v5092 = vpack.c.b16 %v5075, %v5074
        %v5093 = vpack.c.b16 %v5077, %v5076
        %v5094 = vpack.c.b16 %v5079, %v5078
        %v5095 = vpack.c.b16 %v5081, %v5080
        %v5096 = vpack.c.b16 %v5083, %v5082
        %v5097 = vpack.c.b16 %v5085, %v5084
        %v5098 = vpack.c.b16 %v5087, %v5086
        %v5099 = vpack.c.b16 %v5089, %v5088
        %v5100 = vpack.c.b16 %v5091, %v5090
        %v5102 = vsel %vm3917, %v5092, 0
        %v5105 = vsel %vm3917, %v5093, 0
        %v5108 = vsel %vm3917, %v5094, 0
        %v5111 = vsel %vm3917, %v5095, 0
        %v5114 = vsel %vm3917, %v5096, 0
        %v5117 = vsel %vm3917, %v5097, 0
        %v5120 = vsel %vm3917, %v5098, 0
        %v5123 = vsel %vm3917, %v5099, 0
        %v5126 = vsel %vm3917, %v5100, 0
        %5128 = vmatprep.subr.bf16.mxu0 0
        %5129 = vmatpush1.bf16.msra.mxu0 0
        %5130 = vmatprep.subr.bf16.mxu0 0
        %5131 = vmatpush1.bf16.msra.mxu0 0
        %5132 = vmatprep.subr.bf16.mxu0 0
        %5133 = vmatpush1.bf16.msra.mxu0 0
        %5134 = vmatprep.subr.bf16.mxu0 0
        %5135 = vmatpush1.bf16.msra.mxu0 0
        %5136 = vmatprep.subr.bf16.mxu0 0
        %5137 = vmatpush1.bf16.msra.mxu0 0
        %5138 = vmatprep.subr.bf16.mxu0 0
        %5139 = vmatpush1.bf16.msra.mxu0 0
        %5140 = vmatprep.subr.bf16.mxu0 0
        %5141 = vmatpush1.bf16.msra.mxu0 0
        %5142 = vmatprep.subr.bf16.mxu0 0
        %5143 = vmatpush1.bf16.msra.mxu0 %v5037
        %5144 = vmatprep.subr.bf16.mxu0 0
        %5145 = vmatpush2.bf16.msra.mxu0 0
        %5146 = vmatprep.subr.bf16.mxu0 0
        %5147 = vmatpush2.bf16.msra.mxu0 0
        %5148 = vmatprep.subr.bf16.mxu0 0
        %5149 = vmatpush2.bf16.msra.mxu0 0
        %5150 = vmatprep.subr.bf16.mxu0 0
        %5151 = vmatpush2.bf16.msra.mxu0 0
        %5152 = vmatprep.subr.bf16.mxu0 0
        %5153 = vmatpush2.bf16.msra.mxu0 0
        %5154 = vmatprep.subr.bf16.mxu0 0
        %5155 = vmatpush2.bf16.msra.mxu0 0
        %5156 = vmatprep.subr.bf16.mxu0 0
        %5157 = vmatpush2.bf16.msra.mxu0 0
        %5158 = vmatprep.subr.bf16.mxu0 0
        %5159 = vmatpush2.bf16.msra.mxu0 0
        %5160 = vmatprep.mubr.bf16.mxu0 0
        %5161 = vmatmul.mubr.bf16.gmra.mxu0 %v5102
        %v5162 = vpop.f32.mrf.mxu0
        %v5163 = vadd.f32 0.0, %v5162
        %v5164 = vpop.f32.mrf.mxu0
        %v5165 = vpop.f32.mrf.mxu0
        %v5166 = vadd.f32 0.0, %v5165
        %v5167 = vpop.f32.mrf.mxu0
        %5168 = vmatprep.mubr.bf16.mxu0 0
        %5169 = vmatmul.mubr.bf16.gmra.mxu0 %v5105
        %v5170 = vpop.f32.mrf.mxu0
        %v5171 = vadd.f32 0.0, %v5170
        %v5172 = vpop.f32.mrf.mxu0
        %v5173 = vpop.f32.mrf.mxu0
        %v5174 = vadd.f32 0.0, %v5173
        %v5175 = vpop.f32.mrf.mxu0
        %5176 = vmatprep.mubr.bf16.mxu0 0
        %5177 = vmatmul.mubr.bf16.gmra.mxu0 %v5108
        %v5178 = vpop.f32.mrf.mxu0
        %v5179 = vadd.f32 0.0, %v5178
        %v5180 = vpop.f32.mrf.mxu0
        %v5181 = vpop.f32.mrf.mxu0
        %v5182 = vadd.f32 0.0, %v5181
        %v5183 = vpop.f32.mrf.mxu0
        %5184 = vmatprep.mubr.bf16.mxu0 0
        %5185 = vmatmul.mubr.bf16.gmra.mxu0 %v5111
        %v5186 = vpop.f32.mrf.mxu0
        %v5187 = vadd.f32 0.0, %v5186
        %v5188 = vpop.f32.mrf.mxu0
        %v5189 = vpop.f32.mrf.mxu0
        %v5190 = vadd.f32 0.0, %v5189
        %v5191 = vpop.f32.mrf.mxu0
        %5192 = vmatprep.mubr.bf16.mxu0 0
        %5193 = vmatmul.mubr.bf16.gmra.mxu0 %v5114
        %v5194 = vpop.f32.mrf.mxu0
        %v5195 = vadd.f32 0.0, %v5194
        %v5196 = vpop.f32.mrf.mxu0
        %v5197 = vpop.f32.mrf.mxu0
        %v5198 = vadd.f32 0.0, %v5197
        %v5199 = vpop.f32.mrf.mxu0
        %5200 = vmatprep.mubr.bf16.mxu0 0
        %5201 = vmatmul.mubr.bf16.gmra.mxu0 %v5117
        %v5202 = vpop.f32.mrf.mxu0
        %v5203 = vadd.f32 0.0, %v5202
        %v5204 = vpop.f32.mrf.mxu0
        %v5205 = vpop.f32.mrf.mxu0
        %v5206 = vadd.f32 0.0, %v5205
        %v5207 = vpop.f32.mrf.mxu0
        %5208 = vmatprep.mubr.bf16.mxu0 0
        %5209 = vmatmul.mubr.bf16.gmra.mxu0 %v5120
        %v5210 = vpop.f32.mrf.mxu0
        %v5211 = vadd.f32 0.0, %v5210
        %v5212 = vpop.f32.mrf.mxu0
        %v5213 = vpop.f32.mrf.mxu0
        %v5214 = vadd.f32 0.0, %v5213
        %v5215 = vpop.f32.mrf.mxu0
        %5216 = vmatprep.mubr.bf16.mxu0 0
        %5217 = vmatmul.mubr.bf16.gmra.mxu0 %v5123
        %v5218 = vpop.f32.mrf.mxu0
        %v5219 = vadd.f32 0.0, %v5218
        %v5220 = vpop.f32.mrf.mxu0
        %v5221 = vpop.f32.mrf.mxu0
        %v5222 = vadd.f32 0.0, %v5221
        %v5223 = vpop.f32.mrf.mxu0
        %5224 = vmatprep.mubr.bf16.mxu0 0
        %5225 = vmatmul.mubr.bf16.gmra.mxu0 %v5126
        %v5226 = vpop.f32.mrf.mxu0
        %v5227 = vadd.f32 0.0, %v5226
        %v5228 = vpop.f32.mrf.mxu0
        %v5229 = vpop.f32.mrf.mxu0
        %v5230 = vadd.f32 0.0, %v5229
        %v5231 = vpop.f32.mrf.mxu0
        %5232 = vdwg.mxu0
        %v5233 = vpack.c.bf16 %v5166, %v5163
        %v5234 = vpack.c.bf16 %v5174, %v5171
        %v5235 = vpack.c.bf16 %v5182, %v5179
        %v5236 = vpack.c.bf16 %v5190, %v5187
        %v5237 = vpack.c.bf16 %v5198, %v5195
        %v5238 = vpack.c.bf16 %v5206, %v5203
        %v5239 = vpack.c.bf16 %v5214, %v5211
        %v5240 = vpack.c.bf16 %v5222, %v5219
        %v5241 = vpack.c.bf16 %v5230, %v5227
        %v5242 = vld [vmem:[%s11] sm:$0xf]
        %v5243 = vld [vmem:[%s11 + $0x4] sm:$0xf]
        %v5244 = vld [vmem:[%s11 + $0x8] sm:$0xf]
        %v5245 = vld [vmem:[%s11 + $0xc] sm:$0xf]
        %v5246 = vld [vmem:[%s11 + $0x10] sm:$0xf]
        %v5247 = vld [vmem:[%s11 + $0x14] sm:$0xf]
        %v5248 = vld [vmem:[%s11 + $0x18] sm:$0xf]
        %v5249 = vld [vmem:[%s11 + $0x1c] sm:$0xf]
        %v5250 = vld [vmem:[%s11 + $0x20] sm:$0xf]
        %v5251 = vld [vmem:[%s11 + $0x24] sm:$0xf]
        %v5252 = vld [vmem:[%s11 + $0x28] sm:$0xf]
        %v5253 = vld [vmem:[%s11 + $0x2c] sm:$0xf]
        %v5254 = vld [vmem:[%s11 + $0x30] sm:$0xf]
        %v5255 = vld [vmem:[%s11 + $0x34] sm:$0xf]
        %v5256 = vld [vmem:[%s11 + $0x38] sm:$0xf]
        %v5257 = vld [vmem:[%s11 + $0x3c] sm:$0xf]
        %s5258 = scalar_lea.vmem %s11, 64
        %v5259 = vld [vmem:[%s5258] sm:$0xf]
        %v5260 = vld [vmem:[%s5258 + $0x4] sm:$0xf]
        %v5261 = vld [vmem:[%s5258 + $0x8] sm:$0xf]
        %v5262 = vld [vmem:[%s5258 + $0xc] sm:$0xf]
        %v5263 = vld [vmem:[%s5258 + $0x10] sm:$0xf]
        %v5264 = vld [vmem:[%s5258 + $0x14] sm:$0xf]
        %v5265 = vld [vmem:[%s5258 + $0x18] sm:$0xf]
        %v5266 = vld [vmem:[%s5258 + $0x1c] sm:$0xf]
        %v5267 = vld [vmem:[%s5258 + $0x20] sm:$0xf]
        %v5268 = vld [vmem:[%s5258 + $0x24] sm:$0xf]
        %v5269 = vld [vmem:[%s5258 + $0x28] sm:$0xf]
        %v5270 = vld [vmem:[%s5258 + $0x2c] sm:$0xf]
        %v5271 = vld [vmem:[%s5258 + $0x30] sm:$0xf]
        %v5272 = vld [vmem:[%s5258 + $0x34] sm:$0xf]
        %v5273 = vld [vmem:[%s5258 + $0x38] sm:$0xf]
        %v5274 = vld [vmem:[%s5258 + $0x3c] sm:$0xf]
        %v5291 = vunpack.c.l.b16 %v5259
        %v5292 = vunpack.c.l.b16 %v5260
        %v5293 = vunpack.c.l.b16 %v5261
        %v5294 = vunpack.c.l.b16 %v5262
        %v5295 = vunpack.c.l.b16 %v5263
        %v5296 = vunpack.c.l.b16 %v5264
        %v5297 = vunpack.c.l.b16 %v5265
        %v5298 = vunpack.c.l.b16 %v5266
        %v5299 = vunpack.c.l.b16 %v5267
        %v5300 = vunpack.c.l.b16 %v5268
        %v5301 = vunpack.c.l.b16 %v5269
        %v5302 = vunpack.c.l.b16 %v5270
        %v5303 = vunpack.c.l.b16 %v5271
        %v5304 = vunpack.c.l.b16 %v5272
        %v5305 = vunpack.c.l.b16 %v5273
        %v5306 = vunpack.c.l.b16 %v5274
        %v5307 = vpack.c.b16 %v5292, %v5291
        %v5308 = vpack.c.b16 %v5294, %v5293
        %v5309 = vpack.c.b16 %v5296, %v5295
        %v5310 = vpack.c.b16 %v5298, %v5297
        %v5311 = vpack.c.b16 %v5300, %v5299
        %v5312 = vpack.c.b16 %v5302, %v5301
        %v5313 = vpack.c.b16 %v5304, %v5303
        %v5314 = vpack.c.b16 %v5306, %v5305
        %5323 = vmatprep.subr.bf16.mxu0 0
        %5324 = vmatpush1.bf16.msra.mxu0 %v5314
        %5325 = vmatprep.subr.bf16.mxu0 0
        %5326 = vmatpush1.bf16.msra.mxu0 %v5313
        %5327 = vmatprep.subr.bf16.mxu0 0
        %5328 = vmatpush1.bf16.msra.mxu0 %v5312
        %5329 = vmatprep.subr.bf16.mxu0 0
        %5330 = vmatpush1.bf16.msra.mxu0 %v5311
        %5331 = vmatprep.subr.bf16.mxu0 0
        %5332 = vmatpush1.bf16.msra.mxu0 %v5310
        %5333 = vmatprep.subr.bf16.mxu0 0
        %5334 = vmatpush1.bf16.msra.mxu0 %v5309
        %5335 = vmatprep.subr.bf16.mxu0 0
        %5336 = vmatpush1.bf16.msra.mxu0 %v5308
        %5337 = vmatprep.subr.bf16.mxu0 0
        %5338 = vmatpush1.bf16.msra.mxu0 %v5307
        %5339 = vmatprep.subr.bf16.mxu0 0
        %5340 = vmatpush2.bf16.msra.mxu0 0
        %5341 = vmatprep.subr.bf16.mxu0 0
        %5342 = vmatpush2.bf16.msra.mxu0 0
        %5343 = vmatprep.subr.bf16.mxu0 0
        %5344 = vmatpush2.bf16.msra.mxu0 0
        %5345 = vmatprep.subr.bf16.mxu0 0
        %5346 = vmatpush2.bf16.msra.mxu0 0
        %5347 = vmatprep.subr.bf16.mxu0 0
        %5348 = vmatpush2.bf16.msra.mxu0 0
        %5349 = vmatprep.subr.bf16.mxu0 0
        %5350 = vmatpush2.bf16.msra.mxu0 0
        %5351 = vmatprep.subr.bf16.mxu0 0
        %5352 = vmatpush2.bf16.msra.mxu0 0
        %5353 = vmatprep.subr.bf16.mxu0 0
        %5354 = vmatpush2.bf16.msra.mxu0 0
        %5355 = vmatprep.mubr.bf16.mxu0 0
        %5356 = vmatmul.mubr.bf16.gmra.mxu0 %v5234
        %v5357 = vpop.f32.mrf.mxu0
        %v5358 = vadd.f32 0.0, %v5357
        %v5359 = vpop.f32.mrf.mxu0
        %v5360 = vpop.f32.mrf.mxu0
        %v5361 = vadd.f32 0.0, %v5360
        %v5362 = vpop.f32.mrf.mxu0
        %5363 = vdwg.mxu0
        %v5380 = vunpack.c.l.b16 %v5242
        %v5381 = vunpack.c.l.b16 %v5243
        %v5382 = vunpack.c.l.b16 %v5244
        %v5383 = vunpack.c.l.b16 %v5245
        %v5384 = vunpack.c.l.b16 %v5246
        %v5385 = vunpack.c.l.b16 %v5247
        %v5386 = vunpack.c.l.b16 %v5248
        %v5387 = vunpack.c.l.b16 %v5249
        %v5388 = vunpack.c.l.b16 %v5250
        %v5389 = vunpack.c.l.b16 %v5251
        %v5390 = vunpack.c.l.b16 %v5252
        %v5391 = vunpack.c.l.b16 %v5253
        %v5392 = vunpack.c.l.b16 %v5254
        %v5393 = vunpack.c.l.b16 %v5255
        %v5394 = vunpack.c.l.b16 %v5256
        %v5395 = vunpack.c.l.b16 %v5257
        %v5396 = vpack.c.b16 %v5381, %v5380
        %v5397 = vpack.c.b16 %v5383, %v5382
        %v5398 = vpack.c.b16 %v5385, %v5384
        %v5399 = vpack.c.b16 %v5387, %v5386
        %v5400 = vpack.c.b16 %v5389, %v5388
        %v5401 = vpack.c.b16 %v5391, %v5390
        %v5402 = vpack.c.b16 %v5393, %v5392
        %v5403 = vpack.c.b16 %v5395, %v5394
        %5412 = vmatprep.subr.bf16.mxu0 0
        %5413 = vmatpush1.bf16.msra.mxu0 %v5403
        %5414 = vmatprep.subr.bf16.mxu0 0
        %5415 = vmatpush1.bf16.msra.mxu0 %v5402
        %5416 = vmatprep.subr.bf16.mxu0 0
        %5417 = vmatpush1.bf16.msra.mxu0 %v5401
        %5418 = vmatprep.subr.bf16.mxu0 0
        %5419 = vmatpush1.bf16.msra.mxu0 %v5400
        %5420 = vmatprep.subr.bf16.mxu0 0
        %5421 = vmatpush1.bf16.msra.mxu0 %v5399
        %5422 = vmatprep.subr.bf16.mxu0 0
        %5423 = vmatpush1.bf16.msra.mxu0 %v5398
        %5424 = vmatprep.subr.bf16.mxu0 0
        %5425 = vmatpush1.bf16.msra.mxu0 %v5397
        %5426 = vmatprep.subr.bf16.mxu0 0
        %5427 = vmatpush1.bf16.msra.mxu0 %v5396
        %5428 = vmatprep.subr.bf16.mxu0 0
        %5429 = vmatpush2.bf16.msra.mxu0 0
        %5430 = vmatprep.subr.bf16.mxu0 0
        %5431 = vmatpush2.bf16.msra.mxu0 0
        %5432 = vmatprep.subr.bf16.mxu0 0
        %5433 = vmatpush2.bf16.msra.mxu0 0
        %5434 = vmatprep.subr.bf16.mxu0 0
        %5435 = vmatpush2.bf16.msra.mxu0 0
        %5436 = vmatprep.subr.bf16.mxu0 0
        %5437 = vmatpush2.bf16.msra.mxu0 0
        %5438 = vmatprep.subr.bf16.mxu0 0
        %5439 = vmatpush2.bf16.msra.mxu0 0
        %5440 = vmatprep.subr.bf16.mxu0 0
        %5441 = vmatpush2.bf16.msra.mxu0 0
        %5442 = vmatprep.subr.bf16.mxu0 0
        %5443 = vmatpush2.bf16.msra.mxu0 0
        %5444 = vmatprep.mubr.bf16.mxu0 0
        %5445 = vmatmul.mubr.bf16.gmra.mxu0 %v5233
        %v5446 = vpop.f32.mrf.mxu0
        %v5447 = vadd.f32 %v5358, %v5446
        %v5448 = vpop.f32.mrf.mxu0
        %v5449 = vpop.f32.mrf.mxu0
        %v5450 = vadd.f32 %v5361, %v5449
        %v5451 = vpop.f32.mrf.mxu0
        %5452 = vdwg.mxu0
        %s5453 = scalar_lea.vmem %s11, 128
        %v5454 = vld [vmem:[%s5453] sm:$0xf]
        %v5455 = vld [vmem:[%s5453 + $0x4] sm:$0xf]
        %v5456 = vld [vmem:[%s5453 + $0x8] sm:$0xf]
        %v5457 = vld [vmem:[%s5453 + $0xc] sm:$0xf]
        %v5458 = vld [vmem:[%s5453 + $0x10] sm:$0xf]
        %v5459 = vld [vmem:[%s5453 + $0x14] sm:$0xf]
        %v5460 = vld [vmem:[%s5453 + $0x18] sm:$0xf]
        %v5461 = vld [vmem:[%s5453 + $0x1c] sm:$0xf]
        %v5462 = vld [vmem:[%s5453 + $0x20] sm:$0xf]
        %v5463 = vld [vmem:[%s5453 + $0x24] sm:$0xf]
        %v5464 = vld [vmem:[%s5453 + $0x28] sm:$0xf]
        %v5465 = vld [vmem:[%s5453 + $0x2c] sm:$0xf]
        %v5466 = vld [vmem:[%s5453 + $0x30] sm:$0xf]
        %v5467 = vld [vmem:[%s5453 + $0x34] sm:$0xf]
        %v5468 = vld [vmem:[%s5453 + $0x38] sm:$0xf]
        %v5469 = vld [vmem:[%s5453 + $0x3c] sm:$0xf]
        %v5486 = vunpack.c.l.b16 %v5454
        %v5487 = vunpack.c.l.b16 %v5455
        %v5488 = vunpack.c.l.b16 %v5456
        %v5489 = vunpack.c.l.b16 %v5457
        %v5490 = vunpack.c.l.b16 %v5458
        %v5491 = vunpack.c.l.b16 %v5459
        %v5492 = vunpack.c.l.b16 %v5460
        %v5493 = vunpack.c.l.b16 %v5461
        %v5494 = vunpack.c.l.b16 %v5462
        %v5495 = vunpack.c.l.b16 %v5463
        %v5496 = vunpack.c.l.b16 %v5464
        %v5497 = vunpack.c.l.b16 %v5465
        %v5498 = vunpack.c.l.b16 %v5466
        %v5499 = vunpack.c.l.b16 %v5467
        %v5500 = vunpack.c.l.b16 %v5468
        %v5501 = vunpack.c.l.b16 %v5469
        %v5502 = vpack.c.b16 %v5487, %v5486
        %v5503 = vpack.c.b16 %v5489, %v5488
        %v5504 = vpack.c.b16 %v5491, %v5490
        %v5505 = vpack.c.b16 %v5493, %v5492
        %v5506 = vpack.c.b16 %v5495, %v5494
        %v5507 = vpack.c.b16 %v5497, %v5496
        %v5508 = vpack.c.b16 %v5499, %v5498
        %v5509 = vpack.c.b16 %v5501, %v5500
        %5518 = vmatprep.subr.bf16.mxu0 0
        %5519 = vmatpush1.bf16.msra.mxu0 %v5509
        %5520 = vmatprep.subr.bf16.mxu0 0
        %5521 = vmatpush1.bf16.msra.mxu0 %v5508
        %5522 = vmatprep.subr.bf16.mxu0 0
        %5523 = vmatpush1.bf16.msra.mxu0 %v5507
        %5524 = vmatprep.subr.bf16.mxu0 0
        %5525 = vmatpush1.bf16.msra.mxu0 %v5506
        %5526 = vmatprep.subr.bf16.mxu0 0
        %5527 = vmatpush1.bf16.msra.mxu0 %v5505
        %5528 = vmatprep.subr.bf16.mxu0 0
        %5529 = vmatpush1.bf16.msra.mxu0 %v5504
        %5530 = vmatprep.subr.bf16.mxu0 0
        %5531 = vmatpush1.bf16.msra.mxu0 %v5503
        %5532 = vmatprep.subr.bf16.mxu0 0
        %5533 = vmatpush1.bf16.msra.mxu0 %v5502
        %5534 = vmatprep.subr.bf16.mxu0 0
        %5535 = vmatpush2.bf16.msra.mxu0 0
        %5536 = vmatprep.subr.bf16.mxu0 0
        %5537 = vmatpush2.bf16.msra.mxu0 0
        %5538 = vmatprep.subr.bf16.mxu0 0
        %5539 = vmatpush2.bf16.msra.mxu0 0
        %5540 = vmatprep.subr.bf16.mxu0 0
        %5541 = vmatpush2.bf16.msra.mxu0 0
        %5542 = vmatprep.subr.bf16.mxu0 0
        %5543 = vmatpush2.bf16.msra.mxu0 0
        %5544 = vmatprep.subr.bf16.mxu0 0
        %5545 = vmatpush2.bf16.msra.mxu0 0
        %5546 = vmatprep.subr.bf16.mxu0 0
        %5547 = vmatpush2.bf16.msra.mxu0 0
        %5548 = vmatprep.subr.bf16.mxu0 0
        %5549 = vmatpush2.bf16.msra.mxu0 0
        %5550 = vmatprep.mubr.bf16.mxu0 0
        %5551 = vmatmul.mubr.bf16.gmra.mxu0 %v5235
        %v5552 = vpop.f32.mrf.mxu0
        %v5553 = vadd.f32 0.0, %v5552
        %v5554 = vpop.f32.mrf.mxu0
        %v5555 = vpop.f32.mrf.mxu0
        %v5556 = vadd.f32 0.0, %v5555
        %v5557 = vpop.f32.mrf.mxu0
        %5558 = vdwg.mxu0
        %v5559 = vadd.f32 %v5447, %v5553
        %v5560 = vadd.f32 %v5450, %v5556
        %s5561 = scalar_lea.vmem %s11, 192
        %v5562 = vld [vmem:[%s5561] sm:$0xf]
        %v5563 = vld [vmem:[%s5561 + $0x4] sm:$0xf]
        %v5564 = vld [vmem:[%s5561 + $0x8] sm:$0xf]
        %v5565 = vld [vmem:[%s5561 + $0xc] sm:$0xf]
        %v5566 = vld [vmem:[%s5561 + $0x10] sm:$0xf]
        %v5567 = vld [vmem:[%s5561 + $0x14] sm:$0xf]
        %v5568 = vld [vmem:[%s5561 + $0x18] sm:$0xf]
        %v5569 = vld [vmem:[%s5561 + $0x1c] sm:$0xf]
        %v5570 = vld [vmem:[%s5561 + $0x20] sm:$0xf]
        %v5571 = vld [vmem:[%s5561 + $0x24] sm:$0xf]
        %v5572 = vld [vmem:[%s5561 + $0x28] sm:$0xf]
        %v5573 = vld [vmem:[%s5561 + $0x2c] sm:$0xf]
        %v5574 = vld [vmem:[%s5561 + $0x30] sm:$0xf]
        %v5575 = vld [vmem:[%s5561 + $0x34] sm:$0xf]
        %v5576 = vld [vmem:[%s5561 + $0x38] sm:$0xf]
        %v5577 = vld [vmem:[%s5561 + $0x3c] sm:$0xf]
        %v5594 = vunpack.c.l.b16 %v5562
        %v5595 = vunpack.c.l.b16 %v5563
        %v5596 = vunpack.c.l.b16 %v5564
        %v5597 = vunpack.c.l.b16 %v5565
        %v5598 = vunpack.c.l.b16 %v5566
        %v5599 = vunpack.c.l.b16 %v5567
        %v5600 = vunpack.c.l.b16 %v5568
        %v5601 = vunpack.c.l.b16 %v5569
        %v5602 = vunpack.c.l.b16 %v5570
        %v5603 = vunpack.c.l.b16 %v5571
        %v5604 = vunpack.c.l.b16 %v5572
        %v5605 = vunpack.c.l.b16 %v5573
        %v5606 = vunpack.c.l.b16 %v5574
        %v5607 = vunpack.c.l.b16 %v5575
        %v5608 = vunpack.c.l.b16 %v5576
        %v5609 = vunpack.c.l.b16 %v5577
        %v5610 = vpack.c.b16 %v5595, %v5594
        %v5611 = vpack.c.b16 %v5597, %v5596
        %v5612 = vpack.c.b16 %v5599, %v5598
        %v5613 = vpack.c.b16 %v5601, %v5600
        %v5614 = vpack.c.b16 %v5603, %v5602
        %v5615 = vpack.c.b16 %v5605, %v5604
        %v5616 = vpack.c.b16 %v5607, %v5606
        %v5617 = vpack.c.b16 %v5609, %v5608
        %5626 = vmatprep.subr.bf16.mxu0 0
        %5627 = vmatpush1.bf16.msra.mxu0 %v5617
        %5628 = vmatprep.subr.bf16.mxu0 0
        %5629 = vmatpush1.bf16.msra.mxu0 %v5616
        %5630 = vmatprep.subr.bf16.mxu0 0
        %5631 = vmatpush1.bf16.msra.mxu0 %v5615
        %5632 = vmatprep.subr.bf16.mxu0 0
        %5633 = vmatpush1.bf16.msra.mxu0 %v5614
        %5634 = vmatprep.subr.bf16.mxu0 0
        %5635 = vmatpush1.bf16.msra.mxu0 %v5613
        %5636 = vmatprep.subr.bf16.mxu0 0
        %5637 = vmatpush1.bf16.msra.mxu0 %v5612
        %5638 = vmatprep.subr.bf16.mxu0 0
        %5639 = vmatpush1.bf16.msra.mxu0 %v5611
        %5640 = vmatprep.subr.bf16.mxu0 0
        %5641 = vmatpush1.bf16.msra.mxu0 %v5610
        %5642 = vmatprep.subr.bf16.mxu0 0
        %5643 = vmatpush2.bf16.msra.mxu0 0
        %5644 = vmatprep.subr.bf16.mxu0 0
        %5645 = vmatpush2.bf16.msra.mxu0 0
        %5646 = vmatprep.subr.bf16.mxu0 0
        %5647 = vmatpush2.bf16.msra.mxu0 0
        %5648 = vmatprep.subr.bf16.mxu0 0
        %5649 = vmatpush2.bf16.msra.mxu0 0
        %5650 = vmatprep.subr.bf16.mxu0 0
        %5651 = vmatpush2.bf16.msra.mxu0 0
        %5652 = vmatprep.subr.bf16.mxu0 0
        %5653 = vmatpush2.bf16.msra.mxu0 0
        %5654 = vmatprep.subr.bf16.mxu0 0
        %5655 = vmatpush2.bf16.msra.mxu0 0
        %5656 = vmatprep.subr.bf16.mxu0 0
        %5657 = vmatpush2.bf16.msra.mxu0 0
        %5658 = vmatprep.mubr.bf16.mxu0 0
        %5659 = vmatmul.mubr.bf16.gmra.mxu0 %v5236
        %v5660 = vpop.f32.mrf.mxu0
        %v5661 = vadd.f32 0.0, %v5660
        %v5662 = vpop.f32.mrf.mxu0
        %v5663 = vpop.f32.mrf.mxu0
        %v5664 = vadd.f32 0.0, %v5663
        %v5665 = vpop.f32.mrf.mxu0
        %5666 = vdwg.mxu0
        %v5667 = vadd.f32 %v5559, %v5661
        %v5668 = vadd.f32 %v5560, %v5664
        %s5669 = scalar_lea.vmem %s11, 256
        %v5670 = vld [vmem:[%s5669] sm:$0xf]
        %v5671 = vld [vmem:[%s5669 + $0x4] sm:$0xf]
        %v5672 = vld [vmem:[%s5669 + $0x8] sm:$0xf]
        %v5673 = vld [vmem:[%s5669 + $0xc] sm:$0xf]
        %v5674 = vld [vmem:[%s5669 + $0x10] sm:$0xf]
        %v5675 = vld [vmem:[%s5669 + $0x14] sm:$0xf]
        %v5676 = vld [vmem:[%s5669 + $0x18] sm:$0xf]
        %v5677 = vld [vmem:[%s5669 + $0x1c] sm:$0xf]
        %v5678 = vld [vmem:[%s5669 + $0x20] sm:$0xf]
        %v5679 = vld [vmem:[%s5669 + $0x24] sm:$0xf]
        %v5680 = vld [vmem:[%s5669 + $0x28] sm:$0xf]
        %v5681 = vld [vmem:[%s5669 + $0x2c] sm:$0xf]
        %v5682 = vld [vmem:[%s5669 + $0x30] sm:$0xf]
        %v5683 = vld [vmem:[%s5669 + $0x34] sm:$0xf]
        %v5684 = vld [vmem:[%s5669 + $0x38] sm:$0xf]
        %v5685 = vld [vmem:[%s5669 + $0x3c] sm:$0xf]
        %v5702 = vunpack.c.l.b16 %v5670
        %v5703 = vunpack.c.l.b16 %v5671
        %v5704 = vunpack.c.l.b16 %v5672
        %v5705 = vunpack.c.l.b16 %v5673
        %v5706 = vunpack.c.l.b16 %v5674
        %v5707 = vunpack.c.l.b16 %v5675
        %v5708 = vunpack.c.l.b16 %v5676
        %v5709 = vunpack.c.l.b16 %v5677
        %v5710 = vunpack.c.l.b16 %v5678
        %v5711 = vunpack.c.l.b16 %v5679
        %v5712 = vunpack.c.l.b16 %v5680
        %v5713 = vunpack.c.l.b16 %v5681
        %v5714 = vunpack.c.l.b16 %v5682
        %v5715 = vunpack.c.l.b16 %v5683
        %v5716 = vunpack.c.l.b16 %v5684
        %v5717 = vunpack.c.l.b16 %v5685
        %v5718 = vpack.c.b16 %v5703, %v5702
        %v5719 = vpack.c.b16 %v5705, %v5704
        %v5720 = vpack.c.b16 %v5707, %v5706
        %v5721 = vpack.c.b16 %v5709, %v5708
        %v5722 = vpack.c.b16 %v5711, %v5710
        %v5723 = vpack.c.b16 %v5713, %v5712
        %v5724 = vpack.c.b16 %v5715, %v5714
        %v5725 = vpack.c.b16 %v5717, %v5716
        %5734 = vmatprep.subr.bf16.mxu0 0
        %5735 = vmatpush1.bf16.msra.mxu0 %v5725
        %5736 = vmatprep.subr.bf16.mxu0 0
        %5737 = vmatpush1.bf16.msra.mxu0 %v5724
        %5738 = vmatprep.subr.bf16.mxu0 0
        %5739 = vmatpush1.bf16.msra.mxu0 %v5723
        %5740 = vmatprep.subr.bf16.mxu0 0
        %5741 = vmatpush1.bf16.msra.mxu0 %v5722
        %5742 = vmatprep.subr.bf16.mxu0 0
        %5743 = vmatpush1.bf16.msra.mxu0 %v5721
        %5744 = vmatprep.subr.bf16.mxu0 0
        %5745 = vmatpush1.bf16.msra.mxu0 %v5720
        %5746 = vmatprep.subr.bf16.mxu0 0
        %5747 = vmatpush1.bf16.msra.mxu0 %v5719
        %5748 = vmatprep.subr.bf16.mxu0 0
        %5749 = vmatpush1.bf16.msra.mxu0 %v5718
        %5750 = vmatprep.subr.bf16.mxu0 0
        %5751 = vmatpush2.bf16.msra.mxu0 0
        %5752 = vmatprep.subr.bf16.mxu0 0
        %5753 = vmatpush2.bf16.msra.mxu0 0
        %5754 = vmatprep.subr.bf16.mxu0 0
        %5755 = vmatpush2.bf16.msra.mxu0 0
        %5756 = vmatprep.subr.bf16.mxu0 0
        %5757 = vmatpush2.bf16.msra.mxu0 0
        %5758 = vmatprep.subr.bf16.mxu0 0
        %5759 = vmatpush2.bf16.msra.mxu0 0
        %5760 = vmatprep.subr.bf16.mxu0 0
        %5761 = vmatpush2.bf16.msra.mxu0 0
        %5762 = vmatprep.subr.bf16.mxu0 0
        %5763 = vmatpush2.bf16.msra.mxu0 0
        %5764 = vmatprep.subr.bf16.mxu0 0
        %5765 = vmatpush2.bf16.msra.mxu0 0
        %5766 = vmatprep.mubr.bf16.mxu0 0
        %5767 = vmatmul.mubr.bf16.gmra.mxu0 %v5237
        %v5768 = vpop.f32.mrf.mxu0
        %v5769 = vadd.f32 0.0, %v5768
        %v5770 = vpop.f32.mrf.mxu0
        %v5771 = vpop.f32.mrf.mxu0
        %v5772 = vadd.f32 0.0, %v5771
        %v5773 = vpop.f32.mrf.mxu0
        %5774 = vdwg.mxu0
        %v5775 = vadd.f32 %v5667, %v5769
        %v5776 = vadd.f32 %v5668, %v5772
        %s5777 = scalar_lea.vmem %s11, 320
        %v5778 = vld [vmem:[%s5777] sm:$0xf]
        %v5779 = vld [vmem:[%s5777 + $0x4] sm:$0xf]
        %v5780 = vld [vmem:[%s5777 + $0x8] sm:$0xf]
        %v5781 = vld [vmem:[%s5777 + $0xc] sm:$0xf]
        %v5782 = vld [vmem:[%s5777 + $0x10] sm:$0xf]
        %v5783 = vld [vmem:[%s5777 + $0x14] sm:$0xf]
        %v5784 = vld [vmem:[%s5777 + $0x18] sm:$0xf]
        %v5785 = vld [vmem:[%s5777 + $0x1c] sm:$0xf]
        %v5786 = vld [vmem:[%s5777 + $0x20] sm:$0xf]
        %v5787 = vld [vmem:[%s5777 + $0x24] sm:$0xf]
        %v5788 = vld [vmem:[%s5777 + $0x28] sm:$0xf]
        %v5789 = vld [vmem:[%s5777 + $0x2c] sm:$0xf]
        %v5790 = vld [vmem:[%s5777 + $0x30] sm:$0xf]
        %v5791 = vld [vmem:[%s5777 + $0x34] sm:$0xf]
        %v5792 = vld [vmem:[%s5777 + $0x38] sm:$0xf]
        %v5793 = vld [vmem:[%s5777 + $0x3c] sm:$0xf]
        %v5810 = vunpack.c.l.b16 %v5778
        %v5811 = vunpack.c.l.b16 %v5779
        %v5812 = vunpack.c.l.b16 %v5780
        %v5813 = vunpack.c.l.b16 %v5781
        %v5814 = vunpack.c.l.b16 %v5782
        %v5815 = vunpack.c.l.b16 %v5783
        %v5816 = vunpack.c.l.b16 %v5784
        %v5817 = vunpack.c.l.b16 %v5785
        %v5818 = vunpack.c.l.b16 %v5786
        %v5819 = vunpack.c.l.b16 %v5787
        %v5820 = vunpack.c.l.b16 %v5788
        %v5821 = vunpack.c.l.b16 %v5789
        %v5822 = vunpack.c.l.b16 %v5790
        %v5823 = vunpack.c.l.b16 %v5791
        %v5824 = vunpack.c.l.b16 %v5792
        %v5825 = vunpack.c.l.b16 %v5793
        %v5826 = vpack.c.b16 %v5811, %v5810
        %v5827 = vpack.c.b16 %v5813, %v5812
        %v5828 = vpack.c.b16 %v5815, %v5814
        %v5829 = vpack.c.b16 %v5817, %v5816
        %v5830 = vpack.c.b16 %v5819, %v5818
        %v5831 = vpack.c.b16 %v5821, %v5820
        %v5832 = vpack.c.b16 %v5823, %v5822
        %v5833 = vpack.c.b16 %v5825, %v5824
        %5842 = vmatprep.subr.bf16.mxu0 0
        %5843 = vmatpush1.bf16.msra.mxu0 %v5833
        %5844 = vmatprep.subr.bf16.mxu0 0
        %5845 = vmatpush1.bf16.msra.mxu0 %v5832
        %5846 = vmatprep.subr.bf16.mxu0 0
        %5847 = vmatpush1.bf16.msra.mxu0 %v5831
        %5848 = vmatprep.subr.bf16.mxu0 0
        %5849 = vmatpush1.bf16.msra.mxu0 %v5830
        %5850 = vmatprep.subr.bf16.mxu0 0
        %5851 = vmatpush1.bf16.msra.mxu0 %v5829
        %5852 = vmatprep.subr.bf16.mxu0 0
        %5853 = vmatpush1.bf16.msra.mxu0 %v5828
        %5854 = vmatprep.subr.bf16.mxu0 0
        %5855 = vmatpush1.bf16.msra.mxu0 %v5827
        %5856 = vmatprep.subr.bf16.mxu0 0
        %5857 = vmatpush1.bf16.msra.mxu0 %v5826
        %5858 = vmatprep.subr.bf16.mxu0 0
        %5859 = vmatpush2.bf16.msra.mxu0 0
        %5860 = vmatprep.subr.bf16.mxu0 0
        %5861 = vmatpush2.bf16.msra.mxu0 0
        %5862 = vmatprep.subr.bf16.mxu0 0
        %5863 = vmatpush2.bf16.msra.mxu0 0
        %5864 = vmatprep.subr.bf16.mxu0 0
        %5865 = vmatpush2.bf16.msra.mxu0 0
        %5866 = vmatprep.subr.bf16.mxu0 0
        %5867 = vmatpush2.bf16.msra.mxu0 0
        %5868 = vmatprep.subr.bf16.mxu0 0
        %5869 = vmatpush2.bf16.msra.mxu0 0
        %5870 = vmatprep.subr.bf16.mxu0 0
        %5871 = vmatpush2.bf16.msra.mxu0 0
        %5872 = vmatprep.subr.bf16.mxu0 0
        %5873 = vmatpush2.bf16.msra.mxu0 0
        %5874 = vmatprep.mubr.bf16.mxu0 0
        %5875 = vmatmul.mubr.bf16.gmra.mxu0 %v5238
        %v5876 = vpop.f32.mrf.mxu0
        %v5877 = vadd.f32 0.0, %v5876
        %v5878 = vpop.f32.mrf.mxu0
        %v5879 = vpop.f32.mrf.mxu0
        %v5880 = vadd.f32 0.0, %v5879
        %v5881 = vpop.f32.mrf.mxu0
        %5882 = vdwg.mxu0
        %v5883 = vadd.f32 %v5775, %v5877
        %v5884 = vadd.f32 %v5776, %v5880
        %s5885 = scalar_lea.vmem %s11, 384
        %v5886 = vld [vmem:[%s5885] sm:$0xf]
        %v5887 = vld [vmem:[%s5885 + $0x4] sm:$0xf]
        %v5888 = vld [vmem:[%s5885 + $0x8] sm:$0xf]
        %v5889 = vld [vmem:[%s5885 + $0xc] sm:$0xf]
        %v5890 = vld [vmem:[%s5885 + $0x10] sm:$0xf]
        %v5891 = vld [vmem:[%s5885 + $0x14] sm:$0xf]
        %v5892 = vld [vmem:[%s5885 + $0x18] sm:$0xf]
        %v5893 = vld [vmem:[%s5885 + $0x1c] sm:$0xf]
        %v5894 = vld [vmem:[%s5885 + $0x20] sm:$0xf]
        %v5895 = vld [vmem:[%s5885 + $0x24] sm:$0xf]
        %v5896 = vld [vmem:[%s5885 + $0x28] sm:$0xf]
        %v5897 = vld [vmem:[%s5885 + $0x2c] sm:$0xf]
        %v5898 = vld [vmem:[%s5885 + $0x30] sm:$0xf]
        %v5899 = vld [vmem:[%s5885 + $0x34] sm:$0xf]
        %v5900 = vld [vmem:[%s5885 + $0x38] sm:$0xf]
        %v5901 = vld [vmem:[%s5885 + $0x3c] sm:$0xf]
        %v5918 = vunpack.c.l.b16 %v5886
        %v5919 = vunpack.c.l.b16 %v5887
        %v5920 = vunpack.c.l.b16 %v5888
        %v5921 = vunpack.c.l.b16 %v5889
        %v5922 = vunpack.c.l.b16 %v5890
        %v5923 = vunpack.c.l.b16 %v5891
        %v5924 = vunpack.c.l.b16 %v5892
        %v5925 = vunpack.c.l.b16 %v5893
        %v5926 = vunpack.c.l.b16 %v5894
        %v5927 = vunpack.c.l.b16 %v5895
        %v5928 = vunpack.c.l.b16 %v5896
        %v5929 = vunpack.c.l.b16 %v5897
        %v5930 = vunpack.c.l.b16 %v5898
        %v5931 = vunpack.c.l.b16 %v5899
        %v5932 = vunpack.c.l.b16 %v5900
        %v5933 = vunpack.c.l.b16 %v5901
        %v5934 = vpack.c.b16 %v5919, %v5918
        %v5935 = vpack.c.b16 %v5921, %v5920
        %v5936 = vpack.c.b16 %v5923, %v5922
        %v5937 = vpack.c.b16 %v5925, %v5924
        %v5938 = vpack.c.b16 %v5927, %v5926
        %v5939 = vpack.c.b16 %v5929, %v5928
        %v5940 = vpack.c.b16 %v5931, %v5930
        %v5941 = vpack.c.b16 %v5933, %v5932
        %5950 = vmatprep.subr.bf16.mxu0 0
        %5951 = vmatpush1.bf16.msra.mxu0 %v5941
        %5952 = vmatprep.subr.bf16.mxu0 0
        %5953 = vmatpush1.bf16.msra.mxu0 %v5940
        %5954 = vmatprep.subr.bf16.mxu0 0
        %5955 = vmatpush1.bf16.msra.mxu0 %v5939
        %5956 = vmatprep.subr.bf16.mxu0 0
        %5957 = vmatpush1.bf16.msra.mxu0 %v5938
        %5958 = vmatprep.subr.bf16.mxu0 0
        %5959 = vmatpush1.bf16.msra.mxu0 %v5937
        %5960 = vmatprep.subr.bf16.mxu0 0
        %5961 = vmatpush1.bf16.msra.mxu0 %v5936
        %5962 = vmatprep.subr.bf16.mxu0 0
        %5963 = vmatpush1.bf16.msra.mxu0 %v5935
        %5964 = vmatprep.subr.bf16.mxu0 0
        %5965 = vmatpush1.bf16.msra.mxu0 %v5934
        %5966 = vmatprep.subr.bf16.mxu0 0
        %5967 = vmatpush2.bf16.msra.mxu0 0
        %5968 = vmatprep.subr.bf16.mxu0 0
        %5969 = vmatpush2.bf16.msra.mxu0 0
        %5970 = vmatprep.subr.bf16.mxu0 0
        %5971 = vmatpush2.bf16.msra.mxu0 0
        %5972 = vmatprep.subr.bf16.mxu0 0
        %5973 = vmatpush2.bf16.msra.mxu0 0
        %5974 = vmatprep.subr.bf16.mxu0 0
        %5975 = vmatpush2.bf16.msra.mxu0 0
        %5976 = vmatprep.subr.bf16.mxu0 0
        %5977 = vmatpush2.bf16.msra.mxu0 0
        %5978 = vmatprep.subr.bf16.mxu0 0
        %5979 = vmatpush2.bf16.msra.mxu0 0
        %5980 = vmatprep.subr.bf16.mxu0 0
        %5981 = vmatpush2.bf16.msra.mxu0 0
        %5982 = vmatprep.mubr.bf16.mxu0 0
        %5983 = vmatmul.mubr.bf16.gmra.mxu0 %v5239
        %v5984 = vpop.f32.mrf.mxu0
        %v5985 = vadd.f32 0.0, %v5984
        %v5986 = vpop.f32.mrf.mxu0
        %v5987 = vpop.f32.mrf.mxu0
        %v5988 = vadd.f32 0.0, %v5987
        %v5989 = vpop.f32.mrf.mxu0
        %5990 = vdwg.mxu0
        %v5991 = vadd.f32 %v5883, %v5985
        %v5992 = vadd.f32 %v5884, %v5988
        %s5993 = scalar_lea.vmem %s11, 448
        %v5994 = vld [vmem:[%s5993] sm:$0xf]
        %v5995 = vld [vmem:[%s5993 + $0x4] sm:$0xf]
        %v5996 = vld [vmem:[%s5993 + $0x8] sm:$0xf]
        %v5997 = vld [vmem:[%s5993 + $0xc] sm:$0xf]
        %v5998 = vld [vmem:[%s5993 + $0x10] sm:$0xf]
        %v5999 = vld [vmem:[%s5993 + $0x14] sm:$0xf]
        %v6000 = vld [vmem:[%s5993 + $0x18] sm:$0xf]
        %v6001 = vld [vmem:[%s5993 + $0x1c] sm:$0xf]
        %v6002 = vld [vmem:[%s5993 + $0x20] sm:$0xf]
        %v6003 = vld [vmem:[%s5993 + $0x24] sm:$0xf]
        %v6004 = vld [vmem:[%s5993 + $0x28] sm:$0xf]
        %v6005 = vld [vmem:[%s5993 + $0x2c] sm:$0xf]
        %v6006 = vld [vmem:[%s5993 + $0x30] sm:$0xf]
        %v6007 = vld [vmem:[%s5993 + $0x34] sm:$0xf]
        %v6008 = vld [vmem:[%s5993 + $0x38] sm:$0xf]
        %v6009 = vld [vmem:[%s5993 + $0x3c] sm:$0xf]
        %v6026 = vunpack.c.l.b16 %v5994
        %v6027 = vunpack.c.l.b16 %v5995
        %v6028 = vunpack.c.l.b16 %v5996
        %v6029 = vunpack.c.l.b16 %v5997
        %v6030 = vunpack.c.l.b16 %v5998
        %v6031 = vunpack.c.l.b16 %v5999
        %v6032 = vunpack.c.l.b16 %v6000
        %v6033 = vunpack.c.l.b16 %v6001
        %v6034 = vunpack.c.l.b16 %v6002
        %v6035 = vunpack.c.l.b16 %v6003
        %v6036 = vunpack.c.l.b16 %v6004
        %v6037 = vunpack.c.l.b16 %v6005
        %v6038 = vunpack.c.l.b16 %v6006
        %v6039 = vunpack.c.l.b16 %v6007
        %v6040 = vunpack.c.l.b16 %v6008
        %v6041 = vunpack.c.l.b16 %v6009
        %v6042 = vpack.c.b16 %v6027, %v6026
        %v6043 = vpack.c.b16 %v6029, %v6028
        %v6044 = vpack.c.b16 %v6031, %v6030
        %v6045 = vpack.c.b16 %v6033, %v6032
        %v6046 = vpack.c.b16 %v6035, %v6034
        %v6047 = vpack.c.b16 %v6037, %v6036
        %v6048 = vpack.c.b16 %v6039, %v6038
        %v6049 = vpack.c.b16 %v6041, %v6040
        %6058 = vmatprep.subr.bf16.mxu0 0
        %6059 = vmatpush1.bf16.msra.mxu0 %v6049
        %6060 = vmatprep.subr.bf16.mxu0 0
        %6061 = vmatpush1.bf16.msra.mxu0 %v6048
        %6062 = vmatprep.subr.bf16.mxu0 0
        %6063 = vmatpush1.bf16.msra.mxu0 %v6047
        %6064 = vmatprep.subr.bf16.mxu0 0
        %6065 = vmatpush1.bf16.msra.mxu0 %v6046
        %6066 = vmatprep.subr.bf16.mxu0 0
        %6067 = vmatpush1.bf16.msra.mxu0 %v6045
        %6068 = vmatprep.subr.bf16.mxu0 0
        %6069 = vmatpush1.bf16.msra.mxu0 %v6044
        %6070 = vmatprep.subr.bf16.mxu0 0
        %6071 = vmatpush1.bf16.msra.mxu0 %v6043
        %6072 = vmatprep.subr.bf16.mxu0 0
        %6073 = vmatpush1.bf16.msra.mxu0 %v6042
        %6074 = vmatprep.subr.bf16.mxu0 0
        %6075 = vmatpush2.bf16.msra.mxu0 0
        %6076 = vmatprep.subr.bf16.mxu0 0
        %6077 = vmatpush2.bf16.msra.mxu0 0
        %6078 = vmatprep.subr.bf16.mxu0 0
        %6079 = vmatpush2.bf16.msra.mxu0 0
        %6080 = vmatprep.subr.bf16.mxu0 0
        %6081 = vmatpush2.bf16.msra.mxu0 0
        %6082 = vmatprep.subr.bf16.mxu0 0
        %6083 = vmatpush2.bf16.msra.mxu0 0
        %6084 = vmatprep.subr.bf16.mxu0 0
        %6085 = vmatpush2.bf16.msra.mxu0 0
        %6086 = vmatprep.subr.bf16.mxu0 0
        %6087 = vmatpush2.bf16.msra.mxu0 0
        %6088 = vmatprep.subr.bf16.mxu0 0
        %6089 = vmatpush2.bf16.msra.mxu0 0
        %6090 = vmatprep.mubr.bf16.mxu0 0
        %6091 = vmatmul.mubr.bf16.gmra.mxu0 %v5240
        %v6092 = vpop.f32.mrf.mxu0
        %v6093 = vadd.f32 0.0, %v6092
        %v6094 = vpop.f32.mrf.mxu0
        %v6095 = vpop.f32.mrf.mxu0
        %v6096 = vadd.f32 0.0, %v6095
        %v6097 = vpop.f32.mrf.mxu0
        %6098 = vdwg.mxu0
        %v6099 = vadd.f32 %v5991, %v6093
        %v6100 = vadd.f32 %v5992, %v6096
        %s6101 = scalar_lea.vmem %s11, 512
        %v6102 = vld [vmem:[%s6101] sm:$0xf]
        %v6103 = vld [vmem:[%s6101 + $0x4] sm:$0xf]
        %v6104 = vld [vmem:[%s6101 + $0x8] sm:$0xf]
        %v6105 = vld [vmem:[%s6101 + $0xc] sm:$0xf]
        %v6106 = vld [vmem:[%s6101 + $0x10] sm:$0xf]
        %v6107 = vld [vmem:[%s6101 + $0x14] sm:$0xf]
        %v6108 = vld [vmem:[%s6101 + $0x18] sm:$0xf]
        %v6109 = vld [vmem:[%s6101 + $0x1c] sm:$0xf]
        %v6110 = vld [vmem:[%s6101 + $0x20] sm:$0xf]
        %v6111 = vld [vmem:[%s6101 + $0x24] sm:$0xf]
        %v6112 = vld [vmem:[%s6101 + $0x28] sm:$0xf]
        %v6113 = vld [vmem:[%s6101 + $0x2c] sm:$0xf]
        %v6114 = vld [vmem:[%s6101 + $0x30] sm:$0xf]
        %v6115 = vld [vmem:[%s6101 + $0x34] sm:$0xf]
        %v6116 = vld [vmem:[%s6101 + $0x38] sm:$0xf]
        %v6117 = vld [vmem:[%s6101 + $0x3c] sm:$0xf]
        %v6134 = vunpack.c.l.b16 %v6102
        %v6135 = vunpack.c.l.b16 %v6103
        %v6136 = vunpack.c.l.b16 %v6104
        %v6137 = vunpack.c.l.b16 %v6105
        %v6138 = vunpack.c.l.b16 %v6106
        %v6139 = vunpack.c.l.b16 %v6107
        %v6140 = vunpack.c.l.b16 %v6108
        %v6141 = vunpack.c.l.b16 %v6109
        %v6142 = vunpack.c.l.b16 %v6110
        %v6143 = vunpack.c.l.b16 %v6111
        %v6144 = vunpack.c.l.b16 %v6112
        %v6145 = vunpack.c.l.b16 %v6113
        %v6146 = vunpack.c.l.b16 %v6114
        %v6147 = vunpack.c.l.b16 %v6115
        %v6148 = vunpack.c.l.b16 %v6116
        %v6149 = vunpack.c.l.b16 %v6117
        %v6150 = vpack.c.b16 %v6135, %v6134
        %v6151 = vpack.c.b16 %v6137, %v6136
        %v6152 = vpack.c.b16 %v6139, %v6138
        %v6153 = vpack.c.b16 %v6141, %v6140
        %v6154 = vpack.c.b16 %v6143, %v6142
        %v6155 = vpack.c.b16 %v6145, %v6144
        %v6156 = vpack.c.b16 %v6147, %v6146
        %v6157 = vpack.c.b16 %v6149, %v6148
        %6166 = vmatprep.subr.bf16.mxu0 0
        %6167 = vmatpush1.bf16.msra.mxu0 %v6157
        %6168 = vmatprep.subr.bf16.mxu0 0
        %6169 = vmatpush1.bf16.msra.mxu0 %v6156
        %6170 = vmatprep.subr.bf16.mxu0 0
        %6171 = vmatpush1.bf16.msra.mxu0 %v6155
        %6172 = vmatprep.subr.bf16.mxu0 0
        %6173 = vmatpush1.bf16.msra.mxu0 %v6154
        %6174 = vmatprep.subr.bf16.mxu0 0
        %6175 = vmatpush1.bf16.msra.mxu0 %v6153
        %6176 = vmatprep.subr.bf16.mxu0 0
        %6177 = vmatpush1.bf16.msra.mxu0 %v6152
        %6178 = vmatprep.subr.bf16.mxu0 0
        %6179 = vmatpush1.bf16.msra.mxu0 %v6151
        %6180 = vmatprep.subr.bf16.mxu0 0
        %6181 = vmatpush1.bf16.msra.mxu0 %v6150
        %6182 = vmatprep.subr.bf16.mxu0 0
        %6183 = vmatpush2.bf16.msra.mxu0 0
        %6184 = vmatprep.subr.bf16.mxu0 0
        %6185 = vmatpush2.bf16.msra.mxu0 0
        %6186 = vmatprep.subr.bf16.mxu0 0
        %6187 = vmatpush2.bf16.msra.mxu0 0
        %6188 = vmatprep.subr.bf16.mxu0 0
        %6189 = vmatpush2.bf16.msra.mxu0 0
        %6190 = vmatprep.subr.bf16.mxu0 0
        %6191 = vmatpush2.bf16.msra.mxu0 0
        %6192 = vmatprep.subr.bf16.mxu0 0
        %6193 = vmatpush2.bf16.msra.mxu0 0
        %6194 = vmatprep.subr.bf16.mxu0 0
        %6195 = vmatpush2.bf16.msra.mxu0 0
        %6196 = vmatprep.subr.bf16.mxu0 0
        %6197 = vmatpush2.bf16.msra.mxu0 0
        %6198 = vmatprep.mubr.bf16.mxu0 0
        %6199 = vmatmul.mubr.bf16.gmra.mxu0 %v5241
        %v6200 = vpop.f32.mrf.mxu0
        %v6201 = vadd.f32 0.0, %v6200
        %v6202 = vpop.f32.mrf.mxu0
        %v6203 = vpop.f32.mrf.mxu0
        %v6204 = vadd.f32 0.0, %v6203
        %v6205 = vpop.f32.mrf.mxu0
        %6206 = vdwg.mxu0
        %v6207 = vadd.f32 %v6099, %v6201
        %v6208 = vadd.f32 %v6100, %v6204
        %v6209 = vld [vmem:[%s12] sm:$0x1]
        %v6211 = vlaneseq
        %v6212 = vshrl.u32 %v6211, 7
        %v6213 = vsub.s32 0, %v6212
        %v6214 = vrot.slane %v6209, %v6213
        %v6216 = vadd.f32 %v6207, %v6214
        %v6217 = vadd.f32 %v6208, %v6214
        %v6218 = vmax.f32 %v6216, 0.0
        %v6219 = vmax.f32 %v6217, 0.0
        %v6220 = vlaneseq
        %v6221 = vshrl.u32 %v6220, 7
        %v6222 = vadd.s32 %v6221, 8
        %vm6223 = vcmp.lt.s32.totalorder %v6221, 4
        %vm6224 = vcmp.lt.s32.totalorder %v6222, 4
        %v6225 = vsel %vm6223, %v6218, 0.0
        %v6226 = vsel %vm6224, %v6219, 0.0
        %6227 = vst [vmem:[%s499] sm:$0xff] %v6225
        %6228 = vst [vmem:[%s499 + $0x8] sm:$0xff] %v6226
        %p6229 = scmp.lt.s32.totalorder %s27, 1
        %s6230 = scalar_select %p6229, %s27, 1
        %s6231 = smul.addr %s6230, 2
        %s6232 = smul.addr %s6231, 8
        %s6233 = scalar_lea.vmem %s13, %s6232
        // Predicated region
        $region89: #{forward.1} parent=71 // pred_check
          %p6234 = pneg %p323
        $region90: #{forward.1} parent=71 // pred_check_branch
          %6236 = sbr.rel (%p6234) target = $region92
        $region91: #{forward.1} parent=71 // pred_region
          _
        $region92: #{forward.1} parent=71 // pred_fallthru
          _
      $region72: #{forward.1} parent=5 // pred_fallthru
        _
      %p6237 = scmp.le.s32.totalorder 2, %s22
      // Predicated region
      $region93: #{forward.1} parent=5 // pred_check
        %p6238 = pneg %p6237
      $region94: #{forward.1} parent=5 // pred_check_branch
        %6240 = sbr.rel (%p6238) target = $region96
      $region95: #{forward.1} parent=5 // pred_region
        %s6241 = ssub.s32 %s22, 2
        // Predicated region
        $region97: #{forward.1} parent=95 // pred_check
          %p6242 = pneg %p329
        $region98: #{forward.1} parent=95 // pred_check_branch
          %6244 = sbr.rel (%p6242) target = $region100
        $region99: #{forward.1} parent=95 // pred_region
          %p6245 = scmp.lt.s32.totalorder %s28, 1
          %s6246 = scalar_select %p6245, %s28, 1
          %s6247 = smul.addr %s6246, 2
          %s6248 = smul.addr %s6247, 8
          %s6249 = scalar_lea.vmem %s13, %s6248
        $region100: #{forward.1} parent=95 // pred_fallthru
          _
      $region96: #{forward.1} parent=5 // pred_fallthru
        _
    $region6: #{forward.1} parent=1 // loop_footer
      %s26 = sadd.s32 1, %s22
    $region7: #{forward.1} parent=1 // loop_footer_branch
      %21 = sbr.rel target = $region3
    $region8: #{forward.1} parent=1 // loop_exit
      _
    %6250 = vsyncpa [#allocation3], 1
    %s6251 = scalar_lea.sflag [#allocation3], 1
    %6252 = vsyncpa %s6251, 1
    %6253 = vsyncpa [#allocation5], 1
    %6254 = vsyncpa [#allocation8], 1

</llo_original>
